<compile_context>
chip_gen: v7x
topology: tpu7x:2x2x1
jax: 0.10.0
libtpu: 0.0.40
codegen_flags: <defaults>
</compile_context>

<pallas_src>
import functools

import jax
import jax.numpy as jnp
from jax.experimental import pallas as pl
from jax.experimental.pallas import tpu as pltpu


LANE = 128
_VMEM_BUDGET = 24 * 1024 * 1024     # conservative per-grid-step footprint target
_VMEM_LIMIT = 48 * 1024 * 1024      # scoped VMEM limit handed to Mosaic (safe on v5e/v6e/v7x)


def _round_up(n, m):
    return ((n + m - 1) // m) * m


def _pick_tile_h(H, W, cin_p, chid_p, cout_p, max_tile_h=None):
    """Largest stripe height TH dividing H whose per-step VMEM footprint fits the budget."""
    cap = H if max_tile_h is None else max(1, min(H, max_tile_h))
    best = 1
    for th in range(1, cap + 1):
        if H % th:
            continue
        vmem = 4 * (2 * (th + 2) * W * cin_p        # input stripe (double buffered)
                    + 2 * th * W * cout_p           # output stripe (double buffered)
                    + (th + 2) * (W + 2) * chid_p   # haloed hidden scratch
                    + cin_p * chid_p                # w1
                    + 9 * chid_p * cout_p           # w2
                    + chid_p + cout_p)              # biases
        if vmem <= _VMEM_BUDGET:
            best = th
    return best


# ----------------------------------------------------------------------------
# Fused kernel: one (image, row-stripe) per grid step.
#   x_ref : (TH+2, W, Cin_p)    input stripe incl. 1-row halo top/bottom (rows pre-padded)
#   w1_ref: (Cin_p, Chid_p)     1x1 conv weight (BN folded)
#   b1_ref: (1, Chid_p)
#   w2_ref: (9, Chid_p, Cout_p) 3x3 conv weight, taps flattened as ky*3+kx (BN folded)
#   b2_ref: (1, Cout_p)
#   o_ref : (TH, W, Cout_p)
#   h_ref : VMEM scratch (TH+2, W+2, Chid_p) -- hidden activation with 3x3 zero halo
# ----------------------------------------------------------------------------
def fused_bottleneck_kernel(x_ref, w1_ref, b1_ref, w2_ref, b2_ref,
                            o_ref, h_ref, *, add, n_stripes):
    s = pl.program_id(1)
    THp2, W, Cin_p = x_ref.shape
    TH = THp2 - 2
    Chid_p = h_ref.shape[-1]
    Cout_p = o_ref.shape[-1]

    # ---- cv1: 1x1 conv (+folded BN) + SiLU, directly into the haloed hidden scratch ----
    x2d = x_ref[...].reshape(THp2 * W, Cin_p)
    h = jnp.dot(x2d, w1_ref[...], preferred_element_type=jnp.float32)
    h = h + b1_ref[...]
    h = h * jax.nn.sigmoid(h)                       # SiLU (f32, EUP)
    h_ref[:, 1:W + 1, :] = h.reshape(THp2, W, Chid_p)

    # Zero the conv-pad halo: W borders every step; H borders only at image top/bottom.
    h_ref[:, 0:1, :] = jnp.zeros((THp2, 1, Chid_p), jnp.float32)
    h_ref[:, W + 1:W + 2, :] = jnp.zeros((THp2, 1, Chid_p), jnp.float32)

    @pl.when(s == 0)
    def _():
        h_ref[0:1, :, :] = jnp.zeros((1, W + 2, Chid_p), jnp.float32)

    @pl.when(s == n_stripes - 1)
    def _():
        h_ref[TH + 1:TH + 2, :, :] = jnp.zeros((1, W + 2, Chid_p), jnp.float32)

    # ---- cv2: 3x3 conv (+folded BN) + SiLU (+ optional residual), 9 MXU taps ----
    acc = jnp.broadcast_to(b2_ref[...], (TH * W, Cout_p)).astype(jnp.float32)
    for ky in range(3):
        for kx in range(3):
            win = h_ref[ky:ky + TH, kx:kx + W, :].reshape(TH * W, Chid_p)
            acc = acc + jnp.dot(win, w2_ref[ky * 3 + kx],
                                preferred_element_type=jnp.float32)
    y = (acc * jax.nn.sigmoid(acc)).reshape(TH, W, Cout_p)   # SiLU
    if add:
        # Residual = the stripe's own (un-haloed) input rows; Cin_p == Cout_p when add=True.
        y = y + x_ref[1:TH + 1, :, :].astype(jnp.float32)
    o_ref[...] = y.astype(o_ref.dtype)


# ----------------------------------------------------------------------------
# Bottleneck wrapper (NCHW in / NCHW out, like the PyTorch module)
# ----------------------------------------------------------------------------
def bottleneck_forward(x_nchw, params, *, shortcut=True, max_tile_h=None):
    w1, b1, w2, b2 = params["w1"], params["b1"], params["w2"], params["b2"]
    out_ch = params["out_ch"]
    N, Cin, H, W = x_nchw.shape
    Cin_p, Chid_p = w1.shape
    Cout_p = w2.shape[2]
    add = bool(shortcut and Cin == out_ch)
    if add:
        assert Cin_p == Cout_p

    TH = _pick_tile_h(H, W, Cin_p, Chid_p, Cout_p, max_tile_h)
    S = H // TH

    # NCHW -> NHWC, pad channels to the lane multiple, pad rows by 1 (3x3 row halo).
    x = jnp.transpose(x_nchw, (0, 2, 3, 1))
    x = jnp.pad(x, ((0, 0), (1, 1), (0, 0), (0, Cin_p - Cin)))          # (N, H+2, W, Cin_p)

    if S == 1:
        # Fast path: a single stripe covers the whole image -> no overlapping-window gather.
        x_win = x[:, None]                                              # (N, 1, H+2, W, Cin_p)
    else:
        # Overlapping TH+2-row stripe windows (layout plumbing; keeps plain pipelined BlockSpecs).
        rows = jnp.arange(S)[:, None] * TH + jnp.arange(TH + 2)[None, :]  # (S, TH+2)
        x_win = x[:, rows]                                              # (N, S, TH+2, W, Cin_p)

    kern = functools.partial(fused_bottleneck_kernel, add=add, n_stripes=S)
    y_p = pl.pallas_call(
        kern,
        out_shape=jax.ShapeDtypeStruct((N, H, W, Cout_p), x_nchw.dtype),
        grid_spec=pltpu.PrefetchScalarGridSpec(
            num_scalar_prefetch=0,
            grid=(N, S),
            in_specs=[
                pl.BlockSpec((None, None, TH + 2, W, Cin_p), lambda n, s: (n, s, 0, 0, 0)),
                pl.BlockSpec((Cin_p, Chid_p), lambda n, s: (0, 0)),
                pl.BlockSpec((1, Chid_p), lambda n, s: (0, 0)),
                pl.BlockSpec((9, Chid_p, Cout_p), lambda n, s: (0, 0, 0)),
                pl.BlockSpec((1, Cout_p), lambda n, s: (0, 0)),
            ],
            out_specs=pl.BlockSpec((None, TH, W, Cout_p), lambda n, s: (n, s, 0, 0)),
            scratch_shapes=[pltpu.VMEM((TH + 2, W + 2, Chid_p), jnp.float32)],
        ),
        compiler_params=pltpu.CompilerParams(
            dimension_semantics=("parallel", "parallel"),
            vmem_limit_bytes=_VMEM_LIMIT),
    )(x_win, w1, b1, w2, b2)

    # Drop channel padding, back to NCHW.
    return jnp.transpose(y_p[..., :out_ch], (0, 3, 1, 2))


# ----------------------------------------------------------------------------
# Deterministic parameter construction (conv weights + BN, BN folded, lane-padded)
# ----------------------------------------------------------------------------
def make_params(key, in_ch, out_ch, e=0.5, eps=1e-5):
    hidden = int(out_ch * e)
    ks = jax.random.split(key, 10)

    # cv1: Conv2d(in_ch, hidden, 1, bias=False) + BN(hidden)
    w1_oihw = jax.random.normal(ks[0], (hidden, in_ch, 1, 1), jnp.float32) * 0.2
    g1 = 1.0 + 0.1 * jax.random.normal(ks[1], (hidden,), jnp.float32)
    be1 = 0.1 * jax.random.normal(ks[2], (hidden,), jnp.float32)
    m1 = 0.1 * jax.random.normal(ks[3], (hidden,), jnp.float32)
    v1 = jnp.abs(jax.random.normal(ks[4], (hidden,), jnp.float32)) + 0.5

    # cv2: Conv2d(hidden, out_ch, 3, padding=1, bias=False) + BN(out_ch)
    w2_oihw = jax.random.normal(ks[5], (out_ch, hidden, 3, 3), jnp.float32) * 0.2
    g2 = 1.0 + 0.1 * jax.random.normal(ks[6], (out_ch,), jnp.float32)
    be2 = 0.1 * jax.random.normal(ks[7], (out_ch,), jnp.float32)
    m2 = 0.1 * jax.random.normal(ks[8], (out_ch,), jnp.float32)
    v2 = jnp.abs(jax.random.normal(ks[9], (out_ch,), jnp.float32)) + 0.5

    # Fold BN: w_eff[o] = w[o]*g[o]/sqrt(v[o]+eps) ; b_eff[o] = be[o] - m[o]*g[o]/sqrt(v[o]+eps)
    s1 = g1 / jnp.sqrt(v1 + eps)
    s2 = g2 / jnp.sqrt(v2 + eps)
    w1_eff = w1_oihw * s1[:, None, None, None]
    w2_eff = w2_oihw * s2[:, None, None, None]
    b1_eff = be1 - m1 * s1
    b2_eff = be2 - m2 * s2

    # Kernel layouts, zero-padded so every channel dim is a multiple of 128 lanes.
    cin_p = _round_up(in_ch, LANE)
    chid_p = _round_up(hidden, LANE)
    cout_p = _round_up(out_ch, LANE)

    w1_k = jnp.transpose(w1_eff[:, :, 0, 0], (1, 0))                        # (Cin, Chid)
    w1_k = jnp.pad(w1_k, ((0, cin_p - in_ch), (0, chid_p - hidden)))
    w2_k = jnp.transpose(w2_eff, (2, 3, 1, 0)).reshape(9, hidden, out_ch)   # (9, Chid, Cout)
    w2_k = jnp.pad(w2_k, ((0, 0), (0, chid_p - hidden), (0, cout_p - out_ch)))
    b1_k = jnp.pad(b1_eff, (0, chid_p - hidden))[None, :]
    b2_k = jnp.pad(b2_eff, (0, cout_p - out_ch))[None, :]

    params = {"w1": w1_k, "b1": b1_k, "w2": w2_k, "b2": b2_k,
              "in_ch": in_ch, "out_ch": out_ch}
    raw = {"w1_oihw": w1_eff, "b1": b1_eff, "w2_oihw": w2_eff, "b2": b2_eff}
    return params, raw


# Pure-JAX reference (matches PyTorch Bottleneck forward semantics)
def ref_forward(x_nchw, raw, *, shortcut=True):
    def silu(t):
        return t * jax.nn.sigmoid(t)
    y = jax.lax.conv_general_dilated(
        x_nchw, raw["w1_oihw"], (1, 1), "VALID",
        dimension_numbers=("NCHW", "OIHW", "NCHW"))
    y = silu(y + raw["b1"][None, :, None, None])
    z = jax.lax.conv_general_dilated(
        y, raw["w2_oihw"], (1, 1), ((1, 1), (1, 1)),
        dimension_numbers=("NCHW", "OIHW", "NCHW"))
    z = silu(z + raw["b2"][None, :, None, None])
    add = shortcut and (x_nchw.shape[1] == z.shape[1])
    return x_nchw + z if add else z


if __name__ == "__main__":
    key = jax.random.PRNGKey(0)
    kx_, kp = jax.random.split(key)

    # Small shapes consistent with the module: N=2, in_ch=out_ch=8, H=W=16, hidden=4
    N, C, H, W = 2, 8, 16, 16
    x = jax.random.normal(kx_, (N, C, H, W), jnp.float32)
    params, raw = make_params(kp, in_ch=C, out_ch=C, e=0.5)
    ref = jax.block_until_ready(ref_forward(x, raw, shortcut=True))

    # Residual (shortcut) path, adaptive tile -> single full-image stripe (fast path, S == 1).
    out = jax.block_until_ready(bottleneck_forward(x, params, shortcut=True))
    assert out.shape == ref.shape == (N, C, H, W)
    assert jnp.allclose(out, ref, atol=1e-4, rtol=1e-4), float(jnp.max(jnp.abs(out - ref)))

    # Forced multi-stripe path (S == 2) to exercise the overlapping-window / halo logic.
    out_s = jax.block_until_ready(bottleneck_forward(x, params, shortcut=True, max_tile_h=8))
    assert jnp.allclose(out_s, ref, atol=1e-4, rtol=1e-4), float(jnp.max(jnp.abs(out_s - ref)))

    # No-residual variant (add compiled out of the kernel)
    out2 = jax.block_until_ready(bottleneck_forward(x, params, shortcut=False))
    ref2 = jax.block_until_ready(ref_forward(x, raw, shortcut=False))
    assert jnp.allclose(out2, ref2, atol=1e-4, rtol=1e-4), float(jnp.max(jnp.abs(out2 - ref2)))

    print("KERNEL_OK")
</pallas_src>

<mosaic_0001>
module attributes {stable_mosaic.version = 11 : i64} {
  func.func @fused_bottleneck_kernel(%arg0: i32, %arg1: i32, %arg2: memref<1x1x18x16x128xf32, #tpu.memory_space<vmem>>, %arg3: memref<128x128xf32, #tpu.memory_space<vmem>>, %arg4: memref<1x128xf32, #tpu.memory_space<vmem>>, %arg5: memref<9x128x128xf32, #tpu.memory_space<vmem>>, %arg6: memref<1x128xf32, #tpu.memory_space<vmem>>, %arg7: memref<1x16x16x128xf32, #tpu.memory_space<vmem>>, %arg8: memref<18x18x128xf32, #tpu.memory_space<vmem>>) attributes {dimension_semantics = [#tpu.dimension_semantics<parallel>, #tpu.dimension_semantics<parallel>], iteration_bounds = array<i64: 2, 1>, scalar_prefetch = 0 : i64, scratch_operands = 1 : i64, tpu.core_type = #tpu.core_type<tc>, window_params = [{transform_indices = @transform_0, window_bounds = array<i64: 1, 1, 18, 16, 128>}, {pipeline_mode = #tpu.pipeline_mode<synchronous>, transform_indices = @transform_1, window_bounds = array<i64: 128, 128>}, {pipeline_mode = #tpu.pipeline_mode<synchronous>, transform_indices = @transform_2, window_bounds = array<i64: 1, 128>}, {pipeline_mode = #tpu.pipeline_mode<synchronous>, transform_indices = @transform_3, window_bounds = array<i64: 9, 128, 128>}, {pipeline_mode = #tpu.pipeline_mode<synchronous>, transform_indices = @transform_4, window_bounds = array<i64: 1, 128>}, {transform_indices = @transform_5, window_bounds = array<i64: 1, 16, 16, 128>}]} {
    %c0 = arith.constant 0 : index
    %c0_0 = arith.constant 0 : index
    %c0_1 = arith.constant 0 : index
    %c0_2 = arith.constant 0 : index
    %c0_3 = arith.constant 0 : index
    %0 = vector.load %arg2[%c0, %c0_0, %c0_1, %c0_2, %c0_3] : memref<1x1x18x16x128xf32, #tpu.memory_space<vmem>>, vector<1x1x18x16x128xf32>
    %1 = vector.shape_cast %0 : vector<1x1x18x16x128xf32> to vector<18x16x128xf32>
    %2 = vector.shape_cast %1 : vector<18x16x128xf32> to vector<288x128xf32>
    %c0_4 = arith.constant 0 : index
    %c0_5 = arith.constant 0 : index
    %3 = vector.load %arg3[%c0_4, %c0_5] : memref<128x128xf32, #tpu.memory_space<vmem>>, vector<128x128xf32>
    %cst = arith.constant dense<0.000000e+00> : vector<288x128xf32>
    %4 = tpu.matmul %2, %3, %cst {dimension_numbers = #tpu.dot_dimension_numbers<[1], [0], [0], [1], [0, 0, 1, 1], [], []>} : vector<288x128xf32>, vector<128x128xf32>, vector<288x128xf32> -> vector<288x128xf32>
    %c0_6 = arith.constant 0 : index
    %c0_7 = arith.constant 0 : index
    %5 = vector.load %arg4[%c0_6, %c0_7] : memref<1x128xf32, #tpu.memory_space<vmem>>, vector<1x128xf32>
    %6 = vector.broadcast %5 : vector<1x128xf32> to vector<288x128xf32>
    %7 = arith.addf %4, %6 : vector<288x128xf32>
    %8 = arith.negf %7 : vector<288x128xf32>
    %9 = math.exp %8 : vector<288x128xf32>
    %cst_8 = arith.constant 1.000000e+00 : f32
    %10 = vector.broadcast %cst_8 : f32 to vector<288x128xf32>
    %11 = arith.addf %10, %9 : vector<288x128xf32>
    %12 = arith.divf %10, %11 : vector<288x128xf32>
    %13 = arith.mulf %7, %12 : vector<288x128xf32>
    %14 = vector.shape_cast %13 : vector<288x128xf32> to vector<18x16x128xf32>
    %c0_9 = arith.constant 0 : index
    %c1 = arith.constant 1 : index
    %c0_10 = arith.constant 0 : index
    %15 = vector.load %arg8[%c0_9, %c1, %c0_10] : memref<18x18x128xf32, #tpu.memory_space<vmem>>, vector<18x16x128xf32>
    tpu.vector_store %arg8[%c0_9, %c1, %c0_10], %14 {strides = array<i32>} : memref<18x18x128xf32, #tpu.memory_space<vmem>>, vector<18x16x128xf32>,
    %cst_11 = arith.constant 0.000000e+00 : f32
    %16 = vector.broadcast %cst_11 : f32 to vector<18x1x128xf32>
    %c0_12 = arith.constant 0 : index
    %c0_13 = arith.constant 0 : index
    %c0_14 = arith.constant 0 : index
    %17 = vector.load %arg8[%c0_12, %c0_13, %c0_14] : memref<18x18x128xf32, #tpu.memory_space<vmem>>, vector<18x1x128xf32>
    tpu.vector_store %arg8[%c0_12, %c0_13, %c0_14], %16 {strides = array<i32>} : memref<18x18x128xf32, #tpu.memory_space<vmem>>, vector<18x1x128xf32>,
    %cst_15 = arith.constant 0.000000e+00 : f32
    %18 = vector.broadcast %cst_15 : f32 to vector<18x1x128xf32>
    %c0_16 = arith.constant 0 : index
    %c17 = arith.constant 17 : index
    %c0_17 = arith.constant 0 : index
    %19 = vector.load %arg8[%c0_16, %c17, %c0_17] : memref<18x18x128xf32, #tpu.memory_space<vmem>>, vector<18x1x128xf32>
    tpu.vector_store %arg8[%c0_16, %c17, %c0_17], %18 {strides = array<i32>} : memref<18x18x128xf32, #tpu.memory_space<vmem>>, vector<18x1x128xf32>,
    %c0_i32 = arith.constant 0 : i32
    %20 = arith.cmpi eq, %arg1, %c0_i32 : i32
    %21 = arith.extui %20 : i1 to i32
    %c0_i32_18 = arith.constant 0 : i32
    %22 = arith.cmpi ne, %21, %c0_i32_18 : i32
    scf.if %22 {
      %cst_89 = arith.constant 0.000000e+00 : f32
      %96 = vector.broadcast %cst_89 : f32 to vector<1x18x128xf32>
      %c0_90 = arith.constant 0 : index
      %c0_91 = arith.constant 0 : index
      %c0_92 = arith.constant 0 : index
      %97 = vector.load %arg8[%c0_90, %c0_91, %c0_92] : memref<18x18x128xf32, #tpu.memory_space<vmem>>, vector<1x18x128xf32>
      tpu.vector_store %arg8[%c0_90, %c0_91, %c0_92], %96 {strides = array<i32>} : memref<18x18x128xf32, #tpu.memory_space<vmem>>, vector<1x18x128xf32>,
    } else {
    }
    %c0_i32_19 = arith.constant 0 : i32
    %23 = arith.cmpi eq, %arg1, %c0_i32_19 : i32
    %24 = arith.extui %23 : i1 to i32
    %c0_i32_20 = arith.constant 0 : i32
    %25 = arith.cmpi ne, %24, %c0_i32_20 : i32
    scf.if %25 {
      %cst_89 = arith.constant 0.000000e+00 : f32
      %96 = vector.broadcast %cst_89 : f32 to vector<1x18x128xf32>
      %c17_90 = arith.constant 17 : index
      %c0_91 = arith.constant 0 : index
      %c0_92 = arith.constant 0 : index
      %97 = vector.load %arg8[%c17_90, %c0_91, %c0_92] : memref<18x18x128xf32, #tpu.memory_space<vmem>>, vector<1x18x128xf32>
      tpu.vector_store %arg8[%c17_90, %c0_91, %c0_92], %96 {strides = array<i32>} : memref<18x18x128xf32, #tpu.memory_space<vmem>>, vector<1x18x128xf32>,
    } else {
    }
    %c0_21 = arith.constant 0 : index
    %c0_22 = arith.constant 0 : index
    %26 = vector.load %arg6[%c0_21, %c0_22] : memref<1x128xf32, #tpu.memory_space<vmem>>, vector<1x128xf32>
    %27 = vector.shape_cast %26 : vector<1x128xf32> to vector<1x128xf32>
    %28 = vector.broadcast %27 : vector<1x128xf32> to vector<256x128xf32>
    %c0_23 = arith.constant 0 : index
    %c0_24 = arith.constant 0 : index
    %c0_25 = arith.constant 0 : index
    %29 = vector.load %arg8[%c0_23, %c0_24, %c0_25] : memref<18x18x128xf32, #tpu.memory_space<vmem>>, vector<16x16x128xf32>
    %30 = vector.shape_cast %29 : vector<16x16x128xf32> to vector<256x128xf32>
    %c0_26 = arith.constant 0 : index
    %c0_27 = arith.constant 0 : index
    %c0_28 = arith.constant 0 : index
    %31 = vector.load %arg5[%c0_26, %c0_27, %c0_28] : memref<9x128x128xf32, #tpu.memory_space<vmem>>, vector<1x128x128xf32>
    %32 = vector.shape_cast %31 : vector<1x128x128xf32> to vector<128x128xf32>
    %cst_29 = arith.constant dense<0.000000e+00> : vector<256x128xf32>
    %33 = tpu.matmul %30, %32, %cst_29 {dimension_numbers = #tpu.dot_dimension_numbers<[1], [0], [0], [1], [0, 0, 1, 1], [], []>} : vector<256x128xf32>, vector<128x128xf32>, vector<256x128xf32> -> vector<256x128xf32>
    %34 = arith.addf %28, %33 : vector<256x128xf32>
    %c0_30 = arith.constant 0 : index
    %c1_31 = arith.constant 1 : index
    %c0_32 = arith.constant 0 : index
    %35 = vector.load %arg8[%c0_30, %c1_31, %c0_32] : memref<18x18x128xf32, #tpu.memory_space<vmem>>, vector<16x16x128xf32>
    %36 = vector.shape_cast %35 : vector<16x16x128xf32> to vector<256x128xf32>
    %c1_33 = arith.constant 1 : index
    %c0_34 = arith.constant 0 : index
    %c0_35 = arith.constant 0 : index
    %37 = vector.load %arg5[%c1_33, %c0_34, %c0_35] : memref<9x128x128xf32, #tpu.memory_space<vmem>>, vector<1x128x128xf32>
    %38 = vector.shape_cast %37 : vector<1x128x128xf32> to vector<128x128xf32>
    %cst_36 = arith.constant dense<0.000000e+00> : vector<256x128xf32>
    %39 = tpu.matmul %36, %38, %cst_36 {dimension_numbers = #tpu.dot_dimension_numbers<[1], [0], [0], [1], [0, 0, 1, 1], [], []>} : vector<256x128xf32>, vector<128x128xf32>, vector<256x128xf32> -> vector<256x128xf32>
    %40 = arith.addf %34, %39 : vector<256x128xf32>
    %c0_37 = arith.constant 0 : index
    %c2 = arith.constant 2 : index
    %c0_38 = arith.constant 0 : index
    %41 = vector.load %arg8[%c0_37, %c2, %c0_38] : memref<18x18x128xf32, #tpu.memory_space<vmem>>, vector<16x16x128xf32>
    %42 = vector.shape_cast %41 : vector<16x16x128xf32> to vector<256x128xf32>
    %c2_39 = arith.constant 2 : index
    %c0_40 = arith.constant 0 : index
    %c0_41 = arith.constant 0 : index
    %43 = vector.load %arg5[%c2_39, %c0_40, %c0_41] : memref<9x128x128xf32, #tpu.memory_space<vmem>>, vector<1x128x128xf32>
    %44 = vector.shape_cast %43 : vector<1x128x128xf32> to vector<128x128xf32>
    %cst_42 = arith.constant dense<0.000000e+00> : vector<256x128xf32>
    %45 = tpu.matmul %42, %44, %cst_42 {dimension_numbers = #tpu.dot_dimension_numbers<[1], [0], [0], [1], [0, 0, 1, 1], [], []>} : vector<256x128xf32>, vector<128x128xf32>, vector<256x128xf32> -> vector<256x128xf32>
    %46 = arith.addf %40, %45 : vector<256x128xf32>
    %c1_43 = arith.constant 1 : index
    %c0_44 = arith.constant 0 : index
    %c0_45 = arith.constant 0 : index
    %47 = vector.load %arg8[%c1_43, %c0_44, %c0_45] : memref<18x18x128xf32, #tpu.memory_space<vmem>>, vector<16x16x128xf32>
    %48 = vector.shape_cast %47 : vector<16x16x128xf32> to vector<256x128xf32>
    %c3 = arith.constant 3 : index
    %c0_46 = arith.constant 0 : index
    %c0_47 = arith.constant 0 : index
    %49 = vector.load %arg5[%c3, %c0_46, %c0_47] : memref<9x128x128xf32, #tpu.memory_space<vmem>>, vector<1x128x128xf32>
    %50 = vector.shape_cast %49 : vector<1x128x128xf32> to vector<128x128xf32>
    %cst_48 = arith.constant dense<0.000000e+00> : vector<256x128xf32>
    %51 = tpu.matmul %48, %50, %cst_48 {dimension_numbers = #tpu.dot_dimension_numbers<[1], [0], [0], [1], [0, 0, 1, 1], [], []>} : vector<256x128xf32>, vector<128x128xf32>, vector<256x128xf32> -> vector<256x128xf32>
    %52 = arith.addf %46, %51 : vector<256x128xf32>
    %c1_49 = arith.constant 1 : index
    %c1_50 = arith.constant 1 : index
    %c0_51 = arith.constant 0 : index
    %53 = vector.load %arg8[%c1_49, %c1_50, %c0_51] : memref<18x18x128xf32, #tpu.memory_space<vmem>>, vector<16x16x128xf32>
    %54 = vector.shape_cast %53 : vector<16x16x128xf32> to vector<256x128xf32>
    %c4 = arith.constant 4 : index
    %c0_52 = arith.constant 0 : index
    %c0_53 = arith.constant 0 : index
    %55 = vector.load %arg5[%c4, %c0_52, %c0_53] : memref<9x128x128xf32, #tpu.memory_space<vmem>>, vector<1x128x128xf32>
    %56 = vector.shape_cast %55 : vector<1x128x128xf32> to vector<128x128xf32>
    %cst_54 = arith.constant dense<0.000000e+00> : vector<256x128xf32>
    %57 = tpu.matmul %54, %56, %cst_54 {dimension_numbers = #tpu.dot_dimension_numbers<[1], [0], [0], [1], [0, 0, 1, 1], [], []>} : vector<256x128xf32>, vector<128x128xf32>, vector<256x128xf32> -> vector<256x128xf32>
    %58 = arith.addf %52, %57 : vector<256x128xf32>
    %c1_55 = arith.constant 1 : index
    %c2_56 = arith.constant 2 : index
    %c0_57 = arith.constant 0 : index
    %59 = vector.load %arg8[%c1_55, %c2_56, %c0_57] : memref<18x18x128xf32, #tpu.memory_space<vmem>>, vector<16x16x128xf32>
    %60 = vector.shape_cast %59 : vector<16x16x128xf32> to vector<256x128xf32>
    %c5 = arith.constant 5 : index
    %c0_58 = arith.constant 0 : index
    %c0_59 = arith.constant 0 : index
    %61 = vector.load %arg5[%c5, %c0_58, %c0_59] : memref<9x128x128xf32, #tpu.memory_space<vmem>>, vector<1x128x128xf32>
    %62 = vector.shape_cast %61 : vector<1x128x128xf32> to vector<128x128xf32>
    %cst_60 = arith.constant dense<0.000000e+00> : vector<256x128xf32>
    %63 = tpu.matmul %60, %62, %cst_60 {dimension_numbers = #tpu.dot_dimension_numbers<[1], [0], [0], [1], [0, 0, 1, 1], [], []>} : vector<256x128xf32>, vector<128x128xf32>, vector<256x128xf32> -> vector<256x128xf32>
    %64 = arith.addf %58, %63 : vector<256x128xf32>
    %c2_61 = arith.constant 2 : index
    %c0_62 = arith.constant 0 : index
    %c0_63 = arith.constant 0 : index
    %65 = vector.load %arg8[%c2_61, %c0_62, %c0_63] : memref<18x18x128xf32, #tpu.memory_space<vmem>>, vector<16x16x128xf32>
    %66 = vector.shape_cast %65 : vector<16x16x128xf32> to vector<256x128xf32>
    %c6 = arith.constant 6 : index
    %c0_64 = arith.constant 0 : index
    %c0_65 = arith.constant 0 : index
    %67 = vector.load %arg5[%c6, %c0_64, %c0_65] : memref<9x128x128xf32, #tpu.memory_space<vmem>>, vector<1x128x128xf32>
    %68 = vector.shape_cast %67 : vector<1x128x128xf32> to vector<128x128xf32>
    %cst_66 = arith.constant dense<0.000000e+00> : vector<256x128xf32>
    %69 = tpu.matmul %66, %68, %cst_66 {dimension_numbers = #tpu.dot_dimension_numbers<[1], [0], [0], [1], [0, 0, 1, 1], [], []>} : vector<256x128xf32>, vector<128x128xf32>, vector<256x128xf32> -> vector<256x128xf32>
    %70 = arith.addf %64, %69 : vector<256x128xf32>
    %c2_67 = arith.constant 2 : index
    %c1_68 = arith.constant 1 : index
    %c0_69 = arith.constant 0 : index
    %71 = vector.load %arg8[%c2_67, %c1_68, %c0_69] : memref<18x18x128xf32, #tpu.memory_space<vmem>>, vector<16x16x128xf32>
    %72 = vector.shape_cast %71 : vector<16x16x128xf32> to vector<256x128xf32>
    %c7 = arith.constant 7 : index
    %c0_70 = arith.constant 0 : index
    %c0_71 = arith.constant 0 : index
    %73 = vector.load %arg5[%c7, %c0_70, %c0_71] : memref<9x128x128xf32, #tpu.memory_space<vmem>>, vector<1x128x128xf32>
    %74 = vector.shape_cast %73 : vector<1x128x128xf32> to vector<128x128xf32>
    %cst_72 = arith.constant dense<0.000000e+00> : vector<256x128xf32>
    %75 = tpu.matmul %72, %74, %cst_72 {dimension_numbers = #tpu.dot_dimension_numbers<[1], [0], [0], [1], [0, 0, 1, 1], [], []>} : vector<256x128xf32>, vector<128x128xf32>, vector<256x128xf32> -> vector<256x128xf32>
    %76 = arith.addf %70, %75 : vector<256x128xf32>
    %c2_73 = arith.constant 2 : index
    %c2_74 = arith.constant 2 : index
    %c0_75 = arith.constant 0 : index
    %77 = vector.load %arg8[%c2_73, %c2_74, %c0_75] : memref<18x18x128xf32, #tpu.memory_space<vmem>>, vector<16x16x128xf32>
    %78 = vector.shape_cast %77 : vector<16x16x128xf32> to vector<256x128xf32>
    %c8 = arith.constant 8 : index
    %c0_76 = arith.constant 0 : index
    %c0_77 = arith.constant 0 : index
    %79 = vector.load %arg5[%c8, %c0_76, %c0_77] : memref<9x128x128xf32, #tpu.memory_space<vmem>>, vector<1x128x128xf32>
    %80 = vector.shape_cast %79 : vector<1x128x128xf32> to vector<128x128xf32>
    %cst_78 = arith.constant dense<0.000000e+00> : vector<256x128xf32>
    %81 = tpu.matmul %78, %80, %cst_78 {dimension_numbers = #tpu.dot_dimension_numbers<[1], [0], [0], [1], [0, 0, 1, 1], [], []>} : vector<256x128xf32>, vector<128x128xf32>, vector<256x128xf32> -> vector<256x128xf32>
    %82 = arith.addf %76, %81 : vector<256x128xf32>
    %83 = arith.negf %82 : vector<256x128xf32>
    %84 = math.exp %83 : vector<256x128xf32>
    %cst_79 = arith.constant 1.000000e+00 : f32
    %85 = vector.broadcast %cst_79 : f32 to vector<256x128xf32>
    %86 = arith.addf %85, %84 : vector<256x128xf32>
    %87 = arith.divf %85, %86 : vector<256x128xf32>
    %88 = arith.mulf %82, %87 : vector<256x128xf32>
    %89 = vector.shape_cast %88 : vector<256x128xf32> to vector<16x16x128xf32>
    %c0_80 = arith.constant 0 : index
    %c0_81 = arith.constant 0 : index
    %c1_82 = arith.constant 1 : index
    %c0_83 = arith.constant 0 : index
    %c0_84 = arith.constant 0 : index
    %90 = vector.load %arg2[%c0_80, %c0_81, %c1_82, %c0_83, %c0_84] : memref<1x1x18x16x128xf32, #tpu.memory_space<vmem>>, vector<1x1x16x16x128xf32>
    %91 = vector.shape_cast %90 : vector<1x1x16x16x128xf32> to vector<16x16x128xf32>
    %92 = arith.addf %89, %91 : vector<16x16x128xf32>
    %c0_85 = arith.constant 0 : index
    %c0_86 = arith.constant 0 : index
    %c0_87 = arith.constant 0 : index
    %c0_88 = arith.constant 0 : index
    %93 = vector.load %arg7[%c0_85, %c0_86, %c0_87, %c0_88] : memref<1x16x16x128xf32, #tpu.memory_space<vmem>>, vector<1x16x16x128xf32>
    %94 = vector.shape_cast %93 : vector<1x16x16x128xf32> to vector<16x16x128xf32>
    %95 = vector.shape_cast %92 : vector<16x16x128xf32> to vector<1x16x16x128xf32>
    tpu.vector_store %arg7[%c0_85, %c0_86, %c0_87, %c0_88], %95 {strides = array<i32>} : memref<1x16x16x128xf32, #tpu.memory_space<vmem>>, vector<1x16x16x128xf32>,
    return
  }
  func.func @transform_0(%arg0: i32, %arg1: i32) -> (i32, i32, i32, i32, i32) {
    %c0_i32 = arith.constant 0 : i32
    %c0_i32_0 = arith.constant 0 : i32
    %c0_i32_1 = arith.constant 0 : i32
    %c0_i32_2 = arith.constant 0 : i32
    return %arg0, %arg1, %c0_i32, %c0_i32_0, %c0_i32_1 : i32, i32, i32, i32, i32
  }
  func.func @transform_1(%arg0: i32, %arg1: i32) -> (i32, i32) {
    %c0_i32 = arith.constant 0 : i32
    %c0_i32_0 = arith.constant 0 : i32
    %c0_i32_1 = arith.constant 0 : i32
    return %c0_i32, %c0_i32_0 : i32, i32
  }
  func.func @transform_2(%arg0: i32, %arg1: i32) -> (i32, i32) {
    %c0_i32 = arith.constant 0 : i32
    %c0_i32_0 = arith.constant 0 : i32
    %c0_i32_1 = arith.constant 0 : i32
    return %c0_i32, %c0_i32_0 : i32, i32
  }
  func.func @transform_3(%arg0: i32, %arg1: i32) -> (i32, i32, i32) {
    %c0_i32 = arith.constant 0 : i32
    %c0_i32_0 = arith.constant 0 : i32
    %c0_i32_1 = arith.constant 0 : i32
    %c0_i32_2 = arith.constant 0 : i32
    return %c0_i32, %c0_i32_0, %c0_i32_1 : i32, i32, i32
  }
  func.func @transform_4(%arg0: i32, %arg1: i32) -> (i32, i32) {
    %c0_i32 = arith.constant 0 : i32
    %c0_i32_0 = arith.constant 0 : i32
    %c0_i32_1 = arith.constant 0 : i32
    return %c0_i32, %c0_i32_0 : i32, i32
  }
  func.func @transform_5(%arg0: i32, %arg1: i32) -> (i32, i32, i32, i32) {
    %c0_i32 = arith.constant 0 : i32
    %c0_i32_0 = arith.constant 0 : i32
    %c0_i32_1 = arith.constant 0 : i32
    return %arg0, %arg1, %c0_i32, %c0_i32_0 : i32, i32, i32, i32
  }
}

</mosaic_0001>

<llo_original>
// kernel: tpu_custom_call.1
$region0: #{tpu_custom_call.1}
  #allocation0 [shape = 'u32[]', space=smem, size = 0x4, offset = 0x4, fixed_abs, tag = 'smem constant byte address 0x4 - core index']
  #allocation1 [shape = 'u32[144,128]{1,0:T(1,128)}', space=vmem, size = 0x12000, scoped, tag = 'internal scratch']
  #allocation2 [shape = 'f32[18,18,128]{2,1,0:T(8,128)}', space=vmem, size = 0x36000, scoped, tag = 'scratch operand']
  %s0 = inlined_call_operand.hbm [shape: f32[2,1,18,16,128], index: 0, kind: input, shape index: {}]
  %s1 = inlined_call_operand.hbm [shape: f32[128,128], index: 1, kind: input, shape index: {}]
  %s2 = inlined_call_operand.vmem [shape: f32[1,128], index: 2, kind: input, shape index: {}]
  %s3 = inlined_call_operand.hbm [shape: f32[9,128,128], index: 3, kind: input, shape index: {}]
  %s4 = inlined_call_operand.vmem [shape: f32[1,128], index: 4, kind: input, shape index: {}]
  %s5 = inlined_call_operand.hbm [shape: f32[2,16,16,128], index: 5, kind: output, shape index: {}]
  %s6 = sld [smem:[#allocation0]]
  $region69: #{tpu_custom_call.1} parent=0
    _
  %s8 = ssub.s32 1, %s6
  %s9 = scalar_select 0, %s8, %s6
  $region1: #{tpu_custom_call.1} parent=0
    #allocation3 [shape = 'u8[294912]{0}', space=vmem, size = 0x48000, scoped, tag = 'input window, operand 0']
    #allocation4 [shape = 's32[2]{0}', space=sflag, size = 0x8, scoped, tag = 'scoped memory for tpu_custom_call.1']
    #allocation5 [shape = 's32[2]{0}', space=sflag, size = 0x8, scoped, tag = 'scoped memory for tpu_custom_call.1']
    #allocation6 [shape = 'u8[65536]{0}', space=vmem, size = 0x10000, scoped, tag = 'input window, operand 1, single buffered']
    #allocation7 [shape = 's32[1]{0}', space=sflag, size = 0x4, scoped, tag = 'scoped memory for tpu_custom_call.1']
    #allocation8 [shape = 'u8[589824]{0}', space=vmem, size = 0x90000, scoped, tag = 'input window, operand 3, single buffered']
    #allocation9 [shape = 'u8[262144]{0}', space=vmem, size = 0x40000, scoped, tag = 'output window, operand 0']
    %10 = vsyncpa [#allocation4], 0
    %s11 = scalar_lea.sflag [#allocation4], 1
    %12 = vsyncpa %s11, 0
    %13 = vsyncpa [#allocation7], 0
    %14 = vsyncpa [#allocation5], 0
    %s15 = scalar_lea.sflag [#allocation5], 1
    %16 = vsyncpa %s15, 0
    loop: start=0, step=1, limit=4
    $region2: #{tpu_custom_call.1} parent=1 // loop_pre_header
      _
    $region3: #{tpu_custom_call.1} parent=1 // loop_header
      %s18 = sphi 0, %s22
      %p19 = scmp.ge.s32.totalorder %s18, 4
      %s25 = sphi 0, %s37
      %s26 = sphi 0, %s33
      %s27 = sphi 0, %s25
      %s28 = sphi 0, %s26
      %s29 = sphi 0, %s27
      %s30 = sphi 0, %s28
      %s42 = sphi 0, %s44
      %s45 = sphi 0, %s42
      %s46 = sphi 0, %s45
      %s62 = sphi 0, %s46
      %s66 = sphi 0, %s66
      %s68 = sphi 0, %s66
      %s69 = sphi 0, %s68
      %s83 = sphi 0, %s69
      %s87 = sphi 0, %s87
      %s89 = sphi 0, %s87
      %s90 = sphi 0, %s89
      %s104 = sphi 0, %s90
      %s108 = sphi 0, %s108
      %s110 = sphi 0, %s108
      %s111 = sphi 0, %s110
      %s125 = sphi 0, %s111
      %s129 = sphi 0, %s129
      %s131 = sphi 0, %s129
      %s132 = sphi 0, %s131
      %s146 = sphi 0, %s132
      %s154 = sphi 0, %s156
      %s157 = sphi 0, %s154
      %s158 = sphi 0, %s157
      %s174 = sphi 0, %s158
    $region4: #{tpu_custom_call.1} parent=1 // loop_header_branch
      %21 = sbr.rel (%p19) target = $region8
    $region5: #{tpu_custom_call.1} parent=1 // loop_body
      %s23 = ssub.s32 %s18, 1
      %s24 = ssub.s32 %s18, 2
      %s31 = sadd.s32 1, %s26
      %p32 = scmp.ge.s32.totalorder %s31, 1
      %s33 = scalar_select %p32, 0, %s31
      %s34 = sadd.s32 1, %s25
      %s35 = scalar_select %p32, %s34, %s25
      %p36 = scmp.ge.s32.totalorder %s35, 2
      %s37 = scalar_select %p36, 0, %s35
      %s38 = ssub.s32 %s25, %s37
      %s39 = ssub.s32 %s26, %s33
      %s40 = sor.u32 %s38, %s39
      %p41 = scmp.eq.s32.totalorder %s40, 0
      %s43 = sadd.s32 %s42, 1
      %s44 = scalar_select %p41, %s42, %s43
      %p47 = pneg %p41
      %p48 = scmp.eq.s32.totalorder %s18, 1
      %p49 = por %p47, %p48
      %p50 = scmp.ne.s32.totalorder %s42, %s45
      %p51 = scmp.eq.s32.totalorder %s18, 0
      %p52 = por %p50, %p51
      %p53 = scmp.ne.s32.totalorder %s42, %s45
      %p54 = scmp.eq.s32.totalorder %s23, 1
      %p55 = por %p53, %p54
      %p56 = scmp.ne.s32.totalorder %s45, %s46
      %p57 = scmp.eq.s32.totalorder %s23, 0
      %p58 = por %p56, %p57
      %p59 = scmp.ne.s32.totalorder %s45, %s46
      %p60 = scmp.eq.s32.totalorder %s24, 1
      %p61 = por %p59, %p60
      %p63 = scmp.ne.s32.totalorder %s46, %s62
      %p64 = scmp.eq.s32.totalorder %s24, 0
      %p65 = por %p63, %p64
      %s67 = sadd.s32 %s66, 1
      %p70 = scmp.eq.s32.totalorder %s18, 1
      %p71 = scmp.ne.s32.totalorder %s66, %s68
      %p72 = scmp.eq.s32.totalorder %s18, 0
      %p73 = por %p71, %p72
      %p74 = scmp.ne.s32.totalorder %s66, %s68
      %p75 = scmp.eq.s32.totalorder %s23, 1
      %p76 = por %p74, %p75
      %p77 = scmp.ne.s32.totalorder %s68, %s69
      %p78 = scmp.eq.s32.totalorder %s23, 0
      %p79 = por %p77, %p78
      %p80 = scmp.ne.s32.totalorder %s68, %s69
      %p81 = scmp.eq.s32.totalorder %s24, 1
      %p82 = por %p80, %p81
      %p84 = scmp.ne.s32.totalorder %s69, %s83
      %p85 = scmp.eq.s32.totalorder %s24, 0
      %p86 = por %p84, %p85
      %s88 = sadd.s32 %s87, 1
      %p91 = scmp.eq.s32.totalorder %s18, 1
      %p92 = scmp.ne.s32.totalorder %s87, %s89
      %p93 = scmp.eq.s32.totalorder %s18, 0
      %p94 = por %p92, %p93
      %p95 = scmp.ne.s32.totalorder %s87, %s89
      %p96 = scmp.eq.s32.totalorder %s23, 1
      %p97 = por %p95, %p96
      %p98 = scmp.ne.s32.totalorder %s89, %s90
      %p99 = scmp.eq.s32.totalorder %s23, 0
      %p100 = por %p98, %p99
      %p101 = scmp.ne.s32.totalorder %s89, %s90
      %p102 = scmp.eq.s32.totalorder %s24, 1
      %p103 = por %p101, %p102
      %p105 = scmp.ne.s32.totalorder %s90, %s104
      %p106 = scmp.eq.s32.totalorder %s24, 0
      %p107 = por %p105, %p106
      %s109 = sadd.s32 %s108, 1
      %p112 = scmp.eq.s32.totalorder %s18, 1
      %p113 = scmp.ne.s32.totalorder %s108, %s110
      %p114 = scmp.eq.s32.totalorder %s18, 0
      %p115 = por %p113, %p114
      %p116 = scmp.ne.s32.totalorder %s108, %s110
      %p117 = scmp.eq.s32.totalorder %s23, 1
      %p118 = por %p116, %p117
      %p119 = scmp.ne.s32.totalorder %s110, %s111
      %p120 = scmp.eq.s32.totalorder %s23, 0
      %p121 = por %p119, %p120
      %p122 = scmp.ne.s32.totalorder %s110, %s111
      %p123 = scmp.eq.s32.totalorder %s24, 1
      %p124 = por %p122, %p123
      %p126 = scmp.ne.s32.totalorder %s111, %s125
      %p127 = scmp.eq.s32.totalorder %s24, 0
      %p128 = por %p126, %p127
      %s130 = sadd.s32 %s129, 1
      %p133 = scmp.eq.s32.totalorder %s18, 1
      %p134 = scmp.ne.s32.totalorder %s129, %s131
      %p135 = scmp.eq.s32.totalorder %s18, 0
      %p136 = por %p134, %p135
      %p137 = scmp.ne.s32.totalorder %s129, %s131
      %p138 = scmp.eq.s32.totalorder %s23, 1
      %p139 = por %p137, %p138
      %p140 = scmp.ne.s32.totalorder %s131, %s132
      %p141 = scmp.eq.s32.totalorder %s23, 0
      %p142 = por %p140, %p141
      %p143 = scmp.ne.s32.totalorder %s131, %s132
      %p144 = scmp.eq.s32.totalorder %s24, 1
      %p145 = por %p143, %p144
      %p147 = scmp.ne.s32.totalorder %s132, %s146
      %p148 = scmp.eq.s32.totalorder %s24, 0
      %p149 = por %p147, %p148
      %s150 = ssub.s32 %s25, %s37
      %s151 = ssub.s32 %s26, %s33
      %s152 = sor.u32 %s150, %s151
      %p153 = scmp.eq.s32.totalorder %s152, 0
      %s155 = sadd.s32 %s154, 1
      %s156 = scalar_select %p153, %s154, %s155
      %p159 = pneg %p153
      %p160 = scmp.eq.s32.totalorder %s18, 1
      %p161 = por %p159, %p160
      %p162 = scmp.ne.s32.totalorder %s154, %s157
      %p163 = scmp.eq.s32.totalorder %s18, 0
      %p164 = por %p162, %p163
      %p165 = scmp.ne.s32.totalorder %s154, %s157
      %p166 = scmp.eq.s32.totalorder %s23, 1
      %p167 = por %p165, %p166
      %p168 = scmp.ne.s32.totalorder %s157, %s158
      %p169 = scmp.eq.s32.totalorder %s23, 0
      %p170 = por %p168, %p169
      %p171 = scmp.ne.s32.totalorder %s157, %s158
      %p172 = scmp.eq.s32.totalorder %s24, 1
      %p173 = por %p171, %p172
      %p175 = scmp.ne.s32.totalorder %s158, %s174
      %p176 = scmp.eq.s32.totalorder %s24, 0
      %p177 = por %p175, %p176
      %p178 = scmp.le.s32.totalorder 1, %s18
      %p179 = scmp.lt.s32.totalorder %s18, 3
      %p180 = pnand %p178, %p179
      %p181 = pneg %p180
      // Predicated region
      $region9: #{tpu_custom_call.1} parent=5 // pred_check
        _
      $region10: #{tpu_custom_call.1} parent=5 // pred_check_branch
        %183 = sbr.rel (%p180) target = $region12
      $region11: #{tpu_custom_call.1} parent=5 // pred_region
        %s184 = ssub.s32 %s18, 1
        // Predicated region
        $region13: #{tpu_custom_call.1} parent=11 // pred_check
          %p185 = pneg %p79
        $region14: #{tpu_custom_call.1} parent=11 // pred_check_branch
          %187 = sbr.rel (%p185) target = $region16
        $region15: #{tpu_custom_call.1} parent=11 // pred_region
          %s189 = ssub.s32 2048, 2048
          %190 = vsyncadd [#allocation7], %s189
          %s191 = sshll.u32 [#allocation6], 4
          %s192 = int_to_ptr.vmem [resolvable:$true] %s191
          %197 = dma.hbm_to_vmem [thread:$0]  %s1, 2048, %s192, [#allocation7], 128, 128, 8
        $region16: #{tpu_custom_call.1} parent=11 // pred_fallthru
          _
        // Predicated region
        $region17: #{tpu_custom_call.1} parent=11 // pred_check
          %p198 = pneg %p100
        $region18: #{tpu_custom_call.1} parent=11 // pred_check_branch
          %200 = sbr.rel (%p198) target = $region20
        $region19: #{tpu_custom_call.1} parent=11 // pred_region
          _
        $region20: #{tpu_custom_call.1} parent=11 // pred_fallthru
          _
        // Predicated region
        $region21: #{tpu_custom_call.1} parent=11 // pred_check
          %p201 = pneg %p121
        $region22: #{tpu_custom_call.1} parent=11 // pred_check_branch
          %203 = sbr.rel (%p201) target = $region24
        $region23: #{tpu_custom_call.1} parent=11 // pred_region
          %s205 = ssub.s32 18432, 18432
          %206 = vsyncadd [#allocation7], %s205
          %s207 = sshll.u32 [#allocation8], 4
          %s208 = int_to_ptr.vmem [resolvable:$true] %s207
          %213 = dma.hbm_to_vmem [thread:$0]  %s3, 18432, %s208, [#allocation7], 128, 128, 8
        $region24: #{tpu_custom_call.1} parent=11 // pred_fallthru
          _
        // Predicated region
        $region25: #{tpu_custom_call.1} parent=11 // pred_check
          %p214 = pneg %p142
        $region26: #{tpu_custom_call.1} parent=11 // pred_check_branch
          %216 = sbr.rel (%p214) target = $region28
        $region27: #{tpu_custom_call.1} parent=11 // pred_region
          _
        $region28: #{tpu_custom_call.1} parent=11 // pred_fallthru
          _
      $region12: #{tpu_custom_call.1} parent=5 // pred_fallthru
        _
      %p217 = scmp.lt.s32.totalorder %s18, 2
      // Predicated region
      $region29: #{tpu_custom_call.1} parent=5 // pred_check
        %p218 = pneg %p217
      $region30: #{tpu_custom_call.1} parent=5 // pred_check_branch
        %220 = sbr.rel (%p218) target = $region32
      $region31: #{tpu_custom_call.1} parent=5 // pred_region
        // Predicated region
        $region33: #{tpu_custom_call.1} parent=31 // pred_check
          %p221 = pneg %p52
        $region34: #{tpu_custom_call.1} parent=31 // pred_check_branch
          %223 = sbr.rel (%p221) target = $region36
        $region35: #{tpu_custom_call.1} parent=31 // pred_region
          %s224 = sand.u32 %s42, 1
          %s225 = scalar_lea.sflag [#allocation4], %s224
          %s226 = sand.u32 %s42, 1
          %s227 = smul.addr %s226, 288
          %s228 = scalar_lea.vmem [#allocation3], %s227
          %s230 = ssub.s32 4608, 4608
          %231 = vsyncadd %s225, %s230
          %s232 = smul.addr %s26, 36
          %s233 = smul.addr %s25, 36
          %s234 = sadd.s32 %s232, %s233
          %s235 = smul.addr %s234, 128
          %s236 = scalar_lea.hbm %s0, %s235
          %s237 = sshll.u32 %s228, 4
          %s238 = int_to_ptr.vmem [resolvable:$true] %s237
          %243 = dma.hbm_to_vmem [thread:$0]  %s236, 4608, %s238, %s225, 128, 128, 8
        $region36: #{tpu_custom_call.1} parent=31 // pred_fallthru
          _
      $region32: #{tpu_custom_call.1} parent=5 // pred_fallthru
        _
      %p244 = scmp.le.s32.totalorder 1, %s18
      %p245 = scmp.lt.s32.totalorder %s18, 3
      %p246 = pnand %p244, %p245
      %p247 = pneg %p246
      // Predicated region
      $region37: #{tpu_custom_call.1} parent=5 // pred_check
        _
      $region38: #{tpu_custom_call.1} parent=5 // pred_check_branch
        %249 = sbr.rel (%p246) target = $region40
      $region39: #{tpu_custom_call.1} parent=5 // pred_region
        %s250 = ssub.s32 %s18, 1
        %s251 = sand.u32 %s45, 1
        %s252 = scalar_lea.sflag [#allocation4], %s251
        %s253 = sand.u32 %s45, 1
        %s254 = smul.addr %s253, 288
        %s255 = scalar_lea.vmem [#allocation3], %s254
        // Predicated region
        $region41: #{tpu_custom_call.1} parent=39 // pred_check
          %p256 = pneg %p58
        $region42: #{tpu_custom_call.1} parent=39 // pred_check_branch
          %258 = sbr.rel (%p256) target = $region44
        $region43: #{tpu_custom_call.1} parent=39 // pred_region
          %259 = dma.done %s252, 4608
        $region44: #{tpu_custom_call.1} parent=39 // pred_fallthru
          _
        // Predicated region
        $region45: #{tpu_custom_call.1} parent=39 // pred_check
          %p260 = pneg %p79
        $region46: #{tpu_custom_call.1} parent=39 // pred_check_branch
          %262 = sbr.rel (%p260) target = $region48
        $region47: #{tpu_custom_call.1} parent=39 // pred_region
          %263 = dma.done [#allocation7], 2048
        $region48: #{tpu_custom_call.1} parent=39 // pred_fallthru
          _
        // Predicated region
        $region49: #{tpu_custom_call.1} parent=39 // pred_check
          %p264 = pneg %p121
        $region50: #{tpu_custom_call.1} parent=39 // pred_check_branch
          %266 = sbr.rel (%p264) target = $region52
        $region51: #{tpu_custom_call.1} parent=39 // pred_region
          %267 = dma.done [#allocation7], 18432
        $region52: #{tpu_custom_call.1} parent=39 // pred_fallthru
          _
        %s268 = sand.u32 %s45, 1
        %s269 = scalar_lea.sflag [#allocation4], %s268
        %s270 = sand.u32 %s45, 1
        %s271 = smul.addr %s270, 288
        %s272 = scalar_lea.vmem [#allocation3], %s271
        %p273 = pneg %p58
        %p274 = pneg %p55
        %p275 = pneg %p79
        %p276 = pneg %p76
        %p277 = pneg %p100
        %p278 = pneg %p97
        %p279 = pneg %p121
        %p280 = pneg %p118
        %p281 = pneg %p142
        %p282 = pneg %p139
        %p283 = pneg %p170
        %p284 = pneg %p167
        %s285 = sand.u32 %s157, 1
        %s286 = scalar_lea.sflag [#allocation5], %s285
        %s287 = sand.u32 %s157, 1
        %s288 = smul.addr %s287, 256
        %s289 = scalar_lea.vmem [#allocation9], %s288
        %s290 = smul.u32 16, %s28
        %v291 = vld [vmem:[%s255] sm:$0xff]
        %v292 = vld [vmem:[%s255 + $0x8] sm:$0xff]
        %v293 = vld [vmem:[%s255 + $0x10] sm:$0xff]
        %v294 = vld [vmem:[%s255 + $0x18] sm:$0xff]
        %v295 = vld [vmem:[%s255 + $0x20] sm:$0xff]
        %v296 = vld [vmem:[%s255 + $0x28] sm:$0xff]
        %v297 = vld [vmem:[%s255 + $0x30] sm:$0xff]
        %v298 = vld [vmem:[%s255 + $0x38] sm:$0xff]
        %v299 = vld [vmem:[%s255 + $0x40] sm:$0xff]
        %v300 = vld [vmem:[%s255 + $0x48] sm:$0xff]
        %v301 = vld [vmem:[%s255 + $0x50] sm:$0xff]
        %v302 = vld [vmem:[%s255 + $0x58] sm:$0xff]
        %v303 = vld [vmem:[%s255 + $0x60] sm:$0xff]
        %v304 = vld [vmem:[%s255 + $0x68] sm:$0xff]
        %v305 = vld [vmem:[%s255 + $0x70] sm:$0xff]
        %v306 = vld [vmem:[%s255 + $0x78] sm:$0xff]
        %v307 = vld [vmem:[%s255 + $0x80] sm:$0xff]
        %v308 = vld [vmem:[%s255 + $0x88] sm:$0xff]
        %v309 = vld [vmem:[%s255 + $0x90] sm:$0xff]
        %v310 = vld [vmem:[%s255 + $0x98] sm:$0xff]
        %v311 = vld [vmem:[%s255 + $0xa0] sm:$0xff]
        %v312 = vld [vmem:[%s255 + $0xa8] sm:$0xff]
        %v313 = vld [vmem:[%s255 + $0xb0] sm:$0xff]
        %v314 = vld [vmem:[%s255 + $0xb8] sm:$0xff]
        %v315 = vld [vmem:[%s255 + $0xc0] sm:$0xff]
        %v316 = vld [vmem:[%s255 + $0xc8] sm:$0xff]
        %v317 = vld [vmem:[%s255 + $0xd0] sm:$0xff]
        %v318 = vld [vmem:[%s255 + $0xd8] sm:$0xff]
        %v319 = vld [vmem:[%s255 + $0xe0] sm:$0xff]
        %v320 = vld [vmem:[%s255 + $0xe8] sm:$0xff]
        %v321 = vld [vmem:[%s255 + $0xf0] sm:$0xff]
        %v322 = vld [vmem:[%s255 + $0xf8] sm:$0xff]
        %v323 = vld [vmem:[%s255 + $0x100] sm:$0xff]
        %v324 = vld [vmem:[%s255 + $0x108] sm:$0xff]
        %v325 = vld [vmem:[%s255 + $0x110] sm:$0xff]
        %v326 = vld [vmem:[%s255 + $0x118] sm:$0xff]
        %v327 = vld [vmem:[#allocation6] sm:$0xff]
        %v328 = vld [vmem:[#allocation6 + $0x8] sm:$0xff]
        %v329 = vld [vmem:[#allocation6 + $0x10] sm:$0xff]
        %v330 = vld [vmem:[#allocation6 + $0x18] sm:$0xff]
        %v331 = vld [vmem:[#allocation6 + $0x20] sm:$0xff]
        %v332 = vld [vmem:[#allocation6 + $0x28] sm:$0xff]
        %v333 = vld [vmem:[#allocation6 + $0x30] sm:$0xff]
        %v334 = vld [vmem:[#allocation6 + $0x38] sm:$0xff]
        %v335 = vld [vmem:[#allocation6 + $0x40] sm:$0xff]
        %v336 = vld [vmem:[#allocation6 + $0x48] sm:$0xff]
        %v337 = vld [vmem:[#allocation6 + $0x50] sm:$0xff]
        %v338 = vld [vmem:[#allocation6 + $0x58] sm:$0xff]
        %v339 = vld [vmem:[#allocation6 + $0x60] sm:$0xff]
        %v340 = vld [vmem:[#allocation6 + $0x68] sm:$0xff]
        %v341 = vld [vmem:[#allocation6 + $0x70] sm:$0xff]
        %v342 = vld [vmem:[#allocation6 + $0x78] sm:$0xff]
        %v343 = vld [vmem:[%s2] sm:$0x1]
        %v345 = vlaneseq
        %v346 = vshrl.u32 %v345, 7
        %v347 = vsub.s32 0, %v346
        %v348 = vrot.slane %v343, %v347
        %350 = vmatprep.subr.mxu0 0.0
        %351 = vmatpush1.msra.mxu0 %v327
        %352 = vmatprep.subr.mxu0 0.0
        %353 = vmatpush1.msra.mxu0 %v328
        %354 = vmatprep.subr.mxu0 0.0
        %355 = vmatpush1.msra.mxu0 %v329
        %356 = vmatprep.subr.mxu0 0.0
        %357 = vmatpush1.msra.mxu0 %v330
        %358 = vmatprep.subr.mxu0 0.0
        %359 = vmatpush1.msra.mxu0 %v331
        %360 = vmatprep.subr.mxu0 0.0
        %361 = vmatpush1.msra.mxu0 %v332
        %362 = vmatprep.subr.mxu0 0.0
        %363 = vmatpush1.msra.mxu0 %v333
        %364 = vmatprep.subr.mxu0 0.0
        %365 = vmatpush1.msra.mxu0 %v334
        %366 = vmatprep.subr.mxu0 0.0
        %367 = vmatpush1.msra.mxu0 %v335
        %368 = vmatprep.subr.mxu0 0.0
        %369 = vmatpush1.msra.mxu0 %v336
        %370 = vmatprep.subr.mxu0 0.0
        %371 = vmatpush1.msra.mxu0 %v337
        %372 = vmatprep.subr.mxu0 0.0
        %373 = vmatpush1.msra.mxu0 %v338
        %374 = vmatprep.subr.mxu0 0.0
        %375 = vmatpush1.msra.mxu0 %v339
        %376 = vmatprep.subr.mxu0 0.0
        %377 = vmatpush1.msra.mxu0 %v340
        %378 = vmatprep.subr.mxu0 0.0
        %379 = vmatpush1.msra.mxu0 %v341
        %380 = vmatprep.subr.mxu0 0.0
        %381 = vmatpush1.msra.mxu0 %v342
        %382 = vmatprep.subr.mxu0 0.0
        %383 = vmatpush1.msra.mxu0 0.0
        %384 = vmatprep.subr.mxu0 0.0
        %385 = vmatpush1.msra.mxu0 0.0
        %386 = vmatprep.subr.mxu0 0.0
        %387 = vmatpush1.msra.mxu0 0.0
        %388 = vmatprep.subr.mxu0 0.0
        %389 = vmatpush1.msra.mxu0 0.0
        %390 = vmatprep.subr.mxu0 0.0
        %391 = vmatpush1.msra.mxu0 0.0
        %392 = vmatprep.subr.mxu0 0.0
        %393 = vmatpush1.msra.mxu0 0.0
        %394 = vmatprep.subr.mxu0 0.0
        %395 = vmatpush1.msra.mxu0 0.0
        %396 = vmatprep.subr.mxu0 0.0
        %397 = vmatpush1.msra.mxu0 0.0
        %398 = vmatprep.subr.mxu0 0.0
        %399 = vmatpush1.msra.mxu0 0.0
        %400 = vmatprep.subr.mxu0 0.0
        %401 = vmatpush1.msra.mxu0 0.0
        %402 = vmatprep.subr.mxu0 0.0
        %403 = vmatpush1.msra.mxu0 0.0
        %404 = vmatprep.subr.mxu0 0.0
        %405 = vmatpush1.msra.mxu0 0.0
        %406 = vmatprep.subr.mxu0 0.0
        %407 = vmatpush1.msra.mxu0 0.0
        %408 = vmatprep.subr.mxu0 0.0
        %409 = vmatpush1.msra.mxu0 0.0
        %410 = vmatprep.subr.mxu0 0.0
        %411 = vmatpush1.msra.mxu0 0.0
        %412 = vmatprep.subr.mxu0 0.0
        %413 = vmatpush1.msra.mxu0 0.0
        %414 = vmatprep.mubr.f32.mxu0 0.0
        %415 = vmatmul.mubr.f32.gmra.mrb[0].mxu0 %v291
        %v416 = vpop.f32.mrb[0].mxu0
        %v417 = vadd.f32 %v348, %v416
        %v418 = vpop.f32.mrb[0].mxu0
        %419 = vmatprep.mubr.f32.mxu0 0.0
        %420 = vmatmul.mubr.f32.gmra.mrb[0].mxu0 %v292
        %v421 = vpop.f32.mrb[0].mxu0
        %v422 = vadd.f32 %v348, %v421
        %v423 = vpop.f32.mrb[0].mxu0
        %424 = vmatprep.mubr.f32.mxu0 0.0
        %425 = vmatmul.mubr.f32.gmra.mrb[0].mxu0 %v293
        %v426 = vpop.f32.mrb[0].mxu0
        %v427 = vadd.f32 %v348, %v426
        %v428 = vpop.f32.mrb[0].mxu0
        %429 = vmatprep.mubr.f32.mxu0 0.0
        %430 = vmatmul.mubr.f32.gmra.mrb[0].mxu0 %v294
        %v431 = vpop.f32.mrb[0].mxu0
        %v432 = vadd.f32 %v348, %v431
        %v433 = vpop.f32.mrb[0].mxu0
        %434 = vmatprep.mubr.f32.mxu0 0.0
        %435 = vmatmul.mubr.f32.gmra.mrb[0].mxu0 %v295
        %v436 = vpop.f32.mrb[0].mxu0
        %v437 = vadd.f32 %v348, %v436
        %v438 = vpop.f32.mrb[0].mxu0
        %439 = vmatprep.mubr.f32.mxu0 0.0
        %440 = vmatmul.mubr.f32.gmra.mrb[0].mxu0 %v296
        %v441 = vpop.f32.mrb[0].mxu0
        %v442 = vadd.f32 %v348, %v441
        %v443 = vpop.f32.mrb[0].mxu0
        %444 = vmatprep.mubr.f32.mxu0 0.0
        %445 = vmatmul.mubr.f32.gmra.mrb[0].mxu0 %v297
        %v446 = vpop.f32.mrb[0].mxu0
        %v447 = vadd.f32 %v348, %v446
        %v448 = vpop.f32.mrb[0].mxu0
        %449 = vmatprep.mubr.f32.mxu0 0.0
        %450 = vmatmul.mubr.f32.gmra.mrb[0].mxu0 %v298
        %v451 = vpop.f32.mrb[0].mxu0
        %v452 = vadd.f32 %v348, %v451
        %v453 = vpop.f32.mrb[0].mxu0
        %454 = vmatprep.mubr.f32.mxu0 0.0
        %455 = vmatmul.mubr.f32.gmra.mrb[0].mxu0 %v299
        %v456 = vpop.f32.mrb[0].mxu0
        %v457 = vadd.f32 %v348, %v456
        %v458 = vpop.f32.mrb[0].mxu0
        %459 = vmatprep.mubr.f32.mxu0 0.0
        %460 = vmatmul.mubr.f32.gmra.mrb[0].mxu0 %v300
        %v461 = vpop.f32.mrb[0].mxu0
        %v462 = vadd.f32 %v348, %v461
        %v463 = vpop.f32.mrb[0].mxu0
        %464 = vmatprep.mubr.f32.mxu0 0.0
        %465 = vmatmul.mubr.f32.gmra.mrb[0].mxu0 %v301
        %v466 = vpop.f32.mrb[0].mxu0
        %v467 = vadd.f32 %v348, %v466
        %v468 = vpop.f32.mrb[0].mxu0
        %469 = vmatprep.mubr.f32.mxu0 0.0
        %470 = vmatmul.mubr.f32.gmra.mrb[0].mxu0 %v302
        %v471 = vpop.f32.mrb[0].mxu0
        %v472 = vadd.f32 %v348, %v471
        %v473 = vpop.f32.mrb[0].mxu0
        %474 = vmatprep.mubr.f32.mxu0 0.0
        %475 = vmatmul.mubr.f32.gmra.mrb[0].mxu0 %v303
        %v476 = vpop.f32.mrb[0].mxu0
        %v477 = vadd.f32 %v348, %v476
        %v478 = vpop.f32.mrb[0].mxu0
        %479 = vmatprep.mubr.f32.mxu0 0.0
        %480 = vmatmul.mubr.f32.gmra.mrb[0].mxu0 %v304
        %v481 = vpop.f32.mrb[0].mxu0
        %v482 = vadd.f32 %v348, %v481
        %v483 = vpop.f32.mrb[0].mxu0
        %484 = vmatprep.mubr.f32.mxu0 0.0
        %485 = vmatmul.mubr.f32.gmra.mrb[0].mxu0 %v305
        %v486 = vpop.f32.mrb[0].mxu0
        %v487 = vadd.f32 %v348, %v486
        %v488 = vpop.f32.mrb[0].mxu0
        %489 = vmatprep.mubr.f32.mxu0 0.0
        %490 = vmatmul.mubr.f32.gmra.mrb[0].mxu0 %v306
        %v491 = vpop.f32.mrb[0].mxu0
        %v492 = vadd.f32 %v348, %v491
        %v493 = vpop.f32.mrb[0].mxu0
        %494 = vmatprep.mubr.f32.mxu0 0.0
        %495 = vmatmul.mubr.f32.gmra.mrb[0].mxu0 %v307
        %v496 = vpop.f32.mrb[0].mxu0
        %v497 = vadd.f32 %v348, %v496
        %v498 = vpop.f32.mrb[0].mxu0
        %499 = vmatprep.mubr.f32.mxu0 0.0
        %500 = vmatmul.mubr.f32.gmra.mrb[0].mxu0 %v308
        %v501 = vpop.f32.mrb[0].mxu0
        %v502 = vadd.f32 %v348, %v501
        %v503 = vpop.f32.mrb[0].mxu0
        %504 = vmatprep.mubr.f32.mxu0 0.0
        %505 = vmatmul.mubr.f32.gmra.mrb[0].mxu0 %v309
        %v506 = vpop.f32.mrb[0].mxu0
        %v507 = vadd.f32 %v348, %v506
        %v508 = vpop.f32.mrb[0].mxu0
        %509 = vmatprep.mubr.f32.mxu0 0.0
        %510 = vmatmul.mubr.f32.gmra.mrb[0].mxu0 %v310
        %v511 = vpop.f32.mrb[0].mxu0
        %v512 = vadd.f32 %v348, %v511
        %v513 = vpop.f32.mrb[0].mxu0
        %514 = vmatprep.mubr.f32.mxu0 0.0
        %515 = vmatmul.mubr.f32.gmra.mrb[0].mxu0 %v311
        %v516 = vpop.f32.mrb[0].mxu0
        %v517 = vadd.f32 %v348, %v516
        %v518 = vpop.f32.mrb[0].mxu0
        %519 = vmatprep.mubr.f32.mxu0 0.0
        %520 = vmatmul.mubr.f32.gmra.mrb[0].mxu0 %v312
        %v521 = vpop.f32.mrb[0].mxu0
        %v522 = vadd.f32 %v348, %v521
        %v523 = vpop.f32.mrb[0].mxu0
        %524 = vmatprep.mubr.f32.mxu0 0.0
        %525 = vmatmul.mubr.f32.gmra.mrb[0].mxu0 %v313
        %v526 = vpop.f32.mrb[0].mxu0
        %v527 = vadd.f32 %v348, %v526
        %v528 = vpop.f32.mrb[0].mxu0
        %529 = vmatprep.mubr.f32.mxu0 0.0
        %530 = vmatmul.mubr.f32.gmra.mrb[0].mxu0 %v314
        %v531 = vpop.f32.mrb[0].mxu0
        %v532 = vadd.f32 %v348, %v531
        %v533 = vpop.f32.mrb[0].mxu0
        %534 = vmatprep.mubr.f32.mxu0 0.0
        %535 = vmatmul.mubr.f32.gmra.mrb[0].mxu0 %v315
        %v536 = vpop.f32.mrb[0].mxu0
        %v537 = vadd.f32 %v348, %v536
        %v538 = vpop.f32.mrb[0].mxu0
        %539 = vmatprep.mubr.f32.mxu0 0.0
        %540 = vmatmul.mubr.f32.gmra.mrb[0].mxu0 %v316
        %v541 = vpop.f32.mrb[0].mxu0
        %v542 = vadd.f32 %v348, %v541
        %v543 = vpop.f32.mrb[0].mxu0
        %544 = vmatprep.mubr.f32.mxu0 0.0
        %545 = vmatmul.mubr.f32.gmra.mrb[0].mxu0 %v317
        %v546 = vpop.f32.mrb[0].mxu0
        %v547 = vadd.f32 %v348, %v546
        %v548 = vpop.f32.mrb[0].mxu0
        %549 = vmatprep.mubr.f32.mxu0 0.0
        %550 = vmatmul.mubr.f32.gmra.mrb[0].mxu0 %v318
        %v551 = vpop.f32.mrb[0].mxu0
        %v552 = vadd.f32 %v348, %v551
        %v553 = vpop.f32.mrb[0].mxu0
        %554 = vmatprep.mubr.f32.mxu0 0.0
        %555 = vmatmul.mubr.f32.gmra.mrb[0].mxu0 %v319
        %v556 = vpop.f32.mrb[0].mxu0
        %v557 = vadd.f32 %v348, %v556
        %v558 = vpop.f32.mrb[0].mxu0
        %559 = vmatprep.mubr.f32.mxu0 0.0
        %560 = vmatmul.mubr.f32.gmra.mrb[0].mxu0 %v320
        %v561 = vpop.f32.mrb[0].mxu0
        %v562 = vadd.f32 %v348, %v561
        %v563 = vpop.f32.mrb[0].mxu0
        %564 = vmatprep.mubr.f32.mxu0 0.0
        %565 = vmatmul.mubr.f32.gmra.mrb[0].mxu0 %v321
        %v566 = vpop.f32.mrb[0].mxu0
        %v567 = vadd.f32 %v348, %v566
        %v568 = vpop.f32.mrb[0].mxu0
        %569 = vmatprep.mubr.f32.mxu0 0.0
        %570 = vmatmul.mubr.f32.gmra.mrb[0].mxu0 %v322
        %v571 = vpop.f32.mrb[0].mxu0
        %v572 = vadd.f32 %v348, %v571
        %v573 = vpop.f32.mrb[0].mxu0
        %574 = vmatprep.mubr.f32.mxu0 0.0
        %575 = vmatmul.mubr.f32.gmra.mrb[0].mxu0 %v323
        %v576 = vpop.f32.mrb[0].mxu0
        %v577 = vadd.f32 %v348, %v576
        %v578 = vpop.f32.mrb[0].mxu0
        %579 = vmatprep.mubr.f32.mxu0 0.0
        %580 = vmatmul.mubr.f32.gmra.mrb[0].mxu0 %v324
        %v581 = vpop.f32.mrb[0].mxu0
        %v582 = vadd.f32 %v348, %v581
        %v583 = vpop.f32.mrb[0].mxu0
        %584 = vmatprep.mubr.f32.mxu0 0.0
        %585 = vmatmul.mubr.f32.gmra.mrb[0].mxu0 %v325
        %v586 = vpop.f32.mrb[0].mxu0
        %v587 = vadd.f32 %v348, %v586
        %v588 = vpop.f32.mrb[0].mxu0
        %589 = vmatprep.mubr.f32.mxu0 0.0
        %590 = vmatmul.mubr.f32.gmra.mrb[0].mxu0 %v326
        %v591 = vpop.f32.mrb[0].mxu0
        %v592 = vadd.f32 %v348, %v591
        %v593 = vpop.f32.mrb[0].mxu0
        %594 = vdwg.mxu0
        %v595 = vxor.u32 %v417, 2147483648
        %v596 = vxor.u32 %v422, 2147483648
        %v597 = vxor.u32 %v427, 2147483648
        %v598 = vxor.u32 %v432, 2147483648
        %v599 = vxor.u32 %v437, 2147483648
        %v600 = vxor.u32 %v442, 2147483648
        %v601 = vxor.u32 %v447, 2147483648
        %v602 = vxor.u32 %v452, 2147483648
        %v603 = vxor.u32 %v457, 2147483648
        %v604 = vxor.u32 %v462, 2147483648
        %v605 = vxor.u32 %v467, 2147483648
        %v606 = vxor.u32 %v472, 2147483648
        %v607 = vxor.u32 %v477, 2147483648
        %v608 = vxor.u32 %v482, 2147483648
        %v609 = vxor.u32 %v487, 2147483648
        %v610 = vxor.u32 %v492, 2147483648
        %v611 = vxor.u32 %v497, 2147483648
        %v612 = vxor.u32 %v502, 2147483648
        %v613 = vxor.u32 %v507, 2147483648
        %v614 = vxor.u32 %v512, 2147483648
        %v615 = vxor.u32 %v517, 2147483648
        %v616 = vxor.u32 %v522, 2147483648
        %v617 = vxor.u32 %v527, 2147483648
        %v618 = vxor.u32 %v532, 2147483648
        %v619 = vxor.u32 %v537, 2147483648
        %v620 = vxor.u32 %v542, 2147483648
        %v621 = vxor.u32 %v547, 2147483648
        %v622 = vxor.u32 %v552, 2147483648
        %v623 = vxor.u32 %v557, 2147483648
        %v624 = vxor.u32 %v562, 2147483648
        %v625 = vxor.u32 %v567, 2147483648
        %v626 = vxor.u32 %v572, 2147483648
        %v627 = vxor.u32 %v577, 2147483648
        %v628 = vxor.u32 %v582, 2147483648
        %v629 = vxor.u32 %v587, 2147483648
        %v630 = vxor.u32 %v592, 2147483648
        %v631 = vmul.f32 %v595, 1.442695
        %v632 = vpow.pop %v631
        %v633 = vmul.f32 %v596, 1.442695
        %v634 = vpow.pop %v633
        %v635 = vmul.f32 %v597, 1.442695
        %v636 = vpow.pop %v635
        %v637 = vmul.f32 %v598, 1.442695
        %v638 = vpow.pop %v637
        %v639 = vmul.f32 %v599, 1.442695
        %v640 = vpow.pop %v639
        %v641 = vmul.f32 %v600, 1.442695
        %v642 = vpow.pop %v641
        %v643 = vmul.f32 %v601, 1.442695
        %v644 = vpow.pop %v643
        %v645 = vmul.f32 %v602, 1.442695
        %v646 = vpow.pop %v645
        %v647 = vmul.f32 %v603, 1.442695
        %v648 = vpow.pop %v647
        %v649 = vmul.f32 %v604, 1.442695
        %v650 = vpow.pop %v649
        %v651 = vmul.f32 %v605, 1.442695
        %v652 = vpow.pop %v651
        %v653 = vmul.f32 %v606, 1.442695
        %v654 = vpow.pop %v653
        %v655 = vmul.f32 %v607, 1.442695
        %v656 = vpow.pop %v655
        %v657 = vmul.f32 %v608, 1.442695
        %v658 = vpow.pop %v657
        %v659 = vmul.f32 %v609, 1.442695
        %v660 = vpow.pop %v659
        %v661 = vmul.f32 %v610, 1.442695
        %v662 = vpow.pop %v661
        %v663 = vmul.f32 %v611, 1.442695
        %v664 = vpow.pop %v663
        %v665 = vmul.f32 %v612, 1.442695
        %v666 = vpow.pop %v665
        %v667 = vmul.f32 %v613, 1.442695
        %v668 = vpow.pop %v667
        %v669 = vmul.f32 %v614, 1.442695
        %v670 = vpow.pop %v669
        %v671 = vmul.f32 %v615, 1.442695
        %v672 = vpow.pop %v671
        %v673 = vmul.f32 %v616, 1.442695
        %v674 = vpow.pop %v673
        %v675 = vmul.f32 %v617, 1.442695
        %v676 = vpow.pop %v675
        %v677 = vmul.f32 %v618, 1.442695
        %v678 = vpow.pop %v677
        %v679 = vmul.f32 %v619, 1.442695
        %v680 = vpow.pop %v679
        %v681 = vmul.f32 %v620, 1.442695
        %v682 = vpow.pop %v681
        %v683 = vmul.f32 %v621, 1.442695
        %v684 = vpow.pop %v683
        %v685 = vmul.f32 %v622, 1.442695
        %v686 = vpow.pop %v685
        %v687 = vmul.f32 %v623, 1.442695
        %v688 = vpow.pop %v687
        %v689 = vmul.f32 %v624, 1.442695
        %v690 = vpow.pop %v689
        %v691 = vmul.f32 %v625, 1.442695
        %v692 = vpow.pop %v691
        %v693 = vmul.f32 %v626, 1.442695
        %v694 = vpow.pop %v693
        %v695 = vmul.f32 %v627, 1.442695
        %v696 = vpow.pop %v695
        %v697 = vmul.f32 %v628, 1.442695
        %v698 = vpow.pop %v697
        %v699 = vmul.f32 %v629, 1.442695
        %v700 = vpow.pop %v699
        %v701 = vmul.f32 %v630, 1.442695
        %v702 = vpow.pop %v701
        %v703 = vadd.f32 %v632, 1.0
        %v704 = vadd.f32 %v634, 1.0
        %v705 = vadd.f32 %v636, 1.0
        %v706 = vadd.f32 %v638, 1.0
        %v707 = vadd.f32 %v640, 1.0
        %v708 = vadd.f32 %v642, 1.0
        %v709 = vadd.f32 %v644, 1.0
        %v710 = vadd.f32 %v646, 1.0
        %v711 = vadd.f32 %v648, 1.0
        %v712 = vadd.f32 %v650, 1.0
        %v713 = vadd.f32 %v652, 1.0
        %v714 = vadd.f32 %v654, 1.0
        %v715 = vadd.f32 %v656, 1.0
        %v716 = vadd.f32 %v658, 1.0
        %v717 = vadd.f32 %v660, 1.0
        %v718 = vadd.f32 %v662, 1.0
        %v719 = vadd.f32 %v664, 1.0
        %v720 = vadd.f32 %v666, 1.0
        %v721 = vadd.f32 %v668, 1.0
        %v722 = vadd.f32 %v670, 1.0
        %v723 = vadd.f32 %v672, 1.0
        %v724 = vadd.f32 %v674, 1.0
        %v725 = vadd.f32 %v676, 1.0
        %v726 = vadd.f32 %v678, 1.0
        %v727 = vadd.f32 %v680, 1.0
        %v728 = vadd.f32 %v682, 1.0
        %v729 = vadd.f32 %v684, 1.0
        %v730 = vadd.f32 %v686, 1.0
        %v731 = vadd.f32 %v688, 1.0
        %v732 = vadd.f32 %v690, 1.0
        %v733 = vadd.f32 %v692, 1.0
        %v734 = vadd.f32 %v694, 1.0
        %v735 = vadd.f32 %v696, 1.0
        %v736 = vadd.f32 %v698, 1.0
        %v737 = vadd.f32 %v700, 1.0
        %v738 = vadd.f32 %v702, 1.0
        %v739 = vrcp.pop %v703
        %v740 = vmul.f32 1.0, %v739
        %v741 = vrcp.pop %v704
        %v742 = vmul.f32 1.0, %v741
        %v743 = vrcp.pop %v705
        %v744 = vmul.f32 1.0, %v743
        %v745 = vrcp.pop %v706
        %v746 = vmul.f32 1.0, %v745
        %v747 = vrcp.pop %v707
        %v748 = vmul.f32 1.0, %v747
        %v749 = vrcp.pop %v708
        %v750 = vmul.f32 1.0, %v749
        %v751 = vrcp.pop %v709
        %v752 = vmul.f32 1.0, %v751
        %v753 = vrcp.pop %v710
        %v754 = vmul.f32 1.0, %v753
        %v755 = vrcp.pop %v711
        %v756 = vmul.f32 1.0, %v755
        %v757 = vrcp.pop %v712
        %v758 = vmul.f32 1.0, %v757
        %v759 = vrcp.pop %v713
        %v760 = vmul.f32 1.0, %v759
        %v761 = vrcp.pop %v714
        %v762 = vmul.f32 1.0, %v761
        %v763 = vrcp.pop %v715
        %v764 = vmul.f32 1.0, %v763
        %v765 = vrcp.pop %v716
        %v766 = vmul.f32 1.0, %v765
        %v767 = vrcp.pop %v717
        %v768 = vmul.f32 1.0, %v767
        %v769 = vrcp.pop %v718
        %v770 = vmul.f32 1.0, %v769
        %v771 = vrcp.pop %v719
        %v772 = vmul.f32 1.0, %v771
        %v773 = vrcp.pop %v720
        %v774 = vmul.f32 1.0, %v773
        %v775 = vrcp.pop %v721
        %v776 = vmul.f32 1.0, %v775
        %v777 = vrcp.pop %v722
        %v778 = vmul.f32 1.0, %v777
        %v779 = vrcp.pop %v723
        %v780 = vmul.f32 1.0, %v779
        %v781 = vrcp.pop %v724
        %v782 = vmul.f32 1.0, %v781
        %v783 = vrcp.pop %v725
        %v784 = vmul.f32 1.0, %v783
        %v785 = vrcp.pop %v726
        %v786 = vmul.f32 1.0, %v785
        %v787 = vrcp.pop %v727
        %v788 = vmul.f32 1.0, %v787
        %v789 = vrcp.pop %v728
        %v790 = vmul.f32 1.0, %v789
        %v791 = vrcp.pop %v729
        %v792 = vmul.f32 1.0, %v791
        %v793 = vrcp.pop %v730
        %v794 = vmul.f32 1.0, %v793
        %v795 = vrcp.pop %v731
        %v796 = vmul.f32 1.0, %v795
        %v797 = vrcp.pop %v732
        %v798 = vmul.f32 1.0, %v797
        %v799 = vrcp.pop %v733
        %v800 = vmul.f32 1.0, %v799
        %v801 = vrcp.pop %v734
        %v802 = vmul.f32 1.0, %v801
        %v803 = vrcp.pop %v735
        %v804 = vmul.f32 1.0, %v803
        %v805 = vrcp.pop %v736
        %v806 = vmul.f32 1.0, %v805
        %v807 = vrcp.pop %v737
        %v808 = vmul.f32 1.0, %v807
        %v809 = vrcp.pop %v738
        %v810 = vmul.f32 1.0, %v809
        %v811 = vmul.f32 %v417, %v740
        %v812 = vmul.f32 %v422, %v742
        %v813 = vmul.f32 %v427, %v744
        %v814 = vmul.f32 %v432, %v746
        %v815 = vmul.f32 %v437, %v748
        %v816 = vmul.f32 %v442, %v750
        %v817 = vmul.f32 %v447, %v752
        %v818 = vmul.f32 %v452, %v754
        %v819 = vmul.f32 %v457, %v756
        %v820 = vmul.f32 %v462, %v758
        %v821 = vmul.f32 %v467, %v760
        %v822 = vmul.f32 %v472, %v762
        %v823 = vmul.f32 %v477, %v764
        %v824 = vmul.f32 %v482, %v766
        %v825 = vmul.f32 %v487, %v768
        %v826 = vmul.f32 %v492, %v770
        %v827 = vmul.f32 %v497, %v772
        %v828 = vmul.f32 %v502, %v774
        %v829 = vmul.f32 %v507, %v776
        %v830 = vmul.f32 %v512, %v778
        %v831 = vmul.f32 %v517, %v780
        %v832 = vmul.f32 %v522, %v782
        %v833 = vmul.f32 %v527, %v784
        %v834 = vmul.f32 %v532, %v786
        %v835 = vmul.f32 %v537, %v788
        %v836 = vmul.f32 %v542, %v790
        %v837 = vmul.f32 %v547, %v792
        %v838 = vmul.f32 %v552, %v794
        %v839 = vmul.f32 %v557, %v796
        %v840 = vmul.f32 %v562, %v798
        %v841 = vmul.f32 %v567, %v800
        %v842 = vmul.f32 %v572, %v802
        %v843 = vmul.f32 %v577, %v804
        %v844 = vmul.f32 %v582, %v806
        %v845 = vmul.f32 %v587, %v808
        %v846 = vmul.f32 %v592, %v810
        %847 = vst [vmem:[#allocation2 + $0x1] sm:$0xff] %v811
        %848 = vst [vmem:[#allocation2 + $0x9] sm:$0xff] %v812
        %849 = vst [vmem:[#allocation2 + $0x19] sm:$0xff] %v813
        %850 = vst [vmem:[#allocation2 + $0x21] sm:$0xff] %v814
        %851 = vst [vmem:[#allocation2 + $0x31] sm:$0xff] %v815
        %852 = vst [vmem:[#allocation2 + $0x39] sm:$0xff] %v816
        %853 = vst [vmem:[#allocation2 + $0x49] sm:$0xff] %v817
        %854 = vst [vmem:[#allocation2 + $0x51] sm:$0xff] %v818
        %855 = vst [vmem:[#allocation2 + $0x61] sm:$0xff] %v819
        %856 = vst [vmem:[#allocation2 + $0x69] sm:$0xff] %v820
        %857 = vst [vmem:[#allocation2 + $0x79] sm:$0xff] %v821
        %858 = vst [vmem:[#allocation2 + $0x81] sm:$0xff] %v822
        %859 = vst [vmem:[#allocation2 + $0x91] sm:$0xff] %v823
        %860 = vst [vmem:[#allocation2 + $0x99] sm:$0xff] %v824
        %861 = vst [vmem:[#allocation2 + $0xa9] sm:$0xff] %v825
        %862 = vst [vmem:[#allocation2 + $0xb1] sm:$0xff] %v826
        %863 = vst [vmem:[#allocation2 + $0xc1] sm:$0xff] %v827
        %864 = vst [vmem:[#allocation2 + $0xc9] sm:$0xff] %v828
        %865 = vst [vmem:[#allocation2 + $0xd9] sm:$0xff] %v829
        %866 = vst [vmem:[#allocation2 + $0xe1] sm:$0xff] %v830
        %867 = vst [vmem:[#allocation2 + $0xf1] sm:$0xff] %v831
        %868 = vst [vmem:[#allocation2 + $0xf9] sm:$0xff] %v832
        %869 = vst [vmem:[#allocation2 + $0x109] sm:$0xff] %v833
        %870 = vst [vmem:[#allocation2 + $0x111] sm:$0xff] %v834
        %871 = vst [vmem:[#allocation2 + $0x121] sm:$0xff] %v835
        %872 = vst [vmem:[#allocation2 + $0x129] sm:$0xff] %v836
        %873 = vst [vmem:[#allocation2 + $0x139] sm:$0xff] %v837
        %874 = vst [vmem:[#allocation2 + $0x141] sm:$0xff] %v838
        %875 = vst [vmem:[#allocation2 + $0x151] sm:$0xff] %v839
        %876 = vst [vmem:[#allocation2 + $0x159] sm:$0xff] %v840
        %877 = vst [vmem:[#allocation2 + $0x169] sm:$0xff] %v841
        %878 = vst [vmem:[#allocation2 + $0x171] sm:$0xff] %v842
        %879 = vst [vmem:[#allocation2 + $0x181] sm:$0xff] %v843
        %880 = vst [vmem:[#allocation2 + $0x189] sm:$0xff] %v844
        %881 = vst [vmem:[#allocation2 + $0x199] sm:$0xff] %v845
        %882 = vst [vmem:[#allocation2 + $0x1a1] sm:$0xff] %v846
        %883 = vst [vmem:[#allocation2] sm:$0x1] 0.0
        %884 = vst [vmem:[#allocation2 + $0x18] sm:$0x1] 0.0
        %885 = vst [vmem:[#allocation2 + $0x30] sm:$0x1] 0.0
        %886 = vst [vmem:[#allocation2 + $0x48] sm:$0x1] 0.0
        %887 = vst [vmem:[#allocation2 + $0x60] sm:$0x1] 0.0
        %888 = vst [vmem:[#allocation2 + $0x78] sm:$0x1] 0.0
        %889 = vst [vmem:[#allocation2 + $0x90] sm:$0x1] 0.0
        %890 = vst [vmem:[#allocation2 + $0xa8] sm:$0x1] 0.0
        %891 = vst [vmem:[#allocation2 + $0xc0] sm:$0x1] 0.0
        %892 = vst [vmem:[#allocation2 + $0xd8] sm:$0x1] 0.0
        %893 = vst [vmem:[#allocation2 + $0xf0] sm:$0x1] 0.0
        %894 = vst [vmem:[#allocation2 + $0x108] sm:$0x1] 0.0
        %895 = vst [vmem:[#allocation2 + $0x120] sm:$0x1] 0.0
        %896 = vst [vmem:[#allocation2 + $0x138] sm:$0x1] 0.0
        %897 = vst [vmem:[#allocation2 + $0x150] sm:$0x1] 0.0
        %898 = vst [vmem:[#allocation2 + $0x168] sm:$0x1] 0.0
        %899 = vst [vmem:[#allocation2 + $0x180] sm:$0x1] 0.0
        %900 = vst [vmem:[#allocation2 + $0x198] sm:$0x1] 0.0
        %901 = vst [vmem:[#allocation2 + $0x11] sm:$0x1] 0.0
        %902 = vst [vmem:[#allocation2 + $0x29] sm:$0x1] 0.0
        %903 = vst [vmem:[#allocation2 + $0x41] sm:$0x1] 0.0
        %904 = vst [vmem:[#allocation2 + $0x59] sm:$0x1] 0.0
        %905 = vst [vmem:[#allocation2 + $0x71] sm:$0x1] 0.0
        %906 = vst [vmem:[#allocation2 + $0x89] sm:$0x1] 0.0
        %907 = vst [vmem:[#allocation2 + $0xa1] sm:$0x1] 0.0
        %908 = vst [vmem:[#allocation2 + $0xb9] sm:$0x1] 0.0
        %909 = vst [vmem:[#allocation2 + $0xd1] sm:$0x1] 0.0
        %910 = vst [vmem:[#allocation2 + $0xe9] sm:$0x1] 0.0
        %911 = vst [vmem:[#allocation2 + $0x101] sm:$0x1] 0.0
        %912 = vst [vmem:[#allocation2 + $0x119] sm:$0x1] 0.0
        %913 = vst [vmem:[#allocation2 + $0x131] sm:$0x1] 0.0
        %914 = vst [vmem:[#allocation2 + $0x149] sm:$0x1] 0.0
        %915 = vst [vmem:[#allocation2 + $0x161] sm:$0x1] 0.0
        %916 = vst [vmem:[#allocation2 + $0x179] sm:$0x1] 0.0
        %917 = vst [vmem:[#allocation2 + $0x191] sm:$0x1] 0.0
        %918 = vst [vmem:[#allocation2 + $0x1a9] sm:$0x1] 0.0
        %p919 = scmp.eq.s32.totalorder %s28, 0
        // Predicated region
        $region53: #{tpu_custom_call.1} parent=39 // pred_check
          %p920 = pneg %p919
        $region54: #{tpu_custom_call.1} parent=39 // pred_check_branch
          %922 = sbr.rel (%p920) target = $region56
        $region55: #{tpu_custom_call.1} parent=39 // pred_region
          %923 = vst [vmem:[#allocation2] sm:$0xff] 0.0
          %924 = vst [vmem:[#allocation2 + $0x8] sm:$0xff] 0.0
          %925 = vst [vmem:[#allocation2 + $0x10] sm:$0x3] 0.0
          %s926 = scalar_lea.vmem [#allocation2], 408
          %927 = vst [vmem:[%s926] sm:$0xff] 0.0
          %928 = vst [vmem:[%s926 + $0x8] sm:$0xff] 0.0
          %929 = vst [vmem:[%s926 + $0x10] sm:$0x3] 0.0
        $region56: #{tpu_custom_call.1} parent=39 // pred_fallthru
          _
        %v930 = vld [vmem:[%s4] sm:$0x1]
        %v932 = vlaneseq
        %v933 = vshrl.u32 %v932, 7
        %v934 = vsub.s32 0, %v933
        %v935 = vrot.slane %v930, %v934
        %v937 = vld [vmem:[#allocation2] sm:$0xff]
        %v938 = vld [vmem:[#allocation2 + $0x8] sm:$0xff]
        %v939 = vld [vmem:[#allocation2 + $0x18] sm:$0xff]
        %v940 = vld [vmem:[#allocation2 + $0x20] sm:$0xff]
        %v941 = vld [vmem:[#allocation2 + $0x30] sm:$0xff]
        %v942 = vld [vmem:[#allocation2 + $0x38] sm:$0xff]
        %v943 = vld [vmem:[#allocation2 + $0x48] sm:$0xff]
        %v944 = vld [vmem:[#allocation2 + $0x50] sm:$0xff]
        %v945 = vld [vmem:[#allocation2 + $0x60] sm:$0xff]
        %v946 = vld [vmem:[#allocation2 + $0x68] sm:$0xff]
        %v947 = vld [vmem:[#allocation2 + $0x78] sm:$0xff]
        %v948 = vld [vmem:[#allocation2 + $0x80] sm:$0xff]
        %v949 = vld [vmem:[#allocation2 + $0x90] sm:$0xff]
        %v950 = vld [vmem:[#allocation2 + $0x98] sm:$0xff]
        %v951 = vld [vmem:[#allocation2 + $0xa8] sm:$0xff]
        %v952 = vld [vmem:[#allocation2 + $0xb0] sm:$0xff]
        %v953 = vld [vmem:[#allocation2 + $0xc0] sm:$0xff]
        %v954 = vld [vmem:[#allocation2 + $0xc8] sm:$0xff]
        %v955 = vld [vmem:[#allocation2 + $0xd8] sm:$0xff]
        %v956 = vld [vmem:[#allocation2 + $0xe0] sm:$0xff]
        %v957 = vld [vmem:[#allocation2 + $0xf0] sm:$0xff]
        %v958 = vld [vmem:[#allocation2 + $0xf8] sm:$0xff]
        %v959 = vld [vmem:[#allocation2 + $0x108] sm:$0xff]
        %v960 = vld [vmem:[#allocation2 + $0x110] sm:$0xff]
        %v961 = vld [vmem:[#allocation2 + $0x120] sm:$0xff]
        %v962 = vld [vmem:[#allocation2 + $0x128] sm:$0xff]
        %v963 = vld [vmem:[#allocation2 + $0x138] sm:$0xff]
        %v964 = vld [vmem:[#allocation2 + $0x140] sm:$0xff]
        %v965 = vld [vmem:[#allocation2 + $0x150] sm:$0xff]
        %v966 = vld [vmem:[#allocation2 + $0x158] sm:$0xff]
        %v967 = vld [vmem:[#allocation2 + $0x168] sm:$0xff]
        %v968 = vld [vmem:[#allocation2 + $0x170] sm:$0xff]
        %v969 = vld [vmem:[#allocation8] sm:$0xff]
        %v970 = vld [vmem:[#allocation8 + $0x8] sm:$0xff]
        %v971 = vld [vmem:[#allocation8 + $0x10] sm:$0xff]
        %v972 = vld [vmem:[#allocation8 + $0x18] sm:$0xff]
        %v973 = vld [vmem:[#allocation8 + $0x20] sm:$0xff]
        %v974 = vld [vmem:[#allocation8 + $0x28] sm:$0xff]
        %v975 = vld [vmem:[#allocation8 + $0x30] sm:$0xff]
        %v976 = vld [vmem:[#allocation8 + $0x38] sm:$0xff]
        %v977 = vld [vmem:[#allocation8 + $0x40] sm:$0xff]
        %v978 = vld [vmem:[#allocation8 + $0x48] sm:$0xff]
        %v979 = vld [vmem:[#allocation8 + $0x50] sm:$0xff]
        %v980 = vld [vmem:[#allocation8 + $0x58] sm:$0xff]
        %v981 = vld [vmem:[#allocation8 + $0x60] sm:$0xff]
        %v982 = vld [vmem:[#allocation8 + $0x68] sm:$0xff]
        %v983 = vld [vmem:[#allocation8 + $0x70] sm:$0xff]
        %v984 = vld [vmem:[#allocation8 + $0x78] sm:$0xff]
        %985 = vmatprep.subr.mxu0 0.0
        %986 = vmatpush1.msra.mxu0 %v969
        %987 = vmatprep.subr.mxu0 0.0
        %988 = vmatpush1.msra.mxu0 %v970
        %989 = vmatprep.subr.mxu0 0.0
        %990 = vmatpush1.msra.mxu0 %v971
        %991 = vmatprep.subr.mxu0 0.0
        %992 = vmatpush1.msra.mxu0 %v972
        %993 = vmatprep.subr.mxu0 0.0
        %994 = vmatpush1.msra.mxu0 %v973
        %995 = vmatprep.subr.mxu0 0.0
        %996 = vmatpush1.msra.mxu0 %v974
        %997 = vmatprep.subr.mxu0 0.0
        %998 = vmatpush1.msra.mxu0 %v975
        %999 = vmatprep.subr.mxu0 0.0
        %1000 = vmatpush1.msra.mxu0 %v976
        %1001 = vmatprep.subr.mxu0 0.0
        %1002 = vmatpush1.msra.mxu0 %v977
        %1003 = vmatprep.subr.mxu0 0.0
        %1004 = vmatpush1.msra.mxu0 %v978
        %1005 = vmatprep.subr.mxu0 0.0
        %1006 = vmatpush1.msra.mxu0 %v979
        %1007 = vmatprep.subr.mxu0 0.0
        %1008 = vmatpush1.msra.mxu0 %v980
        %1009 = vmatprep.subr.mxu0 0.0
        %1010 = vmatpush1.msra.mxu0 %v981
        %1011 = vmatprep.subr.mxu0 0.0
        %1012 = vmatpush1.msra.mxu0 %v982
        %1013 = vmatprep.subr.mxu0 0.0
        %1014 = vmatpush1.msra.mxu0 %v983
        %1015 = vmatprep.subr.mxu0 0.0
        %1016 = vmatpush1.msra.mxu0 %v984
        %1017 = vmatprep.subr.mxu0 0.0
        %1018 = vmatpush1.msra.mxu0 0.0
        %1019 = vmatprep.subr.mxu0 0.0
        %1020 = vmatpush1.msra.mxu0 0.0
        %1021 = vmatprep.subr.mxu0 0.0
        %1022 = vmatpush1.msra.mxu0 0.0
        %1023 = vmatprep.subr.mxu0 0.0
        %1024 = vmatpush1.msra.mxu0 0.0
        %1025 = vmatprep.subr.mxu0 0.0
        %1026 = vmatpush1.msra.mxu0 0.0
        %1027 = vmatprep.subr.mxu0 0.0
        %1028 = vmatpush1.msra.mxu0 0.0
        %1029 = vmatprep.subr.mxu0 0.0
        %1030 = vmatpush1.msra.mxu0 0.0
        %1031 = vmatprep.subr.mxu0 0.0
        %1032 = vmatpush1.msra.mxu0 0.0
        %1033 = vmatprep.subr.mxu0 0.0
        %1034 = vmatpush1.msra.mxu0 0.0
        %1035 = vmatprep.subr.mxu0 0.0
        %1036 = vmatpush1.msra.mxu0 0.0
        %1037 = vmatprep.subr.mxu0 0.0
        %1038 = vmatpush1.msra.mxu0 0.0
        %1039 = vmatprep.subr.mxu0 0.0
        %1040 = vmatpush1.msra.mxu0 0.0
        %1041 = vmatprep.subr.mxu0 0.0
        %1042 = vmatpush1.msra.mxu0 0.0
        %1043 = vmatprep.subr.mxu0 0.0
        %1044 = vmatpush1.msra.mxu0 0.0
        %1045 = vmatprep.subr.mxu0 0.0
        %1046 = vmatpush1.msra.mxu0 0.0
        %1047 = vmatprep.subr.mxu0 0.0
        %1048 = vmatpush1.msra.mxu0 0.0
        %1049 = vmatprep.mubr.f32.mxu0 0.0
        %1050 = vmatmul.mubr.f32.gmra.mrb[0].mxu0 %v937
        %v1051 = vpop.f32.mrb[0].mxu0
        %v1052 = vadd.f32 0.0, %v1051
        %v1053 = vpop.f32.mrb[0].mxu0
        %1054 = vmatprep.mubr.f32.mxu0 0.0
        %1055 = vmatmul.mubr.f32.gmra.mrb[0].mxu0 %v938
        %v1056 = vpop.f32.mrb[0].mxu0
        %v1057 = vadd.f32 0.0, %v1056
        %v1058 = vpop.f32.mrb[0].mxu0
        %1059 = vmatprep.mubr.f32.mxu0 0.0
        %1060 = vmatmul.mubr.f32.gmra.mrb[0].mxu0 %v939
        %v1061 = vpop.f32.mrb[0].mxu0
        %v1062 = vadd.f32 0.0, %v1061
        %v1063 = vpop.f32.mrb[0].mxu0
        %1064 = vmatprep.mubr.f32.mxu0 0.0
        %1065 = vmatmul.mubr.f32.gmra.mrb[0].mxu0 %v940
        %v1066 = vpop.f32.mrb[0].mxu0
        %v1067 = vadd.f32 0.0, %v1066
        %v1068 = vpop.f32.mrb[0].mxu0
        %1069 = vmatprep.mubr.f32.mxu0 0.0
        %1070 = vmatmul.mubr.f32.gmra.mrb[0].mxu0 %v941
        %v1071 = vpop.f32.mrb[0].mxu0
        %v1072 = vadd.f32 0.0, %v1071
        %v1073 = vpop.f32.mrb[0].mxu0
        %1074 = vmatprep.mubr.f32.mxu0 0.0
        %1075 = vmatmul.mubr.f32.gmra.mrb[0].mxu0 %v942
        %v1076 = vpop.f32.mrb[0].mxu0
        %v1077 = vadd.f32 0.0, %v1076
        %v1078 = vpop.f32.mrb[0].mxu0
        %1079 = vmatprep.mubr.f32.mxu0 0.0
        %1080 = vmatmul.mubr.f32.gmra.mrb[0].mxu0 %v943
        %v1081 = vpop.f32.mrb[0].mxu0
        %v1082 = vadd.f32 0.0, %v1081
        %v1083 = vpop.f32.mrb[0].mxu0
        %1084 = vmatprep.mubr.f32.mxu0 0.0
        %1085 = vmatmul.mubr.f32.gmra.mrb[0].mxu0 %v944
        %v1086 = vpop.f32.mrb[0].mxu0
        %v1087 = vadd.f32 0.0, %v1086
        %v1088 = vpop.f32.mrb[0].mxu0
        %1089 = vmatprep.mubr.f32.mxu0 0.0
        %1090 = vmatmul.mubr.f32.gmra.mrb[0].mxu0 %v945
        %v1091 = vpop.f32.mrb[0].mxu0
        %v1092 = vadd.f32 0.0, %v1091
        %v1093 = vpop.f32.mrb[0].mxu0
        %1094 = vmatprep.mubr.f32.mxu0 0.0
        %1095 = vmatmul.mubr.f32.gmra.mrb[0].mxu0 %v946
        %v1096 = vpop.f32.mrb[0].mxu0
        %v1097 = vadd.f32 0.0, %v1096
        %v1098 = vpop.f32.mrb[0].mxu0
        %1099 = vmatprep.mubr.f32.mxu0 0.0
        %1100 = vmatmul.mubr.f32.gmra.mrb[0].mxu0 %v947
        %v1101 = vpop.f32.mrb[0].mxu0
        %v1102 = vadd.f32 0.0, %v1101
        %v1103 = vpop.f32.mrb[0].mxu0
        %1104 = vmatprep.mubr.f32.mxu0 0.0
        %1105 = vmatmul.mubr.f32.gmra.mrb[0].mxu0 %v948
        %v1106 = vpop.f32.mrb[0].mxu0
        %v1107 = vadd.f32 0.0, %v1106
        %v1108 = vpop.f32.mrb[0].mxu0
        %1109 = vmatprep.mubr.f32.mxu0 0.0
        %1110 = vmatmul.mubr.f32.gmra.mrb[0].mxu0 %v949
        %v1111 = vpop.f32.mrb[0].mxu0
        %v1112 = vadd.f32 0.0, %v1111
        %v1113 = vpop.f32.mrb[0].mxu0
        %1114 = vmatprep.mubr.f32.mxu0 0.0
        %1115 = vmatmul.mubr.f32.gmra.mrb[0].mxu0 %v950
        %v1116 = vpop.f32.mrb[0].mxu0
        %v1117 = vadd.f32 0.0, %v1116
        %v1118 = vpop.f32.mrb[0].mxu0
        %1119 = vmatprep.mubr.f32.mxu0 0.0
        %1120 = vmatmul.mubr.f32.gmra.mrb[0].mxu0 %v951
        %v1121 = vpop.f32.mrb[0].mxu0
        %v1122 = vadd.f32 0.0, %v1121
        %v1123 = vpop.f32.mrb[0].mxu0
        %1124 = vmatprep.mubr.f32.mxu0 0.0
        %1125 = vmatmul.mubr.f32.gmra.mrb[0].mxu0 %v952
        %v1126 = vpop.f32.mrb[0].mxu0
        %v1127 = vadd.f32 0.0, %v1126
        %v1128 = vpop.f32.mrb[0].mxu0
        %1129 = vmatprep.mubr.f32.mxu0 0.0
        %1130 = vmatmul.mubr.f32.gmra.mrb[0].mxu0 %v953
        %v1131 = vpop.f32.mrb[0].mxu0
        %v1132 = vadd.f32 0.0, %v1131
        %v1133 = vpop.f32.mrb[0].mxu0
        %1134 = vmatprep.mubr.f32.mxu0 0.0
        %1135 = vmatmul.mubr.f32.gmra.mrb[0].mxu0 %v954
        %v1136 = vpop.f32.mrb[0].mxu0
        %v1137 = vadd.f32 0.0, %v1136
        %v1138 = vpop.f32.mrb[0].mxu0
        %1139 = vmatprep.mubr.f32.mxu0 0.0
        %1140 = vmatmul.mubr.f32.gmra.mrb[0].mxu0 %v955
        %v1141 = vpop.f32.mrb[0].mxu0
        %v1142 = vadd.f32 0.0, %v1141
        %v1143 = vpop.f32.mrb[0].mxu0
        %1144 = vmatprep.mubr.f32.mxu0 0.0
        %1145 = vmatmul.mubr.f32.gmra.mrb[0].mxu0 %v956
        %v1146 = vpop.f32.mrb[0].mxu0
        %v1147 = vadd.f32 0.0, %v1146
        %v1148 = vpop.f32.mrb[0].mxu0
        %1149 = vmatprep.mubr.f32.mxu0 0.0
        %1150 = vmatmul.mubr.f32.gmra.mrb[0].mxu0 %v957
        %v1151 = vpop.f32.mrb[0].mxu0
        %v1152 = vadd.f32 0.0, %v1151
        %v1153 = vpop.f32.mrb[0].mxu0
        %1154 = vmatprep.mubr.f32.mxu0 0.0
        %1155 = vmatmul.mubr.f32.gmra.mrb[0].mxu0 %v958
        %v1156 = vpop.f32.mrb[0].mxu0
        %v1157 = vadd.f32 0.0, %v1156
        %v1158 = vpop.f32.mrb[0].mxu0
        %1159 = vmatprep.mubr.f32.mxu0 0.0
        %1160 = vmatmul.mubr.f32.gmra.mrb[0].mxu0 %v959
        %v1161 = vpop.f32.mrb[0].mxu0
        %v1162 = vadd.f32 0.0, %v1161
        %v1163 = vpop.f32.mrb[0].mxu0
        %1164 = vmatprep.mubr.f32.mxu0 0.0
        %1165 = vmatmul.mubr.f32.gmra.mrb[0].mxu0 %v960
        %v1166 = vpop.f32.mrb[0].mxu0
        %v1167 = vadd.f32 0.0, %v1166
        %v1168 = vpop.f32.mrb[0].mxu0
        %1169 = vmatprep.mubr.f32.mxu0 0.0
        %1170 = vmatmul.mubr.f32.gmra.mrb[0].mxu0 %v961
        %v1171 = vpop.f32.mrb[0].mxu0
        %v1172 = vadd.f32 0.0, %v1171
        %v1173 = vpop.f32.mrb[0].mxu0
        %1174 = vmatprep.mubr.f32.mxu0 0.0
        %1175 = vmatmul.mubr.f32.gmra.mrb[0].mxu0 %v962
        %v1176 = vpop.f32.mrb[0].mxu0
        %v1177 = vadd.f32 0.0, %v1176
        %v1178 = vpop.f32.mrb[0].mxu0
        %1179 = vmatprep.mubr.f32.mxu0 0.0
        %1180 = vmatmul.mubr.f32.gmra.mrb[0].mxu0 %v963
        %v1181 = vpop.f32.mrb[0].mxu0
        %v1182 = vadd.f32 0.0, %v1181
        %v1183 = vpop.f32.mrb[0].mxu0
        %1184 = vmatprep.mubr.f32.mxu0 0.0
        %1185 = vmatmul.mubr.f32.gmra.mrb[0].mxu0 %v964
        %v1186 = vpop.f32.mrb[0].mxu0
        %v1187 = vadd.f32 0.0, %v1186
        %v1188 = vpop.f32.mrb[0].mxu0
        %1189 = vmatprep.mubr.f32.mxu0 0.0
        %1190 = vmatmul.mubr.f32.gmra.mrb[0].mxu0 %v965
        %v1191 = vpop.f32.mrb[0].mxu0
        %v1192 = vadd.f32 0.0, %v1191
        %v1193 = vpop.f32.mrb[0].mxu0
        %1194 = vmatprep.mubr.f32.mxu0 0.0
        %1195 = vmatmul.mubr.f32.gmra.mrb[0].mxu0 %v966
        %v1196 = vpop.f32.mrb[0].mxu0
        %v1197 = vadd.f32 0.0, %v1196
        %v1198 = vpop.f32.mrb[0].mxu0
        %1199 = vmatprep.mubr.f32.mxu0 0.0
        %1200 = vmatmul.mubr.f32.gmra.mrb[0].mxu0 %v967
        %v1201 = vpop.f32.mrb[0].mxu0
        %v1202 = vadd.f32 0.0, %v1201
        %v1203 = vpop.f32.mrb[0].mxu0
        %1204 = vmatprep.mubr.f32.mxu0 0.0
        %1205 = vmatmul.mubr.f32.gmra.mrb[0].mxu0 %v968
        %v1206 = vpop.f32.mrb[0].mxu0
        %v1207 = vadd.f32 0.0, %v1206
        %v1208 = vpop.f32.mrb[0].mxu0
        %1209 = vdwg.mxu0
        %v1210 = vadd.f32 %v935, %v1052
        %v1211 = vadd.f32 %v935, %v1057
        %v1212 = vadd.f32 %v935, %v1062
        %v1213 = vadd.f32 %v935, %v1067
        %v1214 = vadd.f32 %v935, %v1072
        %v1215 = vadd.f32 %v935, %v1077
        %v1216 = vadd.f32 %v935, %v1082
        %v1217 = vadd.f32 %v935, %v1087
        %v1218 = vadd.f32 %v935, %v1092
        %v1219 = vadd.f32 %v935, %v1097
        %v1220 = vadd.f32 %v935, %v1102
        %v1221 = vadd.f32 %v935, %v1107
        %v1222 = vadd.f32 %v935, %v1112
        %v1223 = vadd.f32 %v935, %v1117
        %v1224 = vadd.f32 %v935, %v1122
        %v1225 = vadd.f32 %v935, %v1127
        %v1226 = vadd.f32 %v935, %v1132
        %v1227 = vadd.f32 %v935, %v1137
        %v1228 = vadd.f32 %v935, %v1142
        %v1229 = vadd.f32 %v935, %v1147
        %v1230 = vadd.f32 %v935, %v1152
        %v1231 = vadd.f32 %v935, %v1157
        %v1232 = vadd.f32 %v935, %v1162
        %v1233 = vadd.f32 %v935, %v1167
        %v1234 = vadd.f32 %v935, %v1172
        %v1235 = vadd.f32 %v935, %v1177
        %v1236 = vadd.f32 %v935, %v1182
        %v1237 = vadd.f32 %v935, %v1187
        %v1238 = vadd.f32 %v935, %v1192
        %v1239 = vadd.f32 %v935, %v1197
        %v1240 = vadd.f32 %v935, %v1202
        %v1241 = vadd.f32 %v935, %v1207
        %v1242 = vld [vmem:[#allocation2 + $0x1] sm:$0xff]
        %v1243 = vld [vmem:[#allocation2 + $0x9] sm:$0xff]
        %v1244 = vld [vmem:[#allocation2 + $0x19] sm:$0xff]
        %v1245 = vld [vmem:[#allocation2 + $0x21] sm:$0xff]
        %v1246 = vld [vmem:[#allocation2 + $0x31] sm:$0xff]
        %v1247 = vld [vmem:[#allocation2 + $0x39] sm:$0xff]
        %v1248 = vld [vmem:[#allocation2 + $0x49] sm:$0xff]
        %v1249 = vld [vmem:[#allocation2 + $0x51] sm:$0xff]
        %v1250 = vld [vmem:[#allocation2 + $0x61] sm:$0xff]
        %v1251 = vld [vmem:[#allocation2 + $0x69] sm:$0xff]
        %v1252 = vld [vmem:[#allocation2 + $0x79] sm:$0xff]
        %v1253 = vld [vmem:[#allocation2 + $0x81] sm:$0xff]
        %v1254 = vld [vmem:[#allocation2 + $0x91] sm:$0xff]
        %v1255 = vld [vmem:[#allocation2 + $0x99] sm:$0xff]
        %v1256 = vld [vmem:[#allocation2 + $0xa9] sm:$0xff]
        %v1257 = vld [vmem:[#allocation2 + $0xb1] sm:$0xff]
        %v1258 = vld [vmem:[#allocation2 + $0xc1] sm:$0xff]
        %v1259 = vld [vmem:[#allocation2 + $0xc9] sm:$0xff]
        %v1260 = vld [vmem:[#allocation2 + $0xd9] sm:$0xff]
        %v1261 = vld [vmem:[#allocation2 + $0xe1] sm:$0xff]
        %v1262 = vld [vmem:[#allocation2 + $0xf1] sm:$0xff]
        %v1263 = vld [vmem:[#allocation2 + $0xf9] sm:$0xff]
        %v1264 = vld [vmem:[#allocation2 + $0x109] sm:$0xff]
        %v1265 = vld [vmem:[#allocation2 + $0x111] sm:$0xff]
        %v1266 = vld [vmem:[#allocation2 + $0x121] sm:$0xff]
        %v1267 = vld [vmem:[#allocation2 + $0x129] sm:$0xff]
        %v1268 = vld [vmem:[#allocation2 + $0x139] sm:$0xff]
        %v1269 = vld [vmem:[#allocation2 + $0x141] sm:$0xff]
        %v1270 = vld [vmem:[#allocation2 + $0x151] sm:$0xff]
        %v1271 = vld [vmem:[#allocation2 + $0x159] sm:$0xff]
        %v1272 = vld [vmem:[#allocation2 + $0x169] sm:$0xff]
        %v1273 = vld [vmem:[#allocation2 + $0x171] sm:$0xff]
        %s1274 = scalar_lea.vmem [#allocation8], 128
        %v1275 = vld [vmem:[%s1274] sm:$0xff]
        %v1276 = vld [vmem:[%s1274 + $0x8] sm:$0xff]
        %v1277 = vld [vmem:[%s1274 + $0x10] sm:$0xff]
        %v1278 = vld [vmem:[%s1274 + $0x18] sm:$0xff]
        %v1279 = vld [vmem:[%s1274 + $0x20] sm:$0xff]
        %v1280 = vld [vmem:[%s1274 + $0x28] sm:$0xff]
        %v1281 = vld [vmem:[%s1274 + $0x30] sm:$0xff]
        %v1282 = vld [vmem:[%s1274 + $0x38] sm:$0xff]
        %v1283 = vld [vmem:[%s1274 + $0x40] sm:$0xff]
        %v1284 = vld [vmem:[%s1274 + $0x48] sm:$0xff]
        %v1285 = vld [vmem:[%s1274 + $0x50] sm:$0xff]
        %v1286 = vld [vmem:[%s1274 + $0x58] sm:$0xff]
        %v1287 = vld [vmem:[%s1274 + $0x60] sm:$0xff]
        %v1288 = vld [vmem:[%s1274 + $0x68] sm:$0xff]
        %v1289 = vld [vmem:[%s1274 + $0x70] sm:$0xff]
        %v1290 = vld [vmem:[%s1274 + $0x78] sm:$0xff]
        %1291 = vmatprep.subr.mxu0 0.0
        %1292 = vmatpush1.msra.mxu0 %v1275
        %1293 = vmatprep.subr.mxu0 0.0
        %1294 = vmatpush1.msra.mxu0 %v1276
        %1295 = vmatprep.subr.mxu0 0.0
        %1296 = vmatpush1.msra.mxu0 %v1277
        %1297 = vmatprep.subr.mxu0 0.0
        %1298 = vmatpush1.msra.mxu0 %v1278
        %1299 = vmatprep.subr.mxu0 0.0
        %1300 = vmatpush1.msra.mxu0 %v1279
        %1301 = vmatprep.subr.mxu0 0.0
        %1302 = vmatpush1.msra.mxu0 %v1280
        %1303 = vmatprep.subr.mxu0 0.0
        %1304 = vmatpush1.msra.mxu0 %v1281
        %1305 = vmatprep.subr.mxu0 0.0
        %1306 = vmatpush1.msra.mxu0 %v1282
        %1307 = vmatprep.subr.mxu0 0.0
        %1308 = vmatpush1.msra.mxu0 %v1283
        %1309 = vmatprep.subr.mxu0 0.0
        %1310 = vmatpush1.msra.mxu0 %v1284
        %1311 = vmatprep.subr.mxu0 0.0
        %1312 = vmatpush1.msra.mxu0 %v1285
        %1313 = vmatprep.subr.mxu0 0.0
        %1314 = vmatpush1.msra.mxu0 %v1286
        %1315 = vmatprep.subr.mxu0 0.0
        %1316 = vmatpush1.msra.mxu0 %v1287
        %1317 = vmatprep.subr.mxu0 0.0
        %1318 = vmatpush1.msra.mxu0 %v1288
        %1319 = vmatprep.subr.mxu0 0.0
        %1320 = vmatpush1.msra.mxu0 %v1289
        %1321 = vmatprep.subr.mxu0 0.0
        %1322 = vmatpush1.msra.mxu0 %v1290
        %1323 = vmatprep.subr.mxu0 0.0
        %1324 = vmatpush1.msra.mxu0 0.0
        %1325 = vmatprep.subr.mxu0 0.0
        %1326 = vmatpush1.msra.mxu0 0.0
        %1327 = vmatprep.subr.mxu0 0.0
        %1328 = vmatpush1.msra.mxu0 0.0
        %1329 = vmatprep.subr.mxu0 0.0
        %1330 = vmatpush1.msra.mxu0 0.0
        %1331 = vmatprep.subr.mxu0 0.0
        %1332 = vmatpush1.msra.mxu0 0.0
        %1333 = vmatprep.subr.mxu0 0.0
        %1334 = vmatpush1.msra.mxu0 0.0
        %1335 = vmatprep.subr.mxu0 0.0
        %1336 = vmatpush1.msra.mxu0 0.0
        %1337 = vmatprep.subr.mxu0 0.0
        %1338 = vmatpush1.msra.mxu0 0.0
        %1339 = vmatprep.subr.mxu0 0.0
        %1340 = vmatpush1.msra.mxu0 0.0
        %1341 = vmatprep.subr.mxu0 0.0
        %1342 = vmatpush1.msra.mxu0 0.0
        %1343 = vmatprep.subr.mxu0 0.0
        %1344 = vmatpush1.msra.mxu0 0.0
        %1345 = vmatprep.subr.mxu0 0.0
        %1346 = vmatpush1.msra.mxu0 0.0
        %1347 = vmatprep.subr.mxu0 0.0
        %1348 = vmatpush1.msra.mxu0 0.0
        %1349 = vmatprep.subr.mxu0 0.0
        %1350 = vmatpush1.msra.mxu0 0.0
        %1351 = vmatprep.subr.mxu0 0.0
        %1352 = vmatpush1.msra.mxu0 0.0
        %1353 = vmatprep.subr.mxu0 0.0
        %1354 = vmatpush1.msra.mxu0 0.0
        %1355 = vmatprep.mubr.f32.mxu0 0.0
        %1356 = vmatmul.mubr.f32.gmra.mrb[0].mxu0 %v1242
        %v1357 = vpop.f32.mrb[0].mxu0
        %v1358 = vadd.f32 0.0, %v1357
        %v1359 = vpop.f32.mrb[0].mxu0
        %1360 = vmatprep.mubr.f32.mxu0 0.0
        %1361 = vmatmul.mubr.f32.gmra.mrb[0].mxu0 %v1243
        %v1362 = vpop.f32.mrb[0].mxu0
        %v1363 = vadd.f32 0.0, %v1362
        %v1364 = vpop.f32.mrb[0].mxu0
        %1365 = vmatprep.mubr.f32.mxu0 0.0
        %1366 = vmatmul.mubr.f32.gmra.mrb[0].mxu0 %v1244
        %v1367 = vpop.f32.mrb[0].mxu0
        %v1368 = vadd.f32 0.0, %v1367
        %v1369 = vpop.f32.mrb[0].mxu0
        %1370 = vmatprep.mubr.f32.mxu0 0.0
        %1371 = vmatmul.mubr.f32.gmra.mrb[0].mxu0 %v1245
        %v1372 = vpop.f32.mrb[0].mxu0
        %v1373 = vadd.f32 0.0, %v1372
        %v1374 = vpop.f32.mrb[0].mxu0
        %1375 = vmatprep.mubr.f32.mxu0 0.0
        %1376 = vmatmul.mubr.f32.gmra.mrb[0].mxu0 %v1246
        %v1377 = vpop.f32.mrb[0].mxu0
        %v1378 = vadd.f32 0.0, %v1377
        %v1379 = vpop.f32.mrb[0].mxu0
        %1380 = vmatprep.mubr.f32.mxu0 0.0
        %1381 = vmatmul.mubr.f32.gmra.mrb[0].mxu0 %v1247
        %v1382 = vpop.f32.mrb[0].mxu0
        %v1383 = vadd.f32 0.0, %v1382
        %v1384 = vpop.f32.mrb[0].mxu0
        %1385 = vmatprep.mubr.f32.mxu0 0.0
        %1386 = vmatmul.mubr.f32.gmra.mrb[0].mxu0 %v1248
        %v1387 = vpop.f32.mrb[0].mxu0
        %v1388 = vadd.f32 0.0, %v1387
        %v1389 = vpop.f32.mrb[0].mxu0
        %1390 = vmatprep.mubr.f32.mxu0 0.0
        %1391 = vmatmul.mubr.f32.gmra.mrb[0].mxu0 %v1249
        %v1392 = vpop.f32.mrb[0].mxu0
        %v1393 = vadd.f32 0.0, %v1392
        %v1394 = vpop.f32.mrb[0].mxu0
        %1395 = vmatprep.mubr.f32.mxu0 0.0
        %1396 = vmatmul.mubr.f32.gmra.mrb[0].mxu0 %v1250
        %v1397 = vpop.f32.mrb[0].mxu0
        %v1398 = vadd.f32 0.0, %v1397
        %v1399 = vpop.f32.mrb[0].mxu0
        %1400 = vmatprep.mubr.f32.mxu0 0.0
        %1401 = vmatmul.mubr.f32.gmra.mrb[0].mxu0 %v1251
        %v1402 = vpop.f32.mrb[0].mxu0
        %v1403 = vadd.f32 0.0, %v1402
        %v1404 = vpop.f32.mrb[0].mxu0
        %1405 = vmatprep.mubr.f32.mxu0 0.0
        %1406 = vmatmul.mubr.f32.gmra.mrb[0].mxu0 %v1252
        %v1407 = vpop.f32.mrb[0].mxu0
        %v1408 = vadd.f32 0.0, %v1407
        %v1409 = vpop.f32.mrb[0].mxu0
        %1410 = vmatprep.mubr.f32.mxu0 0.0
        %1411 = vmatmul.mubr.f32.gmra.mrb[0].mxu0 %v1253
        %v1412 = vpop.f32.mrb[0].mxu0
        %v1413 = vadd.f32 0.0, %v1412
        %v1414 = vpop.f32.mrb[0].mxu0
        %1415 = vmatprep.mubr.f32.mxu0 0.0
        %1416 = vmatmul.mubr.f32.gmra.mrb[0].mxu0 %v1254
        %v1417 = vpop.f32.mrb[0].mxu0
        %v1418 = vadd.f32 0.0, %v1417
        %v1419 = vpop.f32.mrb[0].mxu0
        %1420 = vmatprep.mubr.f32.mxu0 0.0
        %1421 = vmatmul.mubr.f32.gmra.mrb[0].mxu0 %v1255
        %v1422 = vpop.f32.mrb[0].mxu0
        %v1423 = vadd.f32 0.0, %v1422
        %v1424 = vpop.f32.mrb[0].mxu0
        %1425 = vmatprep.mubr.f32.mxu0 0.0
        %1426 = vmatmul.mubr.f32.gmra.mrb[0].mxu0 %v1256
        %v1427 = vpop.f32.mrb[0].mxu0
        %v1428 = vadd.f32 0.0, %v1427
        %v1429 = vpop.f32.mrb[0].mxu0
        %1430 = vmatprep.mubr.f32.mxu0 0.0
        %1431 = vmatmul.mubr.f32.gmra.mrb[0].mxu0 %v1257
        %v1432 = vpop.f32.mrb[0].mxu0
        %v1433 = vadd.f32 0.0, %v1432
        %v1434 = vpop.f32.mrb[0].mxu0
        %1435 = vmatprep.mubr.f32.mxu0 0.0
        %1436 = vmatmul.mubr.f32.gmra.mrb[0].mxu0 %v1258
        %v1437 = vpop.f32.mrb[0].mxu0
        %v1438 = vadd.f32 0.0, %v1437
        %v1439 = vpop.f32.mrb[0].mxu0
        %1440 = vmatprep.mubr.f32.mxu0 0.0
        %1441 = vmatmul.mubr.f32.gmra.mrb[0].mxu0 %v1259
        %v1442 = vpop.f32.mrb[0].mxu0
        %v1443 = vadd.f32 0.0, %v1442
        %v1444 = vpop.f32.mrb[0].mxu0
        %1445 = vmatprep.mubr.f32.mxu0 0.0
        %1446 = vmatmul.mubr.f32.gmra.mrb[0].mxu0 %v1260
        %v1447 = vpop.f32.mrb[0].mxu0
        %v1448 = vadd.f32 0.0, %v1447
        %v1449 = vpop.f32.mrb[0].mxu0
        %1450 = vmatprep.mubr.f32.mxu0 0.0
        %1451 = vmatmul.mubr.f32.gmra.mrb[0].mxu0 %v1261
        %v1452 = vpop.f32.mrb[0].mxu0
        %v1453 = vadd.f32 0.0, %v1452
        %v1454 = vpop.f32.mrb[0].mxu0
        %1455 = vmatprep.mubr.f32.mxu0 0.0
        %1456 = vmatmul.mubr.f32.gmra.mrb[0].mxu0 %v1262
        %v1457 = vpop.f32.mrb[0].mxu0
        %v1458 = vadd.f32 0.0, %v1457
        %v1459 = vpop.f32.mrb[0].mxu0
        %1460 = vmatprep.mubr.f32.mxu0 0.0
        %1461 = vmatmul.mubr.f32.gmra.mrb[0].mxu0 %v1263
        %v1462 = vpop.f32.mrb[0].mxu0
        %v1463 = vadd.f32 0.0, %v1462
        %v1464 = vpop.f32.mrb[0].mxu0
        %1465 = vmatprep.mubr.f32.mxu0 0.0
        %1466 = vmatmul.mubr.f32.gmra.mrb[0].mxu0 %v1264
        %v1467 = vpop.f32.mrb[0].mxu0
        %v1468 = vadd.f32 0.0, %v1467
        %v1469 = vpop.f32.mrb[0].mxu0
        %1470 = vmatprep.mubr.f32.mxu0 0.0
        %1471 = vmatmul.mubr.f32.gmra.mrb[0].mxu0 %v1265
        %v1472 = vpop.f32.mrb[0].mxu0
        %v1473 = vadd.f32 0.0, %v1472
        %v1474 = vpop.f32.mrb[0].mxu0
        %1475 = vmatprep.mubr.f32.mxu0 0.0
        %1476 = vmatmul.mubr.f32.gmra.mrb[0].mxu0 %v1266
        %v1477 = vpop.f32.mrb[0].mxu0
        %v1478 = vadd.f32 0.0, %v1477
        %v1479 = vpop.f32.mrb[0].mxu0
        %1480 = vmatprep.mubr.f32.mxu0 0.0
        %1481 = vmatmul.mubr.f32.gmra.mrb[0].mxu0 %v1267
        %v1482 = vpop.f32.mrb[0].mxu0
        %v1483 = vadd.f32 0.0, %v1482
        %v1484 = vpop.f32.mrb[0].mxu0
        %1485 = vmatprep.mubr.f32.mxu0 0.0
        %1486 = vmatmul.mubr.f32.gmra.mrb[0].mxu0 %v1268
        %v1487 = vpop.f32.mrb[0].mxu0
        %v1488 = vadd.f32 0.0, %v1487
        %v1489 = vpop.f32.mrb[0].mxu0
        %1490 = vmatprep.mubr.f32.mxu0 0.0
        %1491 = vmatmul.mubr.f32.gmra.mrb[0].mxu0 %v1269
        %v1492 = vpop.f32.mrb[0].mxu0
        %v1493 = vadd.f32 0.0, %v1492
        %v1494 = vpop.f32.mrb[0].mxu0
        %1495 = vmatprep.mubr.f32.mxu0 0.0
        %1496 = vmatmul.mubr.f32.gmra.mrb[0].mxu0 %v1270
        %v1497 = vpop.f32.mrb[0].mxu0
        %v1498 = vadd.f32 0.0, %v1497
        %v1499 = vpop.f32.mrb[0].mxu0
        %1500 = vmatprep.mubr.f32.mxu0 0.0
        %1501 = vmatmul.mubr.f32.gmra.mrb[0].mxu0 %v1271
        %v1502 = vpop.f32.mrb[0].mxu0
        %v1503 = vadd.f32 0.0, %v1502
        %v1504 = vpop.f32.mrb[0].mxu0
        %1505 = vmatprep.mubr.f32.mxu0 0.0
        %1506 = vmatmul.mubr.f32.gmra.mrb[0].mxu0 %v1272
        %v1507 = vpop.f32.mrb[0].mxu0
        %v1508 = vadd.f32 0.0, %v1507
        %v1509 = vpop.f32.mrb[0].mxu0
        %1510 = vmatprep.mubr.f32.mxu0 0.0
        %1511 = vmatmul.mubr.f32.gmra.mrb[0].mxu0 %v1273
        %v1512 = vpop.f32.mrb[0].mxu0
        %v1513 = vadd.f32 0.0, %v1512
        %v1514 = vpop.f32.mrb[0].mxu0
        %1515 = vdwg.mxu0
        %v1516 = vadd.f32 %v1210, %v1358
        %v1517 = vadd.f32 %v1211, %v1363
        %v1518 = vadd.f32 %v1212, %v1368
        %v1519 = vadd.f32 %v1213, %v1373
        %v1520 = vadd.f32 %v1214, %v1378
        %v1521 = vadd.f32 %v1215, %v1383
        %v1522 = vadd.f32 %v1216, %v1388
        %v1523 = vadd.f32 %v1217, %v1393
        %v1524 = vadd.f32 %v1218, %v1398
        %v1525 = vadd.f32 %v1219, %v1403
        %v1526 = vadd.f32 %v1220, %v1408
        %v1527 = vadd.f32 %v1221, %v1413
        %v1528 = vadd.f32 %v1222, %v1418
        %v1529 = vadd.f32 %v1223, %v1423
        %v1530 = vadd.f32 %v1224, %v1428
        %v1531 = vadd.f32 %v1225, %v1433
        %v1532 = vadd.f32 %v1226, %v1438
        %v1533 = vadd.f32 %v1227, %v1443
        %v1534 = vadd.f32 %v1228, %v1448
        %v1535 = vadd.f32 %v1229, %v1453
        %v1536 = vadd.f32 %v1230, %v1458
        %v1537 = vadd.f32 %v1231, %v1463
        %v1538 = vadd.f32 %v1232, %v1468
        %v1539 = vadd.f32 %v1233, %v1473
        %v1540 = vadd.f32 %v1234, %v1478
        %v1541 = vadd.f32 %v1235, %v1483
        %v1542 = vadd.f32 %v1236, %v1488
        %v1543 = vadd.f32 %v1237, %v1493
        %v1544 = vadd.f32 %v1238, %v1498
        %v1545 = vadd.f32 %v1239, %v1503
        %v1546 = vadd.f32 %v1240, %v1508
        %v1547 = vadd.f32 %v1241, %v1513
        %v1548 = vld [vmem:[#allocation2 + $0x2] sm:$0xff]
        %v1549 = vld [vmem:[#allocation2 + $0xa] sm:$0xff]
        %v1550 = vld [vmem:[#allocation2 + $0x1a] sm:$0xff]
        %v1551 = vld [vmem:[#allocation2 + $0x22] sm:$0xff]
        %v1552 = vld [vmem:[#allocation2 + $0x32] sm:$0xff]
        %v1553 = vld [vmem:[#allocation2 + $0x3a] sm:$0xff]
        %v1554 = vld [vmem:[#allocation2 + $0x4a] sm:$0xff]
        %v1555 = vld [vmem:[#allocation2 + $0x52] sm:$0xff]
        %v1556 = vld [vmem:[#allocation2 + $0x62] sm:$0xff]
        %v1557 = vld [vmem:[#allocation2 + $0x6a] sm:$0xff]
        %v1558 = vld [vmem:[#allocation2 + $0x7a] sm:$0xff]
        %v1559 = vld [vmem:[#allocation2 + $0x82] sm:$0xff]
        %v1560 = vld [vmem:[#allocation2 + $0x92] sm:$0xff]
        %v1561 = vld [vmem:[#allocation2 + $0x9a] sm:$0xff]
        %v1562 = vld [vmem:[#allocation2 + $0xaa] sm:$0xff]
        %v1563 = vld [vmem:[#allocation2 + $0xb2] sm:$0xff]
        %v1564 = vld [vmem:[#allocation2 + $0xc2] sm:$0xff]
        %v1565 = vld [vmem:[#allocation2 + $0xca] sm:$0xff]
        %v1566 = vld [vmem:[#allocation2 + $0xda] sm:$0xff]
        %v1567 = vld [vmem:[#allocation2 + $0xe2] sm:$0xff]
        %v1568 = vld [vmem:[#allocation2 + $0xf2] sm:$0xff]
        %v1569 = vld [vmem:[#allocation2 + $0xfa] sm:$0xff]
        %v1570 = vld [vmem:[#allocation2 + $0x10a] sm:$0xff]
        %v1571 = vld [vmem:[#allocation2 + $0x112] sm:$0xff]
        %v1572 = vld [vmem:[#allocation2 + $0x122] sm:$0xff]
        %v1573 = vld [vmem:[#allocation2 + $0x12a] sm:$0xff]
        %v1574 = vld [vmem:[#allocation2 + $0x13a] sm:$0xff]
        %v1575 = vld [vmem:[#allocation2 + $0x142] sm:$0xff]
        %v1576 = vld [vmem:[#allocation2 + $0x152] sm:$0xff]
        %v1577 = vld [vmem:[#allocation2 + $0x15a] sm:$0xff]
        %v1578 = vld [vmem:[#allocation2 + $0x16a] sm:$0xff]
        %v1579 = vld [vmem:[#allocation2 + $0x172] sm:$0xff]
        %s1580 = scalar_lea.vmem [#allocation8], 256
        %v1581 = vld [vmem:[%s1580] sm:$0xff]
        %v1582 = vld [vmem:[%s1580 + $0x8] sm:$0xff]
        %v1583 = vld [vmem:[%s1580 + $0x10] sm:$0xff]
        %v1584 = vld [vmem:[%s1580 + $0x18] sm:$0xff]
        %v1585 = vld [vmem:[%s1580 + $0x20] sm:$0xff]
        %v1586 = vld [vmem:[%s1580 + $0x28] sm:$0xff]
        %v1587 = vld [vmem:[%s1580 + $0x30] sm:$0xff]
        %v1588 = vld [vmem:[%s1580 + $0x38] sm:$0xff]
        %v1589 = vld [vmem:[%s1580 + $0x40] sm:$0xff]
        %v1590 = vld [vmem:[%s1580 + $0x48] sm:$0xff]
        %v1591 = vld [vmem:[%s1580 + $0x50] sm:$0xff]
        %v1592 = vld [vmem:[%s1580 + $0x58] sm:$0xff]
        %v1593 = vld [vmem:[%s1580 + $0x60] sm:$0xff]
        %v1594 = vld [vmem:[%s1580 + $0x68] sm:$0xff]
        %v1595 = vld [vmem:[%s1580 + $0x70] sm:$0xff]
        %v1596 = vld [vmem:[%s1580 + $0x78] sm:$0xff]
        %1597 = vmatprep.subr.mxu0 0.0
        %1598 = vmatpush1.msra.mxu0 %v1581
        %1599 = vmatprep.subr.mxu0 0.0
        %1600 = vmatpush1.msra.mxu0 %v1582
        %1601 = vmatprep.subr.mxu0 0.0
        %1602 = vmatpush1.msra.mxu0 %v1583
        %1603 = vmatprep.subr.mxu0 0.0
        %1604 = vmatpush1.msra.mxu0 %v1584
        %1605 = vmatprep.subr.mxu0 0.0
        %1606 = vmatpush1.msra.mxu0 %v1585
        %1607 = vmatprep.subr.mxu0 0.0
        %1608 = vmatpush1.msra.mxu0 %v1586
        %1609 = vmatprep.subr.mxu0 0.0
        %1610 = vmatpush1.msra.mxu0 %v1587
        %1611 = vmatprep.subr.mxu0 0.0
        %1612 = vmatpush1.msra.mxu0 %v1588
        %1613 = vmatprep.subr.mxu0 0.0
        %1614 = vmatpush1.msra.mxu0 %v1589
        %1615 = vmatprep.subr.mxu0 0.0
        %1616 = vmatpush1.msra.mxu0 %v1590
        %1617 = vmatprep.subr.mxu0 0.0
        %1618 = vmatpush1.msra.mxu0 %v1591
        %1619 = vmatprep.subr.mxu0 0.0
        %1620 = vmatpush1.msra.mxu0 %v1592
        %1621 = vmatprep.subr.mxu0 0.0
        %1622 = vmatpush1.msra.mxu0 %v1593
        %1623 = vmatprep.subr.mxu0 0.0
        %1624 = vmatpush1.msra.mxu0 %v1594
        %1625 = vmatprep.subr.mxu0 0.0
        %1626 = vmatpush1.msra.mxu0 %v1595
        %1627 = vmatprep.subr.mxu0 0.0
        %1628 = vmatpush1.msra.mxu0 %v1596
        %1629 = vmatprep.subr.mxu0 0.0
        %1630 = vmatpush1.msra.mxu0 0.0
        %1631 = vmatprep.subr.mxu0 0.0
        %1632 = vmatpush1.msra.mxu0 0.0
        %1633 = vmatprep.subr.mxu0 0.0
        %1634 = vmatpush1.msra.mxu0 0.0
        %1635 = vmatprep.subr.mxu0 0.0
        %1636 = vmatpush1.msra.mxu0 0.0
        %1637 = vmatprep.subr.mxu0 0.0
        %1638 = vmatpush1.msra.mxu0 0.0
        %1639 = vmatprep.subr.mxu0 0.0
        %1640 = vmatpush1.msra.mxu0 0.0
        %1641 = vmatprep.subr.mxu0 0.0
        %1642 = vmatpush1.msra.mxu0 0.0
        %1643 = vmatprep.subr.mxu0 0.0
        %1644 = vmatpush1.msra.mxu0 0.0
        %1645 = vmatprep.subr.mxu0 0.0
        %1646 = vmatpush1.msra.mxu0 0.0
        %1647 = vmatprep.subr.mxu0 0.0
        %1648 = vmatpush1.msra.mxu0 0.0
        %1649 = vmatprep.subr.mxu0 0.0
        %1650 = vmatpush1.msra.mxu0 0.0
        %1651 = vmatprep.subr.mxu0 0.0
        %1652 = vmatpush1.msra.mxu0 0.0
        %1653 = vmatprep.subr.mxu0 0.0
        %1654 = vmatpush1.msra.mxu0 0.0
        %1655 = vmatprep.subr.mxu0 0.0
        %1656 = vmatpush1.msra.mxu0 0.0
        %1657 = vmatprep.subr.mxu0 0.0
        %1658 = vmatpush1.msra.mxu0 0.0
        %1659 = vmatprep.subr.mxu0 0.0
        %1660 = vmatpush1.msra.mxu0 0.0
        %1661 = vmatprep.mubr.f32.mxu0 0.0
        %1662 = vmatmul.mubr.f32.gmra.mrb[0].mxu0 %v1548
        %v1663 = vpop.f32.mrb[0].mxu0
        %v1664 = vadd.f32 0.0, %v1663
        %v1665 = vpop.f32.mrb[0].mxu0
        %1666 = vmatprep.mubr.f32.mxu0 0.0
        %1667 = vmatmul.mubr.f32.gmra.mrb[0].mxu0 %v1549
        %v1668 = vpop.f32.mrb[0].mxu0
        %v1669 = vadd.f32 0.0, %v1668
        %v1670 = vpop.f32.mrb[0].mxu0
        %1671 = vmatprep.mubr.f32.mxu0 0.0
        %1672 = vmatmul.mubr.f32.gmra.mrb[0].mxu0 %v1550
        %v1673 = vpop.f32.mrb[0].mxu0
        %v1674 = vadd.f32 0.0, %v1673
        %v1675 = vpop.f32.mrb[0].mxu0
        %1676 = vmatprep.mubr.f32.mxu0 0.0
        %1677 = vmatmul.mubr.f32.gmra.mrb[0].mxu0 %v1551
        %v1678 = vpop.f32.mrb[0].mxu0
        %v1679 = vadd.f32 0.0, %v1678
        %v1680 = vpop.f32.mrb[0].mxu0
        %1681 = vmatprep.mubr.f32.mxu0 0.0
        %1682 = vmatmul.mubr.f32.gmra.mrb[0].mxu0 %v1552
        %v1683 = vpop.f32.mrb[0].mxu0
        %v1684 = vadd.f32 0.0, %v1683
        %v1685 = vpop.f32.mrb[0].mxu0
        %1686 = vmatprep.mubr.f32.mxu0 0.0
        %1687 = vmatmul.mubr.f32.gmra.mrb[0].mxu0 %v1553
        %v1688 = vpop.f32.mrb[0].mxu0
        %v1689 = vadd.f32 0.0, %v1688
        %v1690 = vpop.f32.mrb[0].mxu0
        %1691 = vmatprep.mubr.f32.mxu0 0.0
        %1692 = vmatmul.mubr.f32.gmra.mrb[0].mxu0 %v1554
        %v1693 = vpop.f32.mrb[0].mxu0
        %v1694 = vadd.f32 0.0, %v1693
        %v1695 = vpop.f32.mrb[0].mxu0
        %1696 = vmatprep.mubr.f32.mxu0 0.0
        %1697 = vmatmul.mubr.f32.gmra.mrb[0].mxu0 %v1555
        %v1698 = vpop.f32.mrb[0].mxu0
        %v1699 = vadd.f32 0.0, %v1698
        %v1700 = vpop.f32.mrb[0].mxu0
        %1701 = vmatprep.mubr.f32.mxu0 0.0
        %1702 = vmatmul.mubr.f32.gmra.mrb[0].mxu0 %v1556
        %v1703 = vpop.f32.mrb[0].mxu0
        %v1704 = vadd.f32 0.0, %v1703
        %v1705 = vpop.f32.mrb[0].mxu0
        %1706 = vmatprep.mubr.f32.mxu0 0.0
        %1707 = vmatmul.mubr.f32.gmra.mrb[0].mxu0 %v1557
        %v1708 = vpop.f32.mrb[0].mxu0
        %v1709 = vadd.f32 0.0, %v1708
        %v1710 = vpop.f32.mrb[0].mxu0
        %1711 = vmatprep.mubr.f32.mxu0 0.0
        %1712 = vmatmul.mubr.f32.gmra.mrb[0].mxu0 %v1558
        %v1713 = vpop.f32.mrb[0].mxu0
        %v1714 = vadd.f32 0.0, %v1713
        %v1715 = vpop.f32.mrb[0].mxu0
        %1716 = vmatprep.mubr.f32.mxu0 0.0
        %1717 = vmatmul.mubr.f32.gmra.mrb[0].mxu0 %v1559
        %v1718 = vpop.f32.mrb[0].mxu0
        %v1719 = vadd.f32 0.0, %v1718
        %v1720 = vpop.f32.mrb[0].mxu0
        %1721 = vmatprep.mubr.f32.mxu0 0.0
        %1722 = vmatmul.mubr.f32.gmra.mrb[0].mxu0 %v1560
        %v1723 = vpop.f32.mrb[0].mxu0
        %v1724 = vadd.f32 0.0, %v1723
        %v1725 = vpop.f32.mrb[0].mxu0
        %1726 = vmatprep.mubr.f32.mxu0 0.0
        %1727 = vmatmul.mubr.f32.gmra.mrb[0].mxu0 %v1561
        %v1728 = vpop.f32.mrb[0].mxu0
        %v1729 = vadd.f32 0.0, %v1728
        %v1730 = vpop.f32.mrb[0].mxu0
        %1731 = vmatprep.mubr.f32.mxu0 0.0
        %1732 = vmatmul.mubr.f32.gmra.mrb[0].mxu0 %v1562
        %v1733 = vpop.f32.mrb[0].mxu0
        %v1734 = vadd.f32 0.0, %v1733
        %v1735 = vpop.f32.mrb[0].mxu0
        %1736 = vmatprep.mubr.f32.mxu0 0.0
        %1737 = vmatmul.mubr.f32.gmra.mrb[0].mxu0 %v1563
        %v1738 = vpop.f32.mrb[0].mxu0
        %v1739 = vadd.f32 0.0, %v1738
        %v1740 = vpop.f32.mrb[0].mxu0
        %1741 = vmatprep.mubr.f32.mxu0 0.0
        %1742 = vmatmul.mubr.f32.gmra.mrb[0].mxu0 %v1564
        %v1743 = vpop.f32.mrb[0].mxu0
        %v1744 = vadd.f32 0.0, %v1743
        %v1745 = vpop.f32.mrb[0].mxu0
        %1746 = vmatprep.mubr.f32.mxu0 0.0
        %1747 = vmatmul.mubr.f32.gmra.mrb[0].mxu0 %v1565
        %v1748 = vpop.f32.mrb[0].mxu0
        %v1749 = vadd.f32 0.0, %v1748
        %v1750 = vpop.f32.mrb[0].mxu0
        %1751 = vmatprep.mubr.f32.mxu0 0.0
        %1752 = vmatmul.mubr.f32.gmra.mrb[0].mxu0 %v1566
        %v1753 = vpop.f32.mrb[0].mxu0
        %v1754 = vadd.f32 0.0, %v1753
        %v1755 = vpop.f32.mrb[0].mxu0
        %1756 = vmatprep.mubr.f32.mxu0 0.0
        %1757 = vmatmul.mubr.f32.gmra.mrb[0].mxu0 %v1567
        %v1758 = vpop.f32.mrb[0].mxu0
        %v1759 = vadd.f32 0.0, %v1758
        %v1760 = vpop.f32.mrb[0].mxu0
        %1761 = vmatprep.mubr.f32.mxu0 0.0
        %1762 = vmatmul.mubr.f32.gmra.mrb[0].mxu0 %v1568
        %v1763 = vpop.f32.mrb[0].mxu0
        %v1764 = vadd.f32 0.0, %v1763
        %v1765 = vpop.f32.mrb[0].mxu0
        %1766 = vmatprep.mubr.f32.mxu0 0.0
        %1767 = vmatmul.mubr.f32.gmra.mrb[0].mxu0 %v1569
        %v1768 = vpop.f32.mrb[0].mxu0
        %v1769 = vadd.f32 0.0, %v1768
        %v1770 = vpop.f32.mrb[0].mxu0
        %1771 = vmatprep.mubr.f32.mxu0 0.0
        %1772 = vmatmul.mubr.f32.gmra.mrb[0].mxu0 %v1570
        %v1773 = vpop.f32.mrb[0].mxu0
        %v1774 = vadd.f32 0.0, %v1773
        %v1775 = vpop.f32.mrb[0].mxu0
        %1776 = vmatprep.mubr.f32.mxu0 0.0
        %1777 = vmatmul.mubr.f32.gmra.mrb[0].mxu0 %v1571
        %v1778 = vpop.f32.mrb[0].mxu0
        %v1779 = vadd.f32 0.0, %v1778
        %v1780 = vpop.f32.mrb[0].mxu0
        %1781 = vmatprep.mubr.f32.mxu0 0.0
        %1782 = vmatmul.mubr.f32.gmra.mrb[0].mxu0 %v1572
        %v1783 = vpop.f32.mrb[0].mxu0
        %v1784 = vadd.f32 0.0, %v1783
        %v1785 = vpop.f32.mrb[0].mxu0
        %1786 = vmatprep.mubr.f32.mxu0 0.0
        %1787 = vmatmul.mubr.f32.gmra.mrb[0].mxu0 %v1573
        %v1788 = vpop.f32.mrb[0].mxu0
        %v1789 = vadd.f32 0.0, %v1788
        %v1790 = vpop.f32.mrb[0].mxu0
        %1791 = vmatprep.mubr.f32.mxu0 0.0
        %1792 = vmatmul.mubr.f32.gmra.mrb[0].mxu0 %v1574
        %v1793 = vpop.f32.mrb[0].mxu0
        %v1794 = vadd.f32 0.0, %v1793
        %v1795 = vpop.f32.mrb[0].mxu0
        %1796 = vmatprep.mubr.f32.mxu0 0.0
        %1797 = vmatmul.mubr.f32.gmra.mrb[0].mxu0 %v1575
        %v1798 = vpop.f32.mrb[0].mxu0
        %v1799 = vadd.f32 0.0, %v1798
        %v1800 = vpop.f32.mrb[0].mxu0
        %1801 = vmatprep.mubr.f32.mxu0 0.0
        %1802 = vmatmul.mubr.f32.gmra.mrb[0].mxu0 %v1576
        %v1803 = vpop.f32.mrb[0].mxu0
        %v1804 = vadd.f32 0.0, %v1803
        %v1805 = vpop.f32.mrb[0].mxu0
        %1806 = vmatprep.mubr.f32.mxu0 0.0
        %1807 = vmatmul.mubr.f32.gmra.mrb[0].mxu0 %v1577
        %v1808 = vpop.f32.mrb[0].mxu0
        %v1809 = vadd.f32 0.0, %v1808
        %v1810 = vpop.f32.mrb[0].mxu0
        %1811 = vmatprep.mubr.f32.mxu0 0.0
        %1812 = vmatmul.mubr.f32.gmra.mrb[0].mxu0 %v1578
        %v1813 = vpop.f32.mrb[0].mxu0
        %v1814 = vadd.f32 0.0, %v1813
        %v1815 = vpop.f32.mrb[0].mxu0
        %1816 = vmatprep.mubr.f32.mxu0 0.0
        %1817 = vmatmul.mubr.f32.gmra.mrb[0].mxu0 %v1579
        %v1818 = vpop.f32.mrb[0].mxu0
        %v1819 = vadd.f32 0.0, %v1818
        %v1820 = vpop.f32.mrb[0].mxu0
        %1821 = vdwg.mxu0
        %v1822 = vadd.f32 %v1516, %v1664
        %v1823 = vadd.f32 %v1517, %v1669
        %v1824 = vadd.f32 %v1518, %v1674
        %v1825 = vadd.f32 %v1519, %v1679
        %v1826 = vadd.f32 %v1520, %v1684
        %v1827 = vadd.f32 %v1521, %v1689
        %v1828 = vadd.f32 %v1522, %v1694
        %v1829 = vadd.f32 %v1523, %v1699
        %v1830 = vadd.f32 %v1524, %v1704
        %v1831 = vadd.f32 %v1525, %v1709
        %v1832 = vadd.f32 %v1526, %v1714
        %v1833 = vadd.f32 %v1527, %v1719
        %v1834 = vadd.f32 %v1528, %v1724
        %v1835 = vadd.f32 %v1529, %v1729
        %v1836 = vadd.f32 %v1530, %v1734
        %v1837 = vadd.f32 %v1531, %v1739
        %v1838 = vadd.f32 %v1532, %v1744
        %v1839 = vadd.f32 %v1533, %v1749
        %v1840 = vadd.f32 %v1534, %v1754
        %v1841 = vadd.f32 %v1535, %v1759
        %v1842 = vadd.f32 %v1536, %v1764
        %v1843 = vadd.f32 %v1537, %v1769
        %v1844 = vadd.f32 %v1538, %v1774
        %v1845 = vadd.f32 %v1539, %v1779
        %v1846 = vadd.f32 %v1540, %v1784
        %v1847 = vadd.f32 %v1541, %v1789
        %v1848 = vadd.f32 %v1542, %v1794
        %v1849 = vadd.f32 %v1543, %v1799
        %v1850 = vadd.f32 %v1544, %v1804
        %v1851 = vadd.f32 %v1545, %v1809
        %v1852 = vadd.f32 %v1546, %v1814
        %v1853 = vadd.f32 %v1547, %v1819
        %s1854 = scalar_lea.vmem [#allocation2], 24
        %v1855 = vld [vmem:[%s1854] sm:$0xff]
        %v1856 = vld [vmem:[%s1854 + $0x8] sm:$0xff]
        %v1857 = vld [vmem:[%s1854 + $0x18] sm:$0xff]
        %v1858 = vld [vmem:[%s1854 + $0x20] sm:$0xff]
        %v1859 = vld [vmem:[%s1854 + $0x30] sm:$0xff]
        %v1860 = vld [vmem:[%s1854 + $0x38] sm:$0xff]
        %v1861 = vld [vmem:[%s1854 + $0x48] sm:$0xff]
        %v1862 = vld [vmem:[%s1854 + $0x50] sm:$0xff]
        %v1863 = vld [vmem:[%s1854 + $0x60] sm:$0xff]
        %v1864 = vld [vmem:[%s1854 + $0x68] sm:$0xff]
        %v1865 = vld [vmem:[%s1854 + $0x78] sm:$0xff]
        %v1866 = vld [vmem:[%s1854 + $0x80] sm:$0xff]
        %v1867 = vld [vmem:[%s1854 + $0x90] sm:$0xff]
        %v1868 = vld [vmem:[%s1854 + $0x98] sm:$0xff]
        %v1869 = vld [vmem:[%s1854 + $0xa8] sm:$0xff]
        %v1870 = vld [vmem:[%s1854 + $0xb0] sm:$0xff]
        %v1871 = vld [vmem:[%s1854 + $0xc0] sm:$0xff]
        %v1872 = vld [vmem:[%s1854 + $0xc8] sm:$0xff]
        %v1873 = vld [vmem:[%s1854 + $0xd8] sm:$0xff]
        %v1874 = vld [vmem:[%s1854 + $0xe0] sm:$0xff]
        %v1875 = vld [vmem:[%s1854 + $0xf0] sm:$0xff]
        %v1876 = vld [vmem:[%s1854 + $0xf8] sm:$0xff]
        %v1877 = vld [vmem:[%s1854 + $0x108] sm:$0xff]
        %v1878 = vld [vmem:[%s1854 + $0x110] sm:$0xff]
        %v1879 = vld [vmem:[%s1854 + $0x120] sm:$0xff]
        %v1880 = vld [vmem:[%s1854 + $0x128] sm:$0xff]
        %v1881 = vld [vmem:[%s1854 + $0x138] sm:$0xff]
        %v1882 = vld [vmem:[%s1854 + $0x140] sm:$0xff]
        %v1883 = vld [vmem:[%s1854 + $0x150] sm:$0xff]
        %v1884 = vld [vmem:[%s1854 + $0x158] sm:$0xff]
        %v1885 = vld [vmem:[%s1854 + $0x168] sm:$0xff]
        %v1886 = vld [vmem:[%s1854 + $0x170] sm:$0xff]
        %s1887 = scalar_lea.vmem [#allocation8], 384
        %v1888 = vld [vmem:[%s1887] sm:$0xff]
        %v1889 = vld [vmem:[%s1887 + $0x8] sm:$0xff]
        %v1890 = vld [vmem:[%s1887 + $0x10] sm:$0xff]
        %v1891 = vld [vmem:[%s1887 + $0x18] sm:$0xff]
        %v1892 = vld [vmem:[%s1887 + $0x20] sm:$0xff]
        %v1893 = vld [vmem:[%s1887 + $0x28] sm:$0xff]
        %v1894 = vld [vmem:[%s1887 + $0x30] sm:$0xff]
        %v1895 = vld [vmem:[%s1887 + $0x38] sm:$0xff]
        %v1896 = vld [vmem:[%s1887 + $0x40] sm:$0xff]
        %v1897 = vld [vmem:[%s1887 + $0x48] sm:$0xff]
        %v1898 = vld [vmem:[%s1887 + $0x50] sm:$0xff]
        %v1899 = vld [vmem:[%s1887 + $0x58] sm:$0xff]
        %v1900 = vld [vmem:[%s1887 + $0x60] sm:$0xff]
        %v1901 = vld [vmem:[%s1887 + $0x68] sm:$0xff]
        %v1902 = vld [vmem:[%s1887 + $0x70] sm:$0xff]
        %v1903 = vld [vmem:[%s1887 + $0x78] sm:$0xff]
        %1904 = vmatprep.subr.mxu0 0.0
        %1905 = vmatpush1.msra.mxu0 %v1888
        %1906 = vmatprep.subr.mxu0 0.0
        %1907 = vmatpush1.msra.mxu0 %v1889
        %1908 = vmatprep.subr.mxu0 0.0
        %1909 = vmatpush1.msra.mxu0 %v1890
        %1910 = vmatprep.subr.mxu0 0.0
        %1911 = vmatpush1.msra.mxu0 %v1891
        %1912 = vmatprep.subr.mxu0 0.0
        %1913 = vmatpush1.msra.mxu0 %v1892
        %1914 = vmatprep.subr.mxu0 0.0
        %1915 = vmatpush1.msra.mxu0 %v1893
        %1916 = vmatprep.subr.mxu0 0.0
        %1917 = vmatpush1.msra.mxu0 %v1894
        %1918 = vmatprep.subr.mxu0 0.0
        %1919 = vmatpush1.msra.mxu0 %v1895
        %1920 = vmatprep.subr.mxu0 0.0
        %1921 = vmatpush1.msra.mxu0 %v1896
        %1922 = vmatprep.subr.mxu0 0.0
        %1923 = vmatpush1.msra.mxu0 %v1897
        %1924 = vmatprep.subr.mxu0 0.0
        %1925 = vmatpush1.msra.mxu0 %v1898
        %1926 = vmatprep.subr.mxu0 0.0
        %1927 = vmatpush1.msra.mxu0 %v1899
        %1928 = vmatprep.subr.mxu0 0.0
        %1929 = vmatpush1.msra.mxu0 %v1900
        %1930 = vmatprep.subr.mxu0 0.0
        %1931 = vmatpush1.msra.mxu0 %v1901
        %1932 = vmatprep.subr.mxu0 0.0
        %1933 = vmatpush1.msra.mxu0 %v1902
        %1934 = vmatprep.subr.mxu0 0.0
        %1935 = vmatpush1.msra.mxu0 %v1903
        %1936 = vmatprep.subr.mxu0 0.0
        %1937 = vmatpush1.msra.mxu0 0.0
        %1938 = vmatprep.subr.mxu0 0.0
        %1939 = vmatpush1.msra.mxu0 0.0
        %1940 = vmatprep.subr.mxu0 0.0
        %1941 = vmatpush1.msra.mxu0 0.0
        %1942 = vmatprep.subr.mxu0 0.0
        %1943 = vmatpush1.msra.mxu0 0.0
        %1944 = vmatprep.subr.mxu0 0.0
        %1945 = vmatpush1.msra.mxu0 0.0
        %1946 = vmatprep.subr.mxu0 0.0
        %1947 = vmatpush1.msra.mxu0 0.0
        %1948 = vmatprep.subr.mxu0 0.0
        %1949 = vmatpush1.msra.mxu0 0.0
        %1950 = vmatprep.subr.mxu0 0.0
        %1951 = vmatpush1.msra.mxu0 0.0
        %1952 = vmatprep.subr.mxu0 0.0
        %1953 = vmatpush1.msra.mxu0 0.0
        %1954 = vmatprep.subr.mxu0 0.0
        %1955 = vmatpush1.msra.mxu0 0.0
        %1956 = vmatprep.subr.mxu0 0.0
        %1957 = vmatpush1.msra.mxu0 0.0
        %1958 = vmatprep.subr.mxu0 0.0
        %1959 = vmatpush1.msra.mxu0 0.0
        %1960 = vmatprep.subr.mxu0 0.0
        %1961 = vmatpush1.msra.mxu0 0.0
        %1962 = vmatprep.subr.mxu0 0.0
        %1963 = vmatpush1.msra.mxu0 0.0
        %1964 = vmatprep.subr.mxu0 0.0
        %1965 = vmatpush1.msra.mxu0 0.0
        %1966 = vmatprep.subr.mxu0 0.0
        %1967 = vmatpush1.msra.mxu0 0.0
        %1968 = vmatprep.mubr.f32.mxu0 0.0
        %1969 = vmatmul.mubr.f32.gmra.mrb[0].mxu0 %v1855
        %v1970 = vpop.f32.mrb[0].mxu0
        %v1971 = vadd.f32 0.0, %v1970
        %v1972 = vpop.f32.mrb[0].mxu0
        %1973 = vmatprep.mubr.f32.mxu0 0.0
        %1974 = vmatmul.mubr.f32.gmra.mrb[0].mxu0 %v1856
        %v1975 = vpop.f32.mrb[0].mxu0
        %v1976 = vadd.f32 0.0, %v1975
        %v1977 = vpop.f32.mrb[0].mxu0
        %1978 = vmatprep.mubr.f32.mxu0 0.0
        %1979 = vmatmul.mubr.f32.gmra.mrb[0].mxu0 %v1857
        %v1980 = vpop.f32.mrb[0].mxu0
        %v1981 = vadd.f32 0.0, %v1980
        %v1982 = vpop.f32.mrb[0].mxu0
        %1983 = vmatprep.mubr.f32.mxu0 0.0
        %1984 = vmatmul.mubr.f32.gmra.mrb[0].mxu0 %v1858
        %v1985 = vpop.f32.mrb[0].mxu0
        %v1986 = vadd.f32 0.0, %v1985
        %v1987 = vpop.f32.mrb[0].mxu0
        %1988 = vmatprep.mubr.f32.mxu0 0.0
        %1989 = vmatmul.mubr.f32.gmra.mrb[0].mxu0 %v1859
        %v1990 = vpop.f32.mrb[0].mxu0
        %v1991 = vadd.f32 0.0, %v1990
        %v1992 = vpop.f32.mrb[0].mxu0
        %1993 = vmatprep.mubr.f32.mxu0 0.0
        %1994 = vmatmul.mubr.f32.gmra.mrb[0].mxu0 %v1860
        %v1995 = vpop.f32.mrb[0].mxu0
        %v1996 = vadd.f32 0.0, %v1995
        %v1997 = vpop.f32.mrb[0].mxu0
        %1998 = vmatprep.mubr.f32.mxu0 0.0
        %1999 = vmatmul.mubr.f32.gmra.mrb[0].mxu0 %v1861
        %v2000 = vpop.f32.mrb[0].mxu0
        %v2001 = vadd.f32 0.0, %v2000
        %v2002 = vpop.f32.mrb[0].mxu0
        %2003 = vmatprep.mubr.f32.mxu0 0.0
        %2004 = vmatmul.mubr.f32.gmra.mrb[0].mxu0 %v1862
        %v2005 = vpop.f32.mrb[0].mxu0
        %v2006 = vadd.f32 0.0, %v2005
        %v2007 = vpop.f32.mrb[0].mxu0
        %2008 = vmatprep.mubr.f32.mxu0 0.0
        %2009 = vmatmul.mubr.f32.gmra.mrb[0].mxu0 %v1863
        %v2010 = vpop.f32.mrb[0].mxu0
        %v2011 = vadd.f32 0.0, %v2010
        %v2012 = vpop.f32.mrb[0].mxu0
        %2013 = vmatprep.mubr.f32.mxu0 0.0
        %2014 = vmatmul.mubr.f32.gmra.mrb[0].mxu0 %v1864
        %v2015 = vpop.f32.mrb[0].mxu0
        %v2016 = vadd.f32 0.0, %v2015
        %v2017 = vpop.f32.mrb[0].mxu0
        %2018 = vmatprep.mubr.f32.mxu0 0.0
        %2019 = vmatmul.mubr.f32.gmra.mrb[0].mxu0 %v1865
        %v2020 = vpop.f32.mrb[0].mxu0
        %v2021 = vadd.f32 0.0, %v2020
        %v2022 = vpop.f32.mrb[0].mxu0
        %2023 = vmatprep.mubr.f32.mxu0 0.0
        %2024 = vmatmul.mubr.f32.gmra.mrb[0].mxu0 %v1866
        %v2025 = vpop.f32.mrb[0].mxu0
        %v2026 = vadd.f32 0.0, %v2025
        %v2027 = vpop.f32.mrb[0].mxu0
        %2028 = vmatprep.mubr.f32.mxu0 0.0
        %2029 = vmatmul.mubr.f32.gmra.mrb[0].mxu0 %v1867
        %v2030 = vpop.f32.mrb[0].mxu0
        %v2031 = vadd.f32 0.0, %v2030
        %v2032 = vpop.f32.mrb[0].mxu0
        %2033 = vmatprep.mubr.f32.mxu0 0.0
        %2034 = vmatmul.mubr.f32.gmra.mrb[0].mxu0 %v1868
        %v2035 = vpop.f32.mrb[0].mxu0
        %v2036 = vadd.f32 0.0, %v2035
        %v2037 = vpop.f32.mrb[0].mxu0
        %2038 = vmatprep.mubr.f32.mxu0 0.0
        %2039 = vmatmul.mubr.f32.gmra.mrb[0].mxu0 %v1869
        %v2040 = vpop.f32.mrb[0].mxu0
        %v2041 = vadd.f32 0.0, %v2040
        %v2042 = vpop.f32.mrb[0].mxu0
        %2043 = vmatprep.mubr.f32.mxu0 0.0
        %2044 = vmatmul.mubr.f32.gmra.mrb[0].mxu0 %v1870
        %v2045 = vpop.f32.mrb[0].mxu0
        %v2046 = vadd.f32 0.0, %v2045
        %v2047 = vpop.f32.mrb[0].mxu0
        %2048 = vmatprep.mubr.f32.mxu0 0.0
        %2049 = vmatmul.mubr.f32.gmra.mrb[0].mxu0 %v1871
        %v2050 = vpop.f32.mrb[0].mxu0
        %v2051 = vadd.f32 0.0, %v2050
        %v2052 = vpop.f32.mrb[0].mxu0
        %2053 = vmatprep.mubr.f32.mxu0 0.0
        %2054 = vmatmul.mubr.f32.gmra.mrb[0].mxu0 %v1872
        %v2055 = vpop.f32.mrb[0].mxu0
        %v2056 = vadd.f32 0.0, %v2055
        %v2057 = vpop.f32.mrb[0].mxu0
        %2058 = vmatprep.mubr.f32.mxu0 0.0
        %2059 = vmatmul.mubr.f32.gmra.mrb[0].mxu0 %v1873
        %v2060 = vpop.f32.mrb[0].mxu0
        %v2061 = vadd.f32 0.0, %v2060
        %v2062 = vpop.f32.mrb[0].mxu0
        %2063 = vmatprep.mubr.f32.mxu0 0.0
        %2064 = vmatmul.mubr.f32.gmra.mrb[0].mxu0 %v1874
        %v2065 = vpop.f32.mrb[0].mxu0
        %v2066 = vadd.f32 0.0, %v2065
        %v2067 = vpop.f32.mrb[0].mxu0
        %2068 = vmatprep.mubr.f32.mxu0 0.0
        %2069 = vmatmul.mubr.f32.gmra.mrb[0].mxu0 %v1875
        %v2070 = vpop.f32.mrb[0].mxu0
        %v2071 = vadd.f32 0.0, %v2070
        %v2072 = vpop.f32.mrb[0].mxu0
        %2073 = vmatprep.mubr.f32.mxu0 0.0
        %2074 = vmatmul.mubr.f32.gmra.mrb[0].mxu0 %v1876
        %v2075 = vpop.f32.mrb[0].mxu0
        %v2076 = vadd.f32 0.0, %v2075
        %v2077 = vpop.f32.mrb[0].mxu0
        %2078 = vmatprep.mubr.f32.mxu0 0.0
        %2079 = vmatmul.mubr.f32.gmra.mrb[0].mxu0 %v1877
        %v2080 = vpop.f32.mrb[0].mxu0
        %v2081 = vadd.f32 0.0, %v2080
        %v2082 = vpop.f32.mrb[0].mxu0
        %2083 = vmatprep.mubr.f32.mxu0 0.0
        %2084 = vmatmul.mubr.f32.gmra.mrb[0].mxu0 %v1878
        %v2085 = vpop.f32.mrb[0].mxu0
        %v2086 = vadd.f32 0.0, %v2085
        %v2087 = vpop.f32.mrb[0].mxu0
        %2088 = vmatprep.mubr.f32.mxu0 0.0
        %2089 = vmatmul.mubr.f32.gmra.mrb[0].mxu0 %v1879
        %v2090 = vpop.f32.mrb[0].mxu0
        %v2091 = vadd.f32 0.0, %v2090
        %v2092 = vpop.f32.mrb[0].mxu0
        %2093 = vmatprep.mubr.f32.mxu0 0.0
        %2094 = vmatmul.mubr.f32.gmra.mrb[0].mxu0 %v1880
        %v2095 = vpop.f32.mrb[0].mxu0
        %v2096 = vadd.f32 0.0, %v2095
        %v2097 = vpop.f32.mrb[0].mxu0
        %2098 = vmatprep.mubr.f32.mxu0 0.0
        %2099 = vmatmul.mubr.f32.gmra.mrb[0].mxu0 %v1881
        %v2100 = vpop.f32.mrb[0].mxu0
        %v2101 = vadd.f32 0.0, %v2100
        %v2102 = vpop.f32.mrb[0].mxu0
        %2103 = vmatprep.mubr.f32.mxu0 0.0
        %2104 = vmatmul.mubr.f32.gmra.mrb[0].mxu0 %v1882
        %v2105 = vpop.f32.mrb[0].mxu0
        %v2106 = vadd.f32 0.0, %v2105
        %v2107 = vpop.f32.mrb[0].mxu0
        %2108 = vmatprep.mubr.f32.mxu0 0.0
        %2109 = vmatmul.mubr.f32.gmra.mrb[0].mxu0 %v1883
        %v2110 = vpop.f32.mrb[0].mxu0
        %v2111 = vadd.f32 0.0, %v2110
        %v2112 = vpop.f32.mrb[0].mxu0
        %2113 = vmatprep.mubr.f32.mxu0 0.0
        %2114 = vmatmul.mubr.f32.gmra.mrb[0].mxu0 %v1884
        %v2115 = vpop.f32.mrb[0].mxu0
        %v2116 = vadd.f32 0.0, %v2115
        %v2117 = vpop.f32.mrb[0].mxu0
        %2118 = vmatprep.mubr.f32.mxu0 0.0
        %2119 = vmatmul.mubr.f32.gmra.mrb[0].mxu0 %v1885
        %v2120 = vpop.f32.mrb[0].mxu0
        %v2121 = vadd.f32 0.0, %v2120
        %v2122 = vpop.f32.mrb[0].mxu0
        %2123 = vmatprep.mubr.f32.mxu0 0.0
        %2124 = vmatmul.mubr.f32.gmra.mrb[0].mxu0 %v1886
        %v2125 = vpop.f32.mrb[0].mxu0
        %v2126 = vadd.f32 0.0, %v2125
        %v2127 = vpop.f32.mrb[0].mxu0
        %2128 = vdwg.mxu0
        %v2129 = vadd.f32 %v1822, %v1971
        %v2130 = vadd.f32 %v1823, %v1976
        %v2131 = vadd.f32 %v1824, %v1981
        %v2132 = vadd.f32 %v1825, %v1986
        %v2133 = vadd.f32 %v1826, %v1991
        %v2134 = vadd.f32 %v1827, %v1996
        %v2135 = vadd.f32 %v1828, %v2001
        %v2136 = vadd.f32 %v1829, %v2006
        %v2137 = vadd.f32 %v1830, %v2011
        %v2138 = vadd.f32 %v1831, %v2016
        %v2139 = vadd.f32 %v1832, %v2021
        %v2140 = vadd.f32 %v1833, %v2026
        %v2141 = vadd.f32 %v1834, %v2031
        %v2142 = vadd.f32 %v1835, %v2036
        %v2143 = vadd.f32 %v1836, %v2041
        %v2144 = vadd.f32 %v1837, %v2046
        %v2145 = vadd.f32 %v1838, %v2051
        %v2146 = vadd.f32 %v1839, %v2056
        %v2147 = vadd.f32 %v1840, %v2061
        %v2148 = vadd.f32 %v1841, %v2066
        %v2149 = vadd.f32 %v1842, %v2071
        %v2150 = vadd.f32 %v1843, %v2076
        %v2151 = vadd.f32 %v1844, %v2081
        %v2152 = vadd.f32 %v1845, %v2086
        %v2153 = vadd.f32 %v1846, %v2091
        %v2154 = vadd.f32 %v1847, %v2096
        %v2155 = vadd.f32 %v1848, %v2101
        %v2156 = vadd.f32 %v1849, %v2106
        %v2157 = vadd.f32 %v1850, %v2111
        %v2158 = vadd.f32 %v1851, %v2116
        %v2159 = vadd.f32 %v1852, %v2121
        %v2160 = vadd.f32 %v1853, %v2126
        %v2161 = vld [vmem:[%s1854 + $0x1] sm:$0xff]
        %v2162 = vld [vmem:[%s1854 + $0x9] sm:$0xff]
        %v2163 = vld [vmem:[%s1854 + $0x19] sm:$0xff]
        %v2164 = vld [vmem:[%s1854 + $0x21] sm:$0xff]
        %v2165 = vld [vmem:[%s1854 + $0x31] sm:$0xff]
        %v2166 = vld [vmem:[%s1854 + $0x39] sm:$0xff]
        %v2167 = vld [vmem:[%s1854 + $0x49] sm:$0xff]
        %v2168 = vld [vmem:[%s1854 + $0x51] sm:$0xff]
        %v2169 = vld [vmem:[%s1854 + $0x61] sm:$0xff]
        %v2170 = vld [vmem:[%s1854 + $0x69] sm:$0xff]
        %v2171 = vld [vmem:[%s1854 + $0x79] sm:$0xff]
        %v2172 = vld [vmem:[%s1854 + $0x81] sm:$0xff]
        %v2173 = vld [vmem:[%s1854 + $0x91] sm:$0xff]
        %v2174 = vld [vmem:[%s1854 + $0x99] sm:$0xff]
        %v2175 = vld [vmem:[%s1854 + $0xa9] sm:$0xff]
        %v2176 = vld [vmem:[%s1854 + $0xb1] sm:$0xff]
        %v2177 = vld [vmem:[%s1854 + $0xc1] sm:$0xff]
        %v2178 = vld [vmem:[%s1854 + $0xc9] sm:$0xff]
        %v2179 = vld [vmem:[%s1854 + $0xd9] sm:$0xff]
        %v2180 = vld [vmem:[%s1854 + $0xe1] sm:$0xff]
        %v2181 = vld [vmem:[%s1854 + $0xf1] sm:$0xff]
        %v2182 = vld [vmem:[%s1854 + $0xf9] sm:$0xff]
        %v2183 = vld [vmem:[%s1854 + $0x109] sm:$0xff]
        %v2184 = vld [vmem:[%s1854 + $0x111] sm:$0xff]
        %v2185 = vld [vmem:[%s1854 + $0x121] sm:$0xff]
        %v2186 = vld [vmem:[%s1854 + $0x129] sm:$0xff]
        %v2187 = vld [vmem:[%s1854 + $0x139] sm:$0xff]
        %v2188 = vld [vmem:[%s1854 + $0x141] sm:$0xff]
        %v2189 = vld [vmem:[%s1854 + $0x151] sm:$0xff]
        %v2190 = vld [vmem:[%s1854 + $0x159] sm:$0xff]
        %v2191 = vld [vmem:[%s1854 + $0x169] sm:$0xff]
        %v2192 = vld [vmem:[%s1854 + $0x171] sm:$0xff]
        %s2193 = scalar_lea.vmem [#allocation8], 512
        %v2194 = vld [vmem:[%s2193] sm:$0xff]
        %v2195 = vld [vmem:[%s2193 + $0x8] sm:$0xff]
        %v2196 = vld [vmem:[%s2193 + $0x10] sm:$0xff]
        %v2197 = vld [vmem:[%s2193 + $0x18] sm:$0xff]
        %v2198 = vld [vmem:[%s2193 + $0x20] sm:$0xff]
        %v2199 = vld [vmem:[%s2193 + $0x28] sm:$0xff]
        %v2200 = vld [vmem:[%s2193 + $0x30] sm:$0xff]
        %v2201 = vld [vmem:[%s2193 + $0x38] sm:$0xff]
        %v2202 = vld [vmem:[%s2193 + $0x40] sm:$0xff]
        %v2203 = vld [vmem:[%s2193 + $0x48] sm:$0xff]
        %v2204 = vld [vmem:[%s2193 + $0x50] sm:$0xff]
        %v2205 = vld [vmem:[%s2193 + $0x58] sm:$0xff]
        %v2206 = vld [vmem:[%s2193 + $0x60] sm:$0xff]
        %v2207 = vld [vmem:[%s2193 + $0x68] sm:$0xff]
        %v2208 = vld [vmem:[%s2193 + $0x70] sm:$0xff]
        %v2209 = vld [vmem:[%s2193 + $0x78] sm:$0xff]
        %2210 = vmatprep.subr.mxu0 0.0
        %2211 = vmatpush1.msra.mxu0 %v2194
        %2212 = vmatprep.subr.mxu0 0.0
        %2213 = vmatpush1.msra.mxu0 %v2195
        %2214 = vmatprep.subr.mxu0 0.0
        %2215 = vmatpush1.msra.mxu0 %v2196
        %2216 = vmatprep.subr.mxu0 0.0
        %2217 = vmatpush1.msra.mxu0 %v2197
        %2218 = vmatprep.subr.mxu0 0.0
        %2219 = vmatpush1.msra.mxu0 %v2198
        %2220 = vmatprep.subr.mxu0 0.0
        %2221 = vmatpush1.msra.mxu0 %v2199
        %2222 = vmatprep.subr.mxu0 0.0
        %2223 = vmatpush1.msra.mxu0 %v2200
        %2224 = vmatprep.subr.mxu0 0.0
        %2225 = vmatpush1.msra.mxu0 %v2201
        %2226 = vmatprep.subr.mxu0 0.0
        %2227 = vmatpush1.msra.mxu0 %v2202
        %2228 = vmatprep.subr.mxu0 0.0
        %2229 = vmatpush1.msra.mxu0 %v2203
        %2230 = vmatprep.subr.mxu0 0.0
        %2231 = vmatpush1.msra.mxu0 %v2204
        %2232 = vmatprep.subr.mxu0 0.0
        %2233 = vmatpush1.msra.mxu0 %v2205
        %2234 = vmatprep.subr.mxu0 0.0
        %2235 = vmatpush1.msra.mxu0 %v2206
        %2236 = vmatprep.subr.mxu0 0.0
        %2237 = vmatpush1.msra.mxu0 %v2207
        %2238 = vmatprep.subr.mxu0 0.0
        %2239 = vmatpush1.msra.mxu0 %v2208
        %2240 = vmatprep.subr.mxu0 0.0
        %2241 = vmatpush1.msra.mxu0 %v2209
        %2242 = vmatprep.subr.mxu0 0.0
        %2243 = vmatpush1.msra.mxu0 0.0
        %2244 = vmatprep.subr.mxu0 0.0
        %2245 = vmatpush1.msra.mxu0 0.0
        %2246 = vmatprep.subr.mxu0 0.0
        %2247 = vmatpush1.msra.mxu0 0.0
        %2248 = vmatprep.subr.mxu0 0.0
        %2249 = vmatpush1.msra.mxu0 0.0
        %2250 = vmatprep.subr.mxu0 0.0
        %2251 = vmatpush1.msra.mxu0 0.0
        %2252 = vmatprep.subr.mxu0 0.0
        %2253 = vmatpush1.msra.mxu0 0.0
        %2254 = vmatprep.subr.mxu0 0.0
        %2255 = vmatpush1.msra.mxu0 0.0
        %2256 = vmatprep.subr.mxu0 0.0
        %2257 = vmatpush1.msra.mxu0 0.0
        %2258 = vmatprep.subr.mxu0 0.0
        %2259 = vmatpush1.msra.mxu0 0.0
        %2260 = vmatprep.subr.mxu0 0.0
        %2261 = vmatpush1.msra.mxu0 0.0
        %2262 = vmatprep.subr.mxu0 0.0
        %2263 = vmatpush1.msra.mxu0 0.0
        %2264 = vmatprep.subr.mxu0 0.0
        %2265 = vmatpush1.msra.mxu0 0.0
        %2266 = vmatprep.subr.mxu0 0.0
        %2267 = vmatpush1.msra.mxu0 0.0
        %2268 = vmatprep.subr.mxu0 0.0
        %2269 = vmatpush1.msra.mxu0 0.0
        %2270 = vmatprep.subr.mxu0 0.0
        %2271 = vmatpush1.msra.mxu0 0.0
        %2272 = vmatprep.subr.mxu0 0.0
        %2273 = vmatpush1.msra.mxu0 0.0
        %2274 = vmatprep.mubr.f32.mxu0 0.0
        %2275 = vmatmul.mubr.f32.gmra.mrb[0].mxu0 %v2161
        %v2276 = vpop.f32.mrb[0].mxu0
        %v2277 = vadd.f32 0.0, %v2276
        %v2278 = vpop.f32.mrb[0].mxu0
        %2279 = vmatprep.mubr.f32.mxu0 0.0
        %2280 = vmatmul.mubr.f32.gmra.mrb[0].mxu0 %v2162
        %v2281 = vpop.f32.mrb[0].mxu0
        %v2282 = vadd.f32 0.0, %v2281
        %v2283 = vpop.f32.mrb[0].mxu0
        %2284 = vmatprep.mubr.f32.mxu0 0.0
        %2285 = vmatmul.mubr.f32.gmra.mrb[0].mxu0 %v2163
        %v2286 = vpop.f32.mrb[0].mxu0
        %v2287 = vadd.f32 0.0, %v2286
        %v2288 = vpop.f32.mrb[0].mxu0
        %2289 = vmatprep.mubr.f32.mxu0 0.0
        %2290 = vmatmul.mubr.f32.gmra.mrb[0].mxu0 %v2164
        %v2291 = vpop.f32.mrb[0].mxu0
        %v2292 = vadd.f32 0.0, %v2291
        %v2293 = vpop.f32.mrb[0].mxu0
        %2294 = vmatprep.mubr.f32.mxu0 0.0
        %2295 = vmatmul.mubr.f32.gmra.mrb[0].mxu0 %v2165
        %v2296 = vpop.f32.mrb[0].mxu0
        %v2297 = vadd.f32 0.0, %v2296
        %v2298 = vpop.f32.mrb[0].mxu0
        %2299 = vmatprep.mubr.f32.mxu0 0.0
        %2300 = vmatmul.mubr.f32.gmra.mrb[0].mxu0 %v2166
        %v2301 = vpop.f32.mrb[0].mxu0
        %v2302 = vadd.f32 0.0, %v2301
        %v2303 = vpop.f32.mrb[0].mxu0
        %2304 = vmatprep.mubr.f32.mxu0 0.0
        %2305 = vmatmul.mubr.f32.gmra.mrb[0].mxu0 %v2167
        %v2306 = vpop.f32.mrb[0].mxu0
        %v2307 = vadd.f32 0.0, %v2306
        %v2308 = vpop.f32.mrb[0].mxu0
        %2309 = vmatprep.mubr.f32.mxu0 0.0
        %2310 = vmatmul.mubr.f32.gmra.mrb[0].mxu0 %v2168
        %v2311 = vpop.f32.mrb[0].mxu0
        %v2312 = vadd.f32 0.0, %v2311
        %v2313 = vpop.f32.mrb[0].mxu0
        %2314 = vmatprep.mubr.f32.mxu0 0.0
        %2315 = vmatmul.mubr.f32.gmra.mrb[0].mxu0 %v2169
        %v2316 = vpop.f32.mrb[0].mxu0
        %v2317 = vadd.f32 0.0, %v2316
        %v2318 = vpop.f32.mrb[0].mxu0
        %2319 = vmatprep.mubr.f32.mxu0 0.0
        %2320 = vmatmul.mubr.f32.gmra.mrb[0].mxu0 %v2170
        %v2321 = vpop.f32.mrb[0].mxu0
        %v2322 = vadd.f32 0.0, %v2321
        %v2323 = vpop.f32.mrb[0].mxu0
        %2324 = vmatprep.mubr.f32.mxu0 0.0
        %2325 = vmatmul.mubr.f32.gmra.mrb[0].mxu0 %v2171
        %v2326 = vpop.f32.mrb[0].mxu0
        %v2327 = vadd.f32 0.0, %v2326
        %v2328 = vpop.f32.mrb[0].mxu0
        %2329 = vmatprep.mubr.f32.mxu0 0.0
        %2330 = vmatmul.mubr.f32.gmra.mrb[0].mxu0 %v2172
        %v2331 = vpop.f32.mrb[0].mxu0
        %v2332 = vadd.f32 0.0, %v2331
        %v2333 = vpop.f32.mrb[0].mxu0
        %2334 = vmatprep.mubr.f32.mxu0 0.0
        %2335 = vmatmul.mubr.f32.gmra.mrb[0].mxu0 %v2173
        %v2336 = vpop.f32.mrb[0].mxu0
        %v2337 = vadd.f32 0.0, %v2336
        %v2338 = vpop.f32.mrb[0].mxu0
        %2339 = vmatprep.mubr.f32.mxu0 0.0
        %2340 = vmatmul.mubr.f32.gmra.mrb[0].mxu0 %v2174
        %v2341 = vpop.f32.mrb[0].mxu0
        %v2342 = vadd.f32 0.0, %v2341
        %v2343 = vpop.f32.mrb[0].mxu0
        %2344 = vmatprep.mubr.f32.mxu0 0.0
        %2345 = vmatmul.mubr.f32.gmra.mrb[0].mxu0 %v2175
        %v2346 = vpop.f32.mrb[0].mxu0
        %v2347 = vadd.f32 0.0, %v2346
        %v2348 = vpop.f32.mrb[0].mxu0
        %2349 = vmatprep.mubr.f32.mxu0 0.0
        %2350 = vmatmul.mubr.f32.gmra.mrb[0].mxu0 %v2176
        %v2351 = vpop.f32.mrb[0].mxu0
        %v2352 = vadd.f32 0.0, %v2351
        %v2353 = vpop.f32.mrb[0].mxu0
        %2354 = vmatprep.mubr.f32.mxu0 0.0
        %2355 = vmatmul.mubr.f32.gmra.mrb[0].mxu0 %v2177
        %v2356 = vpop.f32.mrb[0].mxu0
        %v2357 = vadd.f32 0.0, %v2356
        %v2358 = vpop.f32.mrb[0].mxu0
        %2359 = vmatprep.mubr.f32.mxu0 0.0
        %2360 = vmatmul.mubr.f32.gmra.mrb[0].mxu0 %v2178
        %v2361 = vpop.f32.mrb[0].mxu0
        %v2362 = vadd.f32 0.0, %v2361
        %v2363 = vpop.f32.mrb[0].mxu0
        %2364 = vmatprep.mubr.f32.mxu0 0.0
        %2365 = vmatmul.mubr.f32.gmra.mrb[0].mxu0 %v2179
        %v2366 = vpop.f32.mrb[0].mxu0
        %v2367 = vadd.f32 0.0, %v2366
        %v2368 = vpop.f32.mrb[0].mxu0
        %2369 = vmatprep.mubr.f32.mxu0 0.0
        %2370 = vmatmul.mubr.f32.gmra.mrb[0].mxu0 %v2180
        %v2371 = vpop.f32.mrb[0].mxu0
        %v2372 = vadd.f32 0.0, %v2371
        %v2373 = vpop.f32.mrb[0].mxu0
        %2374 = vmatprep.mubr.f32.mxu0 0.0
        %2375 = vmatmul.mubr.f32.gmra.mrb[0].mxu0 %v2181
        %v2376 = vpop.f32.mrb[0].mxu0
        %v2377 = vadd.f32 0.0, %v2376
        %v2378 = vpop.f32.mrb[0].mxu0
        %2379 = vmatprep.mubr.f32.mxu0 0.0
        %2380 = vmatmul.mubr.f32.gmra.mrb[0].mxu0 %v2182
        %v2381 = vpop.f32.mrb[0].mxu0
        %v2382 = vadd.f32 0.0, %v2381
        %v2383 = vpop.f32.mrb[0].mxu0
        %2384 = vmatprep.mubr.f32.mxu0 0.0
        %2385 = vmatmul.mubr.f32.gmra.mrb[0].mxu0 %v2183
        %v2386 = vpop.f32.mrb[0].mxu0
        %v2387 = vadd.f32 0.0, %v2386
        %v2388 = vpop.f32.mrb[0].mxu0
        %2389 = vmatprep.mubr.f32.mxu0 0.0
        %2390 = vmatmul.mubr.f32.gmra.mrb[0].mxu0 %v2184
        %v2391 = vpop.f32.mrb[0].mxu0
        %v2392 = vadd.f32 0.0, %v2391
        %v2393 = vpop.f32.mrb[0].mxu0
        %2394 = vmatprep.mubr.f32.mxu0 0.0
        %2395 = vmatmul.mubr.f32.gmra.mrb[0].mxu0 %v2185
        %v2396 = vpop.f32.mrb[0].mxu0
        %v2397 = vadd.f32 0.0, %v2396
        %v2398 = vpop.f32.mrb[0].mxu0
        %2399 = vmatprep.mubr.f32.mxu0 0.0
        %2400 = vmatmul.mubr.f32.gmra.mrb[0].mxu0 %v2186
        %v2401 = vpop.f32.mrb[0].mxu0
        %v2402 = vadd.f32 0.0, %v2401
        %v2403 = vpop.f32.mrb[0].mxu0
        %2404 = vmatprep.mubr.f32.mxu0 0.0
        %2405 = vmatmul.mubr.f32.gmra.mrb[0].mxu0 %v2187
        %v2406 = vpop.f32.mrb[0].mxu0
        %v2407 = vadd.f32 0.0, %v2406
        %v2408 = vpop.f32.mrb[0].mxu0
        %2409 = vmatprep.mubr.f32.mxu0 0.0
        %2410 = vmatmul.mubr.f32.gmra.mrb[0].mxu0 %v2188
        %v2411 = vpop.f32.mrb[0].mxu0
        %v2412 = vadd.f32 0.0, %v2411
        %v2413 = vpop.f32.mrb[0].mxu0
        %2414 = vmatprep.mubr.f32.mxu0 0.0
        %2415 = vmatmul.mubr.f32.gmra.mrb[0].mxu0 %v2189
        %v2416 = vpop.f32.mrb[0].mxu0
        %v2417 = vadd.f32 0.0, %v2416
        %v2418 = vpop.f32.mrb[0].mxu0
        %2419 = vmatprep.mubr.f32.mxu0 0.0
        %2420 = vmatmul.mubr.f32.gmra.mrb[0].mxu0 %v2190
        %v2421 = vpop.f32.mrb[0].mxu0
        %v2422 = vadd.f32 0.0, %v2421
        %v2423 = vpop.f32.mrb[0].mxu0
        %2424 = vmatprep.mubr.f32.mxu0 0.0
        %2425 = vmatmul.mubr.f32.gmra.mrb[0].mxu0 %v2191
        %v2426 = vpop.f32.mrb[0].mxu0
        %v2427 = vadd.f32 0.0, %v2426
        %v2428 = vpop.f32.mrb[0].mxu0
        %2429 = vmatprep.mubr.f32.mxu0 0.0
        %2430 = vmatmul.mubr.f32.gmra.mrb[0].mxu0 %v2192
        %v2431 = vpop.f32.mrb[0].mxu0
        %v2432 = vadd.f32 0.0, %v2431
        %v2433 = vpop.f32.mrb[0].mxu0
        %2434 = vdwg.mxu0
        %v2435 = vadd.f32 %v2129, %v2277
        %v2436 = vadd.f32 %v2130, %v2282
        %v2437 = vadd.f32 %v2131, %v2287
        %v2438 = vadd.f32 %v2132, %v2292
        %v2439 = vadd.f32 %v2133, %v2297
        %v2440 = vadd.f32 %v2134, %v2302
        %v2441 = vadd.f32 %v2135, %v2307
        %v2442 = vadd.f32 %v2136, %v2312
        %v2443 = vadd.f32 %v2137, %v2317
        %v2444 = vadd.f32 %v2138, %v2322
        %v2445 = vadd.f32 %v2139, %v2327
        %v2446 = vadd.f32 %v2140, %v2332
        %v2447 = vadd.f32 %v2141, %v2337
        %v2448 = vadd.f32 %v2142, %v2342
        %v2449 = vadd.f32 %v2143, %v2347
        %v2450 = vadd.f32 %v2144, %v2352
        %v2451 = vadd.f32 %v2145, %v2357
        %v2452 = vadd.f32 %v2146, %v2362
        %v2453 = vadd.f32 %v2147, %v2367
        %v2454 = vadd.f32 %v2148, %v2372
        %v2455 = vadd.f32 %v2149, %v2377
        %v2456 = vadd.f32 %v2150, %v2382
        %v2457 = vadd.f32 %v2151, %v2387
        %v2458 = vadd.f32 %v2152, %v2392
        %v2459 = vadd.f32 %v2153, %v2397
        %v2460 = vadd.f32 %v2154, %v2402
        %v2461 = vadd.f32 %v2155, %v2407
        %v2462 = vadd.f32 %v2156, %v2412
        %v2463 = vadd.f32 %v2157, %v2417
        %v2464 = vadd.f32 %v2158, %v2422
        %v2465 = vadd.f32 %v2159, %v2427
        %v2466 = vadd.f32 %v2160, %v2432
        %v2467 = vld [vmem:[%s1854 + $0x2] sm:$0xff]
        %v2468 = vld [vmem:[%s1854 + $0xa] sm:$0xff]
        %v2469 = vld [vmem:[%s1854 + $0x1a] sm:$0xff]
        %v2470 = vld [vmem:[%s1854 + $0x22] sm:$0xff]
        %v2471 = vld [vmem:[%s1854 + $0x32] sm:$0xff]
        %v2472 = vld [vmem:[%s1854 + $0x3a] sm:$0xff]
        %v2473 = vld [vmem:[%s1854 + $0x4a] sm:$0xff]
        %v2474 = vld [vmem:[%s1854 + $0x52] sm:$0xff]
        %v2475 = vld [vmem:[%s1854 + $0x62] sm:$0xff]
        %v2476 = vld [vmem:[%s1854 + $0x6a] sm:$0xff]
        %v2477 = vld [vmem:[%s1854 + $0x7a] sm:$0xff]
        %v2478 = vld [vmem:[%s1854 + $0x82] sm:$0xff]
        %v2479 = vld [vmem:[%s1854 + $0x92] sm:$0xff]
        %v2480 = vld [vmem:[%s1854 + $0x9a] sm:$0xff]
        %v2481 = vld [vmem:[%s1854 + $0xaa] sm:$0xff]
        %v2482 = vld [vmem:[%s1854 + $0xb2] sm:$0xff]
        %v2483 = vld [vmem:[%s1854 + $0xc2] sm:$0xff]
        %v2484 = vld [vmem:[%s1854 + $0xca] sm:$0xff]
        %v2485 = vld [vmem:[%s1854 + $0xda] sm:$0xff]
        %v2486 = vld [vmem:[%s1854 + $0xe2] sm:$0xff]
        %v2487 = vld [vmem:[%s1854 + $0xf2] sm:$0xff]
        %v2488 = vld [vmem:[%s1854 + $0xfa] sm:$0xff]
        %v2489 = vld [vmem:[%s1854 + $0x10a] sm:$0xff]
        %v2490 = vld [vmem:[%s1854 + $0x112] sm:$0xff]
        %v2491 = vld [vmem:[%s1854 + $0x122] sm:$0xff]
        %v2492 = vld [vmem:[%s1854 + $0x12a] sm:$0xff]
        %v2493 = vld [vmem:[%s1854 + $0x13a] sm:$0xff]
        %v2494 = vld [vmem:[%s1854 + $0x142] sm:$0xff]
        %v2495 = vld [vmem:[%s1854 + $0x152] sm:$0xff]
        %v2496 = vld [vmem:[%s1854 + $0x15a] sm:$0xff]
        %v2497 = vld [vmem:[%s1854 + $0x16a] sm:$0xff]
        %v2498 = vld [vmem:[%s1854 + $0x172] sm:$0xff]
        %s2499 = scalar_lea.vmem [#allocation8], 640
        %v2500 = vld [vmem:[%s2499] sm:$0xff]
        %v2501 = vld [vmem:[%s2499 + $0x8] sm:$0xff]
        %v2502 = vld [vmem:[%s2499 + $0x10] sm:$0xff]
        %v2503 = vld [vmem:[%s2499 + $0x18] sm:$0xff]
        %v2504 = vld [vmem:[%s2499 + $0x20] sm:$0xff]
        %v2505 = vld [vmem:[%s2499 + $0x28] sm:$0xff]
        %v2506 = vld [vmem:[%s2499 + $0x30] sm:$0xff]
        %v2507 = vld [vmem:[%s2499 + $0x38] sm:$0xff]
        %v2508 = vld [vmem:[%s2499 + $0x40] sm:$0xff]
        %v2509 = vld [vmem:[%s2499 + $0x48] sm:$0xff]
        %v2510 = vld [vmem:[%s2499 + $0x50] sm:$0xff]
        %v2511 = vld [vmem:[%s2499 + $0x58] sm:$0xff]
        %v2512 = vld [vmem:[%s2499 + $0x60] sm:$0xff]
        %v2513 = vld [vmem:[%s2499 + $0x68] sm:$0xff]
        %v2514 = vld [vmem:[%s2499 + $0x70] sm:$0xff]
        %v2515 = vld [vmem:[%s2499 + $0x78] sm:$0xff]
        %2516 = vmatprep.subr.mxu0 0.0
        %2517 = vmatpush1.msra.mxu0 %v2500
        %2518 = vmatprep.subr.mxu0 0.0
        %2519 = vmatpush1.msra.mxu0 %v2501
        %2520 = vmatprep.subr.mxu0 0.0
        %2521 = vmatpush1.msra.mxu0 %v2502
        %2522 = vmatprep.subr.mxu0 0.0
        %2523 = vmatpush1.msra.mxu0 %v2503
        %2524 = vmatprep.subr.mxu0 0.0
        %2525 = vmatpush1.msra.mxu0 %v2504
        %2526 = vmatprep.subr.mxu0 0.0
        %2527 = vmatpush1.msra.mxu0 %v2505
        %2528 = vmatprep.subr.mxu0 0.0
        %2529 = vmatpush1.msra.mxu0 %v2506
        %2530 = vmatprep.subr.mxu0 0.0
        %2531 = vmatpush1.msra.mxu0 %v2507
        %2532 = vmatprep.subr.mxu0 0.0
        %2533 = vmatpush1.msra.mxu0 %v2508
        %2534 = vmatprep.subr.mxu0 0.0
        %2535 = vmatpush1.msra.mxu0 %v2509
        %2536 = vmatprep.subr.mxu0 0.0
        %2537 = vmatpush1.msra.mxu0 %v2510
        %2538 = vmatprep.subr.mxu0 0.0
        %2539 = vmatpush1.msra.mxu0 %v2511
        %2540 = vmatprep.subr.mxu0 0.0
        %2541 = vmatpush1.msra.mxu0 %v2512
        %2542 = vmatprep.subr.mxu0 0.0
        %2543 = vmatpush1.msra.mxu0 %v2513
        %2544 = vmatprep.subr.mxu0 0.0
        %2545 = vmatpush1.msra.mxu0 %v2514
        %2546 = vmatprep.subr.mxu0 0.0
        %2547 = vmatpush1.msra.mxu0 %v2515
        %2548 = vmatprep.subr.mxu0 0.0
        %2549 = vmatpush1.msra.mxu0 0.0
        %2550 = vmatprep.subr.mxu0 0.0
        %2551 = vmatpush1.msra.mxu0 0.0
        %2552 = vmatprep.subr.mxu0 0.0
        %2553 = vmatpush1.msra.mxu0 0.0
        %2554 = vmatprep.subr.mxu0 0.0
        %2555 = vmatpush1.msra.mxu0 0.0
        %2556 = vmatprep.subr.mxu0 0.0
        %2557 = vmatpush1.msra.mxu0 0.0
        %2558 = vmatprep.subr.mxu0 0.0
        %2559 = vmatpush1.msra.mxu0 0.0
        %2560 = vmatprep.subr.mxu0 0.0
        %2561 = vmatpush1.msra.mxu0 0.0
        %2562 = vmatprep.subr.mxu0 0.0
        %2563 = vmatpush1.msra.mxu0 0.0
        %2564 = vmatprep.subr.mxu0 0.0
        %2565 = vmatpush1.msra.mxu0 0.0
        %2566 = vmatprep.subr.mxu0 0.0
        %2567 = vmatpush1.msra.mxu0 0.0
        %2568 = vmatprep.subr.mxu0 0.0
        %2569 = vmatpush1.msra.mxu0 0.0
        %2570 = vmatprep.subr.mxu0 0.0
        %2571 = vmatpush1.msra.mxu0 0.0
        %2572 = vmatprep.subr.mxu0 0.0
        %2573 = vmatpush1.msra.mxu0 0.0
        %2574 = vmatprep.subr.mxu0 0.0
        %2575 = vmatpush1.msra.mxu0 0.0
        %2576 = vmatprep.subr.mxu0 0.0
        %2577 = vmatpush1.msra.mxu0 0.0
        %2578 = vmatprep.subr.mxu0 0.0
        %2579 = vmatpush1.msra.mxu0 0.0
        %2580 = vmatprep.mubr.f32.mxu0 0.0
        %2581 = vmatmul.mubr.f32.gmra.mrb[0].mxu0 %v2467
        %v2582 = vpop.f32.mrb[0].mxu0
        %v2583 = vadd.f32 0.0, %v2582
        %v2584 = vpop.f32.mrb[0].mxu0
        %2585 = vmatprep.mubr.f32.mxu0 0.0
        %2586 = vmatmul.mubr.f32.gmra.mrb[0].mxu0 %v2468
        %v2587 = vpop.f32.mrb[0].mxu0
        %v2588 = vadd.f32 0.0, %v2587
        %v2589 = vpop.f32.mrb[0].mxu0
        %2590 = vmatprep.mubr.f32.mxu0 0.0
        %2591 = vmatmul.mubr.f32.gmra.mrb[0].mxu0 %v2469
        %v2592 = vpop.f32.mrb[0].mxu0
        %v2593 = vadd.f32 0.0, %v2592
        %v2594 = vpop.f32.mrb[0].mxu0
        %2595 = vmatprep.mubr.f32.mxu0 0.0
        %2596 = vmatmul.mubr.f32.gmra.mrb[0].mxu0 %v2470
        %v2597 = vpop.f32.mrb[0].mxu0
        %v2598 = vadd.f32 0.0, %v2597
        %v2599 = vpop.f32.mrb[0].mxu0
        %2600 = vmatprep.mubr.f32.mxu0 0.0
        %2601 = vmatmul.mubr.f32.gmra.mrb[0].mxu0 %v2471
        %v2602 = vpop.f32.mrb[0].mxu0
        %v2603 = vadd.f32 0.0, %v2602
        %v2604 = vpop.f32.mrb[0].mxu0
        %2605 = vmatprep.mubr.f32.mxu0 0.0
        %2606 = vmatmul.mubr.f32.gmra.mrb[0].mxu0 %v2472
        %v2607 = vpop.f32.mrb[0].mxu0
        %v2608 = vadd.f32 0.0, %v2607
        %v2609 = vpop.f32.mrb[0].mxu0
        %2610 = vmatprep.mubr.f32.mxu0 0.0
        %2611 = vmatmul.mubr.f32.gmra.mrb[0].mxu0 %v2473
        %v2612 = vpop.f32.mrb[0].mxu0
        %v2613 = vadd.f32 0.0, %v2612
        %v2614 = vpop.f32.mrb[0].mxu0
        %2615 = vmatprep.mubr.f32.mxu0 0.0
        %2616 = vmatmul.mubr.f32.gmra.mrb[0].mxu0 %v2474
        %v2617 = vpop.f32.mrb[0].mxu0
        %v2618 = vadd.f32 0.0, %v2617
        %v2619 = vpop.f32.mrb[0].mxu0
        %2620 = vmatprep.mubr.f32.mxu0 0.0
        %2621 = vmatmul.mubr.f32.gmra.mrb[0].mxu0 %v2475
        %v2622 = vpop.f32.mrb[0].mxu0
        %v2623 = vadd.f32 0.0, %v2622
        %v2624 = vpop.f32.mrb[0].mxu0
        %2625 = vmatprep.mubr.f32.mxu0 0.0
        %2626 = vmatmul.mubr.f32.gmra.mrb[0].mxu0 %v2476
        %v2627 = vpop.f32.mrb[0].mxu0
        %v2628 = vadd.f32 0.0, %v2627
        %v2629 = vpop.f32.mrb[0].mxu0
        %2630 = vmatprep.mubr.f32.mxu0 0.0
        %2631 = vmatmul.mubr.f32.gmra.mrb[0].mxu0 %v2477
        %v2632 = vpop.f32.mrb[0].mxu0
        %v2633 = vadd.f32 0.0, %v2632
        %v2634 = vpop.f32.mrb[0].mxu0
        %2635 = vmatprep.mubr.f32.mxu0 0.0
        %2636 = vmatmul.mubr.f32.gmra.mrb[0].mxu0 %v2478
        %v2637 = vpop.f32.mrb[0].mxu0
        %v2638 = vadd.f32 0.0, %v2637
        %v2639 = vpop.f32.mrb[0].mxu0
        %2640 = vmatprep.mubr.f32.mxu0 0.0
        %2641 = vmatmul.mubr.f32.gmra.mrb[0].mxu0 %v2479
        %v2642 = vpop.f32.mrb[0].mxu0
        %v2643 = vadd.f32 0.0, %v2642
        %v2644 = vpop.f32.mrb[0].mxu0
        %2645 = vmatprep.mubr.f32.mxu0 0.0
        %2646 = vmatmul.mubr.f32.gmra.mrb[0].mxu0 %v2480
        %v2647 = vpop.f32.mrb[0].mxu0
        %v2648 = vadd.f32 0.0, %v2647
        %v2649 = vpop.f32.mrb[0].mxu0
        %2650 = vmatprep.mubr.f32.mxu0 0.0
        %2651 = vmatmul.mubr.f32.gmra.mrb[0].mxu0 %v2481
        %v2652 = vpop.f32.mrb[0].mxu0
        %v2653 = vadd.f32 0.0, %v2652
        %v2654 = vpop.f32.mrb[0].mxu0
        %2655 = vmatprep.mubr.f32.mxu0 0.0
        %2656 = vmatmul.mubr.f32.gmra.mrb[0].mxu0 %v2482
        %v2657 = vpop.f32.mrb[0].mxu0
        %v2658 = vadd.f32 0.0, %v2657
        %v2659 = vpop.f32.mrb[0].mxu0
        %2660 = vmatprep.mubr.f32.mxu0 0.0
        %2661 = vmatmul.mubr.f32.gmra.mrb[0].mxu0 %v2483
        %v2662 = vpop.f32.mrb[0].mxu0
        %v2663 = vadd.f32 0.0, %v2662
        %v2664 = vpop.f32.mrb[0].mxu0
        %2665 = vmatprep.mubr.f32.mxu0 0.0
        %2666 = vmatmul.mubr.f32.gmra.mrb[0].mxu0 %v2484
        %v2667 = vpop.f32.mrb[0].mxu0
        %v2668 = vadd.f32 0.0, %v2667
        %v2669 = vpop.f32.mrb[0].mxu0
        %2670 = vmatprep.mubr.f32.mxu0 0.0
        %2671 = vmatmul.mubr.f32.gmra.mrb[0].mxu0 %v2485
        %v2672 = vpop.f32.mrb[0].mxu0
        %v2673 = vadd.f32 0.0, %v2672
        %v2674 = vpop.f32.mrb[0].mxu0
        %2675 = vmatprep.mubr.f32.mxu0 0.0
        %2676 = vmatmul.mubr.f32.gmra.mrb[0].mxu0 %v2486
        %v2677 = vpop.f32.mrb[0].mxu0
        %v2678 = vadd.f32 0.0, %v2677
        %v2679 = vpop.f32.mrb[0].mxu0
        %2680 = vmatprep.mubr.f32.mxu0 0.0
        %2681 = vmatmul.mubr.f32.gmra.mrb[0].mxu0 %v2487
        %v2682 = vpop.f32.mrb[0].mxu0
        %v2683 = vadd.f32 0.0, %v2682
        %v2684 = vpop.f32.mrb[0].mxu0
        %2685 = vmatprep.mubr.f32.mxu0 0.0
        %2686 = vmatmul.mubr.f32.gmra.mrb[0].mxu0 %v2488
        %v2687 = vpop.f32.mrb[0].mxu0
        %v2688 = vadd.f32 0.0, %v2687
        %v2689 = vpop.f32.mrb[0].mxu0
        %2690 = vmatprep.mubr.f32.mxu0 0.0
        %2691 = vmatmul.mubr.f32.gmra.mrb[0].mxu0 %v2489
        %v2692 = vpop.f32.mrb[0].mxu0
        %v2693 = vadd.f32 0.0, %v2692
        %v2694 = vpop.f32.mrb[0].mxu0
        %2695 = vmatprep.mubr.f32.mxu0 0.0
        %2696 = vmatmul.mubr.f32.gmra.mrb[0].mxu0 %v2490
        %v2697 = vpop.f32.mrb[0].mxu0
        %v2698 = vadd.f32 0.0, %v2697
        %v2699 = vpop.f32.mrb[0].mxu0
        %2700 = vmatprep.mubr.f32.mxu0 0.0
        %2701 = vmatmul.mubr.f32.gmra.mrb[0].mxu0 %v2491
        %v2702 = vpop.f32.mrb[0].mxu0
        %v2703 = vadd.f32 0.0, %v2702
        %v2704 = vpop.f32.mrb[0].mxu0
        %2705 = vmatprep.mubr.f32.mxu0 0.0
        %2706 = vmatmul.mubr.f32.gmra.mrb[0].mxu0 %v2492
        %v2707 = vpop.f32.mrb[0].mxu0
        %v2708 = vadd.f32 0.0, %v2707
        %v2709 = vpop.f32.mrb[0].mxu0
        %2710 = vmatprep.mubr.f32.mxu0 0.0
        %2711 = vmatmul.mubr.f32.gmra.mrb[0].mxu0 %v2493
        %v2712 = vpop.f32.mrb[0].mxu0
        %v2713 = vadd.f32 0.0, %v2712
        %v2714 = vpop.f32.mrb[0].mxu0
        %2715 = vmatprep.mubr.f32.mxu0 0.0
        %2716 = vmatmul.mubr.f32.gmra.mrb[0].mxu0 %v2494
        %v2717 = vpop.f32.mrb[0].mxu0
        %v2718 = vadd.f32 0.0, %v2717
        %v2719 = vpop.f32.mrb[0].mxu0
        %2720 = vmatprep.mubr.f32.mxu0 0.0
        %2721 = vmatmul.mubr.f32.gmra.mrb[0].mxu0 %v2495
        %v2722 = vpop.f32.mrb[0].mxu0
        %v2723 = vadd.f32 0.0, %v2722
        %v2724 = vpop.f32.mrb[0].mxu0
        %2725 = vmatprep.mubr.f32.mxu0 0.0
        %2726 = vmatmul.mubr.f32.gmra.mrb[0].mxu0 %v2496
        %v2727 = vpop.f32.mrb[0].mxu0
        %v2728 = vadd.f32 0.0, %v2727
        %v2729 = vpop.f32.mrb[0].mxu0
        %2730 = vmatprep.mubr.f32.mxu0 0.0
        %2731 = vmatmul.mubr.f32.gmra.mrb[0].mxu0 %v2497
        %v2732 = vpop.f32.mrb[0].mxu0
        %v2733 = vadd.f32 0.0, %v2732
        %v2734 = vpop.f32.mrb[0].mxu0
        %2735 = vmatprep.mubr.f32.mxu0 0.0
        %2736 = vmatmul.mubr.f32.gmra.mrb[0].mxu0 %v2498
        %v2737 = vpop.f32.mrb[0].mxu0
        %v2738 = vadd.f32 0.0, %v2737
        %v2739 = vpop.f32.mrb[0].mxu0
        %2740 = vdwg.mxu0
        %v2741 = vadd.f32 %v2435, %v2583
        %v2742 = vadd.f32 %v2436, %v2588
        %v2743 = vadd.f32 %v2437, %v2593
        %v2744 = vadd.f32 %v2438, %v2598
        %v2745 = vadd.f32 %v2439, %v2603
        %v2746 = vadd.f32 %v2440, %v2608
        %v2747 = vadd.f32 %v2441, %v2613
        %v2748 = vadd.f32 %v2442, %v2618
        %v2749 = vadd.f32 %v2443, %v2623
        %v2750 = vadd.f32 %v2444, %v2628
        %v2751 = vadd.f32 %v2445, %v2633
        %v2752 = vadd.f32 %v2446, %v2638
        %v2753 = vadd.f32 %v2447, %v2643
        %v2754 = vadd.f32 %v2448, %v2648
        %v2755 = vadd.f32 %v2449, %v2653
        %v2756 = vadd.f32 %v2450, %v2658
        %v2757 = vadd.f32 %v2451, %v2663
        %v2758 = vadd.f32 %v2452, %v2668
        %v2759 = vadd.f32 %v2453, %v2673
        %v2760 = vadd.f32 %v2454, %v2678
        %v2761 = vadd.f32 %v2455, %v2683
        %v2762 = vadd.f32 %v2456, %v2688
        %v2763 = vadd.f32 %v2457, %v2693
        %v2764 = vadd.f32 %v2458, %v2698
        %v2765 = vadd.f32 %v2459, %v2703
        %v2766 = vadd.f32 %v2460, %v2708
        %v2767 = vadd.f32 %v2461, %v2713
        %v2768 = vadd.f32 %v2462, %v2718
        %v2769 = vadd.f32 %v2463, %v2723
        %v2770 = vadd.f32 %v2464, %v2728
        %v2771 = vadd.f32 %v2465, %v2733
        %v2772 = vadd.f32 %v2466, %v2738
        %s2773 = scalar_lea.vmem [#allocation2], 48
        %v2774 = vld [vmem:[%s2773] sm:$0xff]
        %v2775 = vld [vmem:[%s2773 + $0x8] sm:$0xff]
        %v2776 = vld [vmem:[%s2773 + $0x18] sm:$0xff]
        %v2777 = vld [vmem:[%s2773 + $0x20] sm:$0xff]
        %v2778 = vld [vmem:[%s2773 + $0x30] sm:$0xff]
        %v2779 = vld [vmem:[%s2773 + $0x38] sm:$0xff]
        %v2780 = vld [vmem:[%s2773 + $0x48] sm:$0xff]
        %v2781 = vld [vmem:[%s2773 + $0x50] sm:$0xff]
        %v2782 = vld [vmem:[%s2773 + $0x60] sm:$0xff]
        %v2783 = vld [vmem:[%s2773 + $0x68] sm:$0xff]
        %v2784 = vld [vmem:[%s2773 + $0x78] sm:$0xff]
        %v2785 = vld [vmem:[%s2773 + $0x80] sm:$0xff]
        %v2786 = vld [vmem:[%s2773 + $0x90] sm:$0xff]
        %v2787 = vld [vmem:[%s2773 + $0x98] sm:$0xff]
        %v2788 = vld [vmem:[%s2773 + $0xa8] sm:$0xff]
        %v2789 = vld [vmem:[%s2773 + $0xb0] sm:$0xff]
        %v2790 = vld [vmem:[%s2773 + $0xc0] sm:$0xff]
        %v2791 = vld [vmem:[%s2773 + $0xc8] sm:$0xff]
        %v2792 = vld [vmem:[%s2773 + $0xd8] sm:$0xff]
        %v2793 = vld [vmem:[%s2773 + $0xe0] sm:$0xff]
        %v2794 = vld [vmem:[%s2773 + $0xf0] sm:$0xff]
        %v2795 = vld [vmem:[%s2773 + $0xf8] sm:$0xff]
        %v2796 = vld [vmem:[%s2773 + $0x108] sm:$0xff]
        %v2797 = vld [vmem:[%s2773 + $0x110] sm:$0xff]
        %v2798 = vld [vmem:[%s2773 + $0x120] sm:$0xff]
        %v2799 = vld [vmem:[%s2773 + $0x128] sm:$0xff]
        %v2800 = vld [vmem:[%s2773 + $0x138] sm:$0xff]
        %v2801 = vld [vmem:[%s2773 + $0x140] sm:$0xff]
        %v2802 = vld [vmem:[%s2773 + $0x150] sm:$0xff]
        %v2803 = vld [vmem:[%s2773 + $0x158] sm:$0xff]
        %v2804 = vld [vmem:[%s2773 + $0x168] sm:$0xff]
        %v2805 = vld [vmem:[%s2773 + $0x170] sm:$0xff]
        %s2806 = scalar_lea.vmem [#allocation8], 768
        %v2807 = vld [vmem:[%s2806] sm:$0xff]
        %v2808 = vld [vmem:[%s2806 + $0x8] sm:$0xff]
        %v2809 = vld [vmem:[%s2806 + $0x10] sm:$0xff]
        %v2810 = vld [vmem:[%s2806 + $0x18] sm:$0xff]
        %v2811 = vld [vmem:[%s2806 + $0x20] sm:$0xff]
        %v2812 = vld [vmem:[%s2806 + $0x28] sm:$0xff]
        %v2813 = vld [vmem:[%s2806 + $0x30] sm:$0xff]
        %v2814 = vld [vmem:[%s2806 + $0x38] sm:$0xff]
        %v2815 = vld [vmem:[%s2806 + $0x40] sm:$0xff]
        %v2816 = vld [vmem:[%s2806 + $0x48] sm:$0xff]
        %v2817 = vld [vmem:[%s2806 + $0x50] sm:$0xff]
        %v2818 = vld [vmem:[%s2806 + $0x58] sm:$0xff]
        %v2819 = vld [vmem:[%s2806 + $0x60] sm:$0xff]
        %v2820 = vld [vmem:[%s2806 + $0x68] sm:$0xff]
        %v2821 = vld [vmem:[%s2806 + $0x70] sm:$0xff]
        %v2822 = vld [vmem:[%s2806 + $0x78] sm:$0xff]
        %2823 = vmatprep.subr.mxu0 0.0
        %2824 = vmatpush1.msra.mxu0 %v2807
        %2825 = vmatprep.subr.mxu0 0.0
        %2826 = vmatpush1.msra.mxu0 %v2808
        %2827 = vmatprep.subr.mxu0 0.0
        %2828 = vmatpush1.msra.mxu0 %v2809
        %2829 = vmatprep.subr.mxu0 0.0
        %2830 = vmatpush1.msra.mxu0 %v2810
        %2831 = vmatprep.subr.mxu0 0.0
        %2832 = vmatpush1.msra.mxu0 %v2811
        %2833 = vmatprep.subr.mxu0 0.0
        %2834 = vmatpush1.msra.mxu0 %v2812
        %2835 = vmatprep.subr.mxu0 0.0
        %2836 = vmatpush1.msra.mxu0 %v2813
        %2837 = vmatprep.subr.mxu0 0.0
        %2838 = vmatpush1.msra.mxu0 %v2814
        %2839 = vmatprep.subr.mxu0 0.0
        %2840 = vmatpush1.msra.mxu0 %v2815
        %2841 = vmatprep.subr.mxu0 0.0
        %2842 = vmatpush1.msra.mxu0 %v2816
        %2843 = vmatprep.subr.mxu0 0.0
        %2844 = vmatpush1.msra.mxu0 %v2817
        %2845 = vmatprep.subr.mxu0 0.0
        %2846 = vmatpush1.msra.mxu0 %v2818
        %2847 = vmatprep.subr.mxu0 0.0
        %2848 = vmatpush1.msra.mxu0 %v2819
        %2849 = vmatprep.subr.mxu0 0.0
        %2850 = vmatpush1.msra.mxu0 %v2820
        %2851 = vmatprep.subr.mxu0 0.0
        %2852 = vmatpush1.msra.mxu0 %v2821
        %2853 = vmatprep.subr.mxu0 0.0
        %2854 = vmatpush1.msra.mxu0 %v2822
        %2855 = vmatprep.subr.mxu0 0.0
        %2856 = vmatpush1.msra.mxu0 0.0
        %2857 = vmatprep.subr.mxu0 0.0
        %2858 = vmatpush1.msra.mxu0 0.0
        %2859 = vmatprep.subr.mxu0 0.0
        %2860 = vmatpush1.msra.mxu0 0.0
        %2861 = vmatprep.subr.mxu0 0.0
        %2862 = vmatpush1.msra.mxu0 0.0
        %2863 = vmatprep.subr.mxu0 0.0
        %2864 = vmatpush1.msra.mxu0 0.0
        %2865 = vmatprep.subr.mxu0 0.0
        %2866 = vmatpush1.msra.mxu0 0.0
        %2867 = vmatprep.subr.mxu0 0.0
        %2868 = vmatpush1.msra.mxu0 0.0
        %2869 = vmatprep.subr.mxu0 0.0
        %2870 = vmatpush1.msra.mxu0 0.0
        %2871 = vmatprep.subr.mxu0 0.0
        %2872 = vmatpush1.msra.mxu0 0.0
        %2873 = vmatprep.subr.mxu0 0.0
        %2874 = vmatpush1.msra.mxu0 0.0
        %2875 = vmatprep.subr.mxu0 0.0
        %2876 = vmatpush1.msra.mxu0 0.0
        %2877 = vmatprep.subr.mxu0 0.0
        %2878 = vmatpush1.msra.mxu0 0.0
        %2879 = vmatprep.subr.mxu0 0.0
        %2880 = vmatpush1.msra.mxu0 0.0
        %2881 = vmatprep.subr.mxu0 0.0
        %2882 = vmatpush1.msra.mxu0 0.0
        %2883 = vmatprep.subr.mxu0 0.0
        %2884 = vmatpush1.msra.mxu0 0.0
        %2885 = vmatprep.subr.mxu0 0.0
        %2886 = vmatpush1.msra.mxu0 0.0
        %2887 = vmatprep.mubr.f32.mxu0 0.0
        %2888 = vmatmul.mubr.f32.gmra.mrb[0].mxu0 %v2774
        %v2889 = vpop.f32.mrb[0].mxu0
        %v2890 = vadd.f32 0.0, %v2889
        %v2891 = vpop.f32.mrb[0].mxu0
        %2892 = vmatprep.mubr.f32.mxu0 0.0
        %2893 = vmatmul.mubr.f32.gmra.mrb[0].mxu0 %v2775
        %v2894 = vpop.f32.mrb[0].mxu0
        %v2895 = vadd.f32 0.0, %v2894
        %v2896 = vpop.f32.mrb[0].mxu0
        %2897 = vmatprep.mubr.f32.mxu0 0.0
        %2898 = vmatmul.mubr.f32.gmra.mrb[0].mxu0 %v2776
        %v2899 = vpop.f32.mrb[0].mxu0
        %v2900 = vadd.f32 0.0, %v2899
        %v2901 = vpop.f32.mrb[0].mxu0
        %2902 = vmatprep.mubr.f32.mxu0 0.0
        %2903 = vmatmul.mubr.f32.gmra.mrb[0].mxu0 %v2777
        %v2904 = vpop.f32.mrb[0].mxu0
        %v2905 = vadd.f32 0.0, %v2904
        %v2906 = vpop.f32.mrb[0].mxu0
        %2907 = vmatprep.mubr.f32.mxu0 0.0
        %2908 = vmatmul.mubr.f32.gmra.mrb[0].mxu0 %v2778
        %v2909 = vpop.f32.mrb[0].mxu0
        %v2910 = vadd.f32 0.0, %v2909
        %v2911 = vpop.f32.mrb[0].mxu0
        %2912 = vmatprep.mubr.f32.mxu0 0.0
        %2913 = vmatmul.mubr.f32.gmra.mrb[0].mxu0 %v2779
        %v2914 = vpop.f32.mrb[0].mxu0
        %v2915 = vadd.f32 0.0, %v2914
        %v2916 = vpop.f32.mrb[0].mxu0
        %2917 = vmatprep.mubr.f32.mxu0 0.0
        %2918 = vmatmul.mubr.f32.gmra.mrb[0].mxu0 %v2780
        %v2919 = vpop.f32.mrb[0].mxu0
        %v2920 = vadd.f32 0.0, %v2919
        %v2921 = vpop.f32.mrb[0].mxu0
        %2922 = vmatprep.mubr.f32.mxu0 0.0
        %2923 = vmatmul.mubr.f32.gmra.mrb[0].mxu0 %v2781
        %v2924 = vpop.f32.mrb[0].mxu0
        %v2925 = vadd.f32 0.0, %v2924
        %v2926 = vpop.f32.mrb[0].mxu0
        %2927 = vmatprep.mubr.f32.mxu0 0.0
        %2928 = vmatmul.mubr.f32.gmra.mrb[0].mxu0 %v2782
        %v2929 = vpop.f32.mrb[0].mxu0
        %v2930 = vadd.f32 0.0, %v2929
        %v2931 = vpop.f32.mrb[0].mxu0
        %2932 = vmatprep.mubr.f32.mxu0 0.0
        %2933 = vmatmul.mubr.f32.gmra.mrb[0].mxu0 %v2783
        %v2934 = vpop.f32.mrb[0].mxu0
        %v2935 = vadd.f32 0.0, %v2934
        %v2936 = vpop.f32.mrb[0].mxu0
        %2937 = vmatprep.mubr.f32.mxu0 0.0
        %2938 = vmatmul.mubr.f32.gmra.mrb[0].mxu0 %v2784
        %v2939 = vpop.f32.mrb[0].mxu0
        %v2940 = vadd.f32 0.0, %v2939
        %v2941 = vpop.f32.mrb[0].mxu0
        %2942 = vmatprep.mubr.f32.mxu0 0.0
        %2943 = vmatmul.mubr.f32.gmra.mrb[0].mxu0 %v2785
        %v2944 = vpop.f32.mrb[0].mxu0
        %v2945 = vadd.f32 0.0, %v2944
        %v2946 = vpop.f32.mrb[0].mxu0
        %2947 = vmatprep.mubr.f32.mxu0 0.0
        %2948 = vmatmul.mubr.f32.gmra.mrb[0].mxu0 %v2786
        %v2949 = vpop.f32.mrb[0].mxu0
        %v2950 = vadd.f32 0.0, %v2949
        %v2951 = vpop.f32.mrb[0].mxu0
        %2952 = vmatprep.mubr.f32.mxu0 0.0
        %2953 = vmatmul.mubr.f32.gmra.mrb[0].mxu0 %v2787
        %v2954 = vpop.f32.mrb[0].mxu0
        %v2955 = vadd.f32 0.0, %v2954
        %v2956 = vpop.f32.mrb[0].mxu0
        %2957 = vmatprep.mubr.f32.mxu0 0.0
        %2958 = vmatmul.mubr.f32.gmra.mrb[0].mxu0 %v2788
        %v2959 = vpop.f32.mrb[0].mxu0
        %v2960 = vadd.f32 0.0, %v2959
        %v2961 = vpop.f32.mrb[0].mxu0
        %2962 = vmatprep.mubr.f32.mxu0 0.0
        %2963 = vmatmul.mubr.f32.gmra.mrb[0].mxu0 %v2789
        %v2964 = vpop.f32.mrb[0].mxu0
        %v2965 = vadd.f32 0.0, %v2964
        %v2966 = vpop.f32.mrb[0].mxu0
        %2967 = vmatprep.mubr.f32.mxu0 0.0
        %2968 = vmatmul.mubr.f32.gmra.mrb[0].mxu0 %v2790
        %v2969 = vpop.f32.mrb[0].mxu0
        %v2970 = vadd.f32 0.0, %v2969
        %v2971 = vpop.f32.mrb[0].mxu0
        %2972 = vmatprep.mubr.f32.mxu0 0.0
        %2973 = vmatmul.mubr.f32.gmra.mrb[0].mxu0 %v2791
        %v2974 = vpop.f32.mrb[0].mxu0
        %v2975 = vadd.f32 0.0, %v2974
        %v2976 = vpop.f32.mrb[0].mxu0
        %2977 = vmatprep.mubr.f32.mxu0 0.0
        %2978 = vmatmul.mubr.f32.gmra.mrb[0].mxu0 %v2792
        %v2979 = vpop.f32.mrb[0].mxu0
        %v2980 = vadd.f32 0.0, %v2979
        %v2981 = vpop.f32.mrb[0].mxu0
        %2982 = vmatprep.mubr.f32.mxu0 0.0
        %2983 = vmatmul.mubr.f32.gmra.mrb[0].mxu0 %v2793
        %v2984 = vpop.f32.mrb[0].mxu0
        %v2985 = vadd.f32 0.0, %v2984
        %v2986 = vpop.f32.mrb[0].mxu0
        %2987 = vmatprep.mubr.f32.mxu0 0.0
        %2988 = vmatmul.mubr.f32.gmra.mrb[0].mxu0 %v2794
        %v2989 = vpop.f32.mrb[0].mxu0
        %v2990 = vadd.f32 0.0, %v2989
        %v2991 = vpop.f32.mrb[0].mxu0
        %2992 = vmatprep.mubr.f32.mxu0 0.0
        %2993 = vmatmul.mubr.f32.gmra.mrb[0].mxu0 %v2795
        %v2994 = vpop.f32.mrb[0].mxu0
        %v2995 = vadd.f32 0.0, %v2994
        %v2996 = vpop.f32.mrb[0].mxu0
        %2997 = vmatprep.mubr.f32.mxu0 0.0
        %2998 = vmatmul.mubr.f32.gmra.mrb[0].mxu0 %v2796
        %v2999 = vpop.f32.mrb[0].mxu0
        %v3000 = vadd.f32 0.0, %v2999
        %v3001 = vpop.f32.mrb[0].mxu0
        %3002 = vmatprep.mubr.f32.mxu0 0.0
        %3003 = vmatmul.mubr.f32.gmra.mrb[0].mxu0 %v2797
        %v3004 = vpop.f32.mrb[0].mxu0
        %v3005 = vadd.f32 0.0, %v3004
        %v3006 = vpop.f32.mrb[0].mxu0
        %3007 = vmatprep.mubr.f32.mxu0 0.0
        %3008 = vmatmul.mubr.f32.gmra.mrb[0].mxu0 %v2798
        %v3009 = vpop.f32.mrb[0].mxu0
        %v3010 = vadd.f32 0.0, %v3009
        %v3011 = vpop.f32.mrb[0].mxu0
        %3012 = vmatprep.mubr.f32.mxu0 0.0
        %3013 = vmatmul.mubr.f32.gmra.mrb[0].mxu0 %v2799
        %v3014 = vpop.f32.mrb[0].mxu0
        %v3015 = vadd.f32 0.0, %v3014
        %v3016 = vpop.f32.mrb[0].mxu0
        %3017 = vmatprep.mubr.f32.mxu0 0.0
        %3018 = vmatmul.mubr.f32.gmra.mrb[0].mxu0 %v2800
        %v3019 = vpop.f32.mrb[0].mxu0
        %v3020 = vadd.f32 0.0, %v3019
        %v3021 = vpop.f32.mrb[0].mxu0
        %3022 = vmatprep.mubr.f32.mxu0 0.0
        %3023 = vmatmul.mubr.f32.gmra.mrb[0].mxu0 %v2801
        %v3024 = vpop.f32.mrb[0].mxu0
        %v3025 = vadd.f32 0.0, %v3024
        %v3026 = vpop.f32.mrb[0].mxu0
        %3027 = vmatprep.mubr.f32.mxu0 0.0
        %3028 = vmatmul.mubr.f32.gmra.mrb[0].mxu0 %v2802
        %v3029 = vpop.f32.mrb[0].mxu0
        %v3030 = vadd.f32 0.0, %v3029
        %v3031 = vpop.f32.mrb[0].mxu0
        %3032 = vmatprep.mubr.f32.mxu0 0.0
        %3033 = vmatmul.mubr.f32.gmra.mrb[0].mxu0 %v2803
        %v3034 = vpop.f32.mrb[0].mxu0
        %v3035 = vadd.f32 0.0, %v3034
        %v3036 = vpop.f32.mrb[0].mxu0
        %3037 = vmatprep.mubr.f32.mxu0 0.0
        %3038 = vmatmul.mubr.f32.gmra.mrb[0].mxu0 %v2804
        %v3039 = vpop.f32.mrb[0].mxu0
        %v3040 = vadd.f32 0.0, %v3039
        %v3041 = vpop.f32.mrb[0].mxu0
        %3042 = vmatprep.mubr.f32.mxu0 0.0
        %3043 = vmatmul.mubr.f32.gmra.mrb[0].mxu0 %v2805
        %v3044 = vpop.f32.mrb[0].mxu0
        %v3045 = vadd.f32 0.0, %v3044
        %v3046 = vpop.f32.mrb[0].mxu0
        %3047 = vdwg.mxu0
        %v3048 = vadd.f32 %v2741, %v2890
        %v3049 = vadd.f32 %v2742, %v2895
        %v3050 = vadd.f32 %v2743, %v2900
        %v3051 = vadd.f32 %v2744, %v2905
        %v3052 = vadd.f32 %v2745, %v2910
        %v3053 = vadd.f32 %v2746, %v2915
        %v3054 = vadd.f32 %v2747, %v2920
        %v3055 = vadd.f32 %v2748, %v2925
        %v3056 = vadd.f32 %v2749, %v2930
        %v3057 = vadd.f32 %v2750, %v2935
        %v3058 = vadd.f32 %v2751, %v2940
        %v3059 = vadd.f32 %v2752, %v2945
        %v3060 = vadd.f32 %v2753, %v2950
        %v3061 = vadd.f32 %v2754, %v2955
        %v3062 = vadd.f32 %v2755, %v2960
        %v3063 = vadd.f32 %v2756, %v2965
        %v3064 = vadd.f32 %v2757, %v2970
        %v3065 = vadd.f32 %v2758, %v2975
        %v3066 = vadd.f32 %v2759, %v2980
        %v3067 = vadd.f32 %v2760, %v2985
        %v3068 = vadd.f32 %v2761, %v2990
        %v3069 = vadd.f32 %v2762, %v2995
        %v3070 = vadd.f32 %v2763, %v3000
        %v3071 = vadd.f32 %v2764, %v3005
        %v3072 = vadd.f32 %v2765, %v3010
        %v3073 = vadd.f32 %v2766, %v3015
        %v3074 = vadd.f32 %v2767, %v3020
        %v3075 = vadd.f32 %v2768, %v3025
        %v3076 = vadd.f32 %v2769, %v3030
        %v3077 = vadd.f32 %v2770, %v3035
        %v3078 = vadd.f32 %v2771, %v3040
        %v3079 = vadd.f32 %v2772, %v3045
        %v3080 = vld [vmem:[%s2773 + $0x1] sm:$0xff]
        %v3081 = vld [vmem:[%s2773 + $0x9] sm:$0xff]
        %v3082 = vld [vmem:[%s2773 + $0x19] sm:$0xff]
        %v3083 = vld [vmem:[%s2773 + $0x21] sm:$0xff]
        %v3084 = vld [vmem:[%s2773 + $0x31] sm:$0xff]
        %v3085 = vld [vmem:[%s2773 + $0x39] sm:$0xff]
        %v3086 = vld [vmem:[%s2773 + $0x49] sm:$0xff]
        %v3087 = vld [vmem:[%s2773 + $0x51] sm:$0xff]
        %v3088 = vld [vmem:[%s2773 + $0x61] sm:$0xff]
        %v3089 = vld [vmem:[%s2773 + $0x69] sm:$0xff]
        %v3090 = vld [vmem:[%s2773 + $0x79] sm:$0xff]
        %v3091 = vld [vmem:[%s2773 + $0x81] sm:$0xff]
        %v3092 = vld [vmem:[%s2773 + $0x91] sm:$0xff]
        %v3093 = vld [vmem:[%s2773 + $0x99] sm:$0xff]
        %v3094 = vld [vmem:[%s2773 + $0xa9] sm:$0xff]
        %v3095 = vld [vmem:[%s2773 + $0xb1] sm:$0xff]
        %v3096 = vld [vmem:[%s2773 + $0xc1] sm:$0xff]
        %v3097 = vld [vmem:[%s2773 + $0xc9] sm:$0xff]
        %v3098 = vld [vmem:[%s2773 + $0xd9] sm:$0xff]
        %v3099 = vld [vmem:[%s2773 + $0xe1] sm:$0xff]
        %v3100 = vld [vmem:[%s2773 + $0xf1] sm:$0xff]
        %v3101 = vld [vmem:[%s2773 + $0xf9] sm:$0xff]
        %v3102 = vld [vmem:[%s2773 + $0x109] sm:$0xff]
        %v3103 = vld [vmem:[%s2773 + $0x111] sm:$0xff]
        %v3104 = vld [vmem:[%s2773 + $0x121] sm:$0xff]
        %v3105 = vld [vmem:[%s2773 + $0x129] sm:$0xff]
        %v3106 = vld [vmem:[%s2773 + $0x139] sm:$0xff]
        %v3107 = vld [vmem:[%s2773 + $0x141] sm:$0xff]
        %v3108 = vld [vmem:[%s2773 + $0x151] sm:$0xff]
        %v3109 = vld [vmem:[%s2773 + $0x159] sm:$0xff]
        %v3110 = vld [vmem:[%s2773 + $0x169] sm:$0xff]
        %v3111 = vld [vmem:[%s2773 + $0x171] sm:$0xff]
        %s3112 = scalar_lea.vmem [#allocation8], 896
        %v3113 = vld [vmem:[%s3112] sm:$0xff]
        %v3114 = vld [vmem:[%s3112 + $0x8] sm:$0xff]
        %v3115 = vld [vmem:[%s3112 + $0x10] sm:$0xff]
        %v3116 = vld [vmem:[%s3112 + $0x18] sm:$0xff]
        %v3117 = vld [vmem:[%s3112 + $0x20] sm:$0xff]
        %v3118 = vld [vmem:[%s3112 + $0x28] sm:$0xff]
        %v3119 = vld [vmem:[%s3112 + $0x30] sm:$0xff]
        %v3120 = vld [vmem:[%s3112 + $0x38] sm:$0xff]
        %v3121 = vld [vmem:[%s3112 + $0x40] sm:$0xff]
        %v3122 = vld [vmem:[%s3112 + $0x48] sm:$0xff]
        %v3123 = vld [vmem:[%s3112 + $0x50] sm:$0xff]
        %v3124 = vld [vmem:[%s3112 + $0x58] sm:$0xff]
        %v3125 = vld [vmem:[%s3112 + $0x60] sm:$0xff]
        %v3126 = vld [vmem:[%s3112 + $0x68] sm:$0xff]
        %v3127 = vld [vmem:[%s3112 + $0x70] sm:$0xff]
        %v3128 = vld [vmem:[%s3112 + $0x78] sm:$0xff]
        %3129 = vmatprep.subr.mxu0 0.0
        %3130 = vmatpush1.msra.mxu0 %v3113
        %3131 = vmatprep.subr.mxu0 0.0
        %3132 = vmatpush1.msra.mxu0 %v3114
        %3133 = vmatprep.subr.mxu0 0.0
        %3134 = vmatpush1.msra.mxu0 %v3115
        %3135 = vmatprep.subr.mxu0 0.0
        %3136 = vmatpush1.msra.mxu0 %v3116
        %3137 = vmatprep.subr.mxu0 0.0
        %3138 = vmatpush1.msra.mxu0 %v3117
        %3139 = vmatprep.subr.mxu0 0.0
        %3140 = vmatpush1.msra.mxu0 %v3118
        %3141 = vmatprep.subr.mxu0 0.0
        %3142 = vmatpush1.msra.mxu0 %v3119
        %3143 = vmatprep.subr.mxu0 0.0
        %3144 = vmatpush1.msra.mxu0 %v3120
        %3145 = vmatprep.subr.mxu0 0.0
        %3146 = vmatpush1.msra.mxu0 %v3121
        %3147 = vmatprep.subr.mxu0 0.0
        %3148 = vmatpush1.msra.mxu0 %v3122
        %3149 = vmatprep.subr.mxu0 0.0
        %3150 = vmatpush1.msra.mxu0 %v3123
        %3151 = vmatprep.subr.mxu0 0.0
        %3152 = vmatpush1.msra.mxu0 %v3124
        %3153 = vmatprep.subr.mxu0 0.0
        %3154 = vmatpush1.msra.mxu0 %v3125
        %3155 = vmatprep.subr.mxu0 0.0
        %3156 = vmatpush1.msra.mxu0 %v3126
        %3157 = vmatprep.subr.mxu0 0.0
        %3158 = vmatpush1.msra.mxu0 %v3127
        %3159 = vmatprep.subr.mxu0 0.0
        %3160 = vmatpush1.msra.mxu0 %v3128
        %3161 = vmatprep.subr.mxu0 0.0
        %3162 = vmatpush1.msra.mxu0 0.0
        %3163 = vmatprep.subr.mxu0 0.0
        %3164 = vmatpush1.msra.mxu0 0.0
        %3165 = vmatprep.subr.mxu0 0.0
        %3166 = vmatpush1.msra.mxu0 0.0
        %3167 = vmatprep.subr.mxu0 0.0
        %3168 = vmatpush1.msra.mxu0 0.0
        %3169 = vmatprep.subr.mxu0 0.0
        %3170 = vmatpush1.msra.mxu0 0.0
        %3171 = vmatprep.subr.mxu0 0.0
        %3172 = vmatpush1.msra.mxu0 0.0
        %3173 = vmatprep.subr.mxu0 0.0
        %3174 = vmatpush1.msra.mxu0 0.0
        %3175 = vmatprep.subr.mxu0 0.0
        %3176 = vmatpush1.msra.mxu0 0.0
        %3177 = vmatprep.subr.mxu0 0.0
        %3178 = vmatpush1.msra.mxu0 0.0
        %3179 = vmatprep.subr.mxu0 0.0
        %3180 = vmatpush1.msra.mxu0 0.0
        %3181 = vmatprep.subr.mxu0 0.0
        %3182 = vmatpush1.msra.mxu0 0.0
        %3183 = vmatprep.subr.mxu0 0.0
        %3184 = vmatpush1.msra.mxu0 0.0
        %3185 = vmatprep.subr.mxu0 0.0
        %3186 = vmatpush1.msra.mxu0 0.0
        %3187 = vmatprep.subr.mxu0 0.0
        %3188 = vmatpush1.msra.mxu0 0.0
        %3189 = vmatprep.subr.mxu0 0.0
        %3190 = vmatpush1.msra.mxu0 0.0
        %3191 = vmatprep.subr.mxu0 0.0
        %3192 = vmatpush1.msra.mxu0 0.0
        %3193 = vmatprep.mubr.f32.mxu0 0.0
        %3194 = vmatmul.mubr.f32.gmra.mrb[0].mxu0 %v3080
        %v3195 = vpop.f32.mrb[0].mxu0
        %v3196 = vadd.f32 0.0, %v3195
        %v3197 = vpop.f32.mrb[0].mxu0
        %3198 = vmatprep.mubr.f32.mxu0 0.0
        %3199 = vmatmul.mubr.f32.gmra.mrb[0].mxu0 %v3081
        %v3200 = vpop.f32.mrb[0].mxu0
        %v3201 = vadd.f32 0.0, %v3200
        %v3202 = vpop.f32.mrb[0].mxu0
        %3203 = vmatprep.mubr.f32.mxu0 0.0
        %3204 = vmatmul.mubr.f32.gmra.mrb[0].mxu0 %v3082
        %v3205 = vpop.f32.mrb[0].mxu0
        %v3206 = vadd.f32 0.0, %v3205
        %v3207 = vpop.f32.mrb[0].mxu0
        %3208 = vmatprep.mubr.f32.mxu0 0.0
        %3209 = vmatmul.mubr.f32.gmra.mrb[0].mxu0 %v3083
        %v3210 = vpop.f32.mrb[0].mxu0
        %v3211 = vadd.f32 0.0, %v3210
        %v3212 = vpop.f32.mrb[0].mxu0
        %3213 = vmatprep.mubr.f32.mxu0 0.0
        %3214 = vmatmul.mubr.f32.gmra.mrb[0].mxu0 %v3084
        %v3215 = vpop.f32.mrb[0].mxu0
        %v3216 = vadd.f32 0.0, %v3215
        %v3217 = vpop.f32.mrb[0].mxu0
        %3218 = vmatprep.mubr.f32.mxu0 0.0
        %3219 = vmatmul.mubr.f32.gmra.mrb[0].mxu0 %v3085
        %v3220 = vpop.f32.mrb[0].mxu0
        %v3221 = vadd.f32 0.0, %v3220
        %v3222 = vpop.f32.mrb[0].mxu0
        %3223 = vmatprep.mubr.f32.mxu0 0.0
        %3224 = vmatmul.mubr.f32.gmra.mrb[0].mxu0 %v3086
        %v3225 = vpop.f32.mrb[0].mxu0
        %v3226 = vadd.f32 0.0, %v3225
        %v3227 = vpop.f32.mrb[0].mxu0
        %3228 = vmatprep.mubr.f32.mxu0 0.0
        %3229 = vmatmul.mubr.f32.gmra.mrb[0].mxu0 %v3087
        %v3230 = vpop.f32.mrb[0].mxu0
        %v3231 = vadd.f32 0.0, %v3230
        %v3232 = vpop.f32.mrb[0].mxu0
        %3233 = vmatprep.mubr.f32.mxu0 0.0
        %3234 = vmatmul.mubr.f32.gmra.mrb[0].mxu0 %v3088
        %v3235 = vpop.f32.mrb[0].mxu0
        %v3236 = vadd.f32 0.0, %v3235
        %v3237 = vpop.f32.mrb[0].mxu0
        %3238 = vmatprep.mubr.f32.mxu0 0.0
        %3239 = vmatmul.mubr.f32.gmra.mrb[0].mxu0 %v3089
        %v3240 = vpop.f32.mrb[0].mxu0
        %v3241 = vadd.f32 0.0, %v3240
        %v3242 = vpop.f32.mrb[0].mxu0
        %3243 = vmatprep.mubr.f32.mxu0 0.0
        %3244 = vmatmul.mubr.f32.gmra.mrb[0].mxu0 %v3090
        %v3245 = vpop.f32.mrb[0].mxu0
        %v3246 = vadd.f32 0.0, %v3245
        %v3247 = vpop.f32.mrb[0].mxu0
        %3248 = vmatprep.mubr.f32.mxu0 0.0
        %3249 = vmatmul.mubr.f32.gmra.mrb[0].mxu0 %v3091
        %v3250 = vpop.f32.mrb[0].mxu0
        %v3251 = vadd.f32 0.0, %v3250
        %v3252 = vpop.f32.mrb[0].mxu0
        %3253 = vmatprep.mubr.f32.mxu0 0.0
        %3254 = vmatmul.mubr.f32.gmra.mrb[0].mxu0 %v3092
        %v3255 = vpop.f32.mrb[0].mxu0
        %v3256 = vadd.f32 0.0, %v3255
        %v3257 = vpop.f32.mrb[0].mxu0
        %3258 = vmatprep.mubr.f32.mxu0 0.0
        %3259 = vmatmul.mubr.f32.gmra.mrb[0].mxu0 %v3093
        %v3260 = vpop.f32.mrb[0].mxu0
        %v3261 = vadd.f32 0.0, %v3260
        %v3262 = vpop.f32.mrb[0].mxu0
        %3263 = vmatprep.mubr.f32.mxu0 0.0
        %3264 = vmatmul.mubr.f32.gmra.mrb[0].mxu0 %v3094
        %v3265 = vpop.f32.mrb[0].mxu0
        %v3266 = vadd.f32 0.0, %v3265
        %v3267 = vpop.f32.mrb[0].mxu0
        %3268 = vmatprep.mubr.f32.mxu0 0.0
        %3269 = vmatmul.mubr.f32.gmra.mrb[0].mxu0 %v3095
        %v3270 = vpop.f32.mrb[0].mxu0
        %v3271 = vadd.f32 0.0, %v3270
        %v3272 = vpop.f32.mrb[0].mxu0
        %3273 = vmatprep.mubr.f32.mxu0 0.0
        %3274 = vmatmul.mubr.f32.gmra.mrb[0].mxu0 %v3096
        %v3275 = vpop.f32.mrb[0].mxu0
        %v3276 = vadd.f32 0.0, %v3275
        %v3277 = vpop.f32.mrb[0].mxu0
        %3278 = vmatprep.mubr.f32.mxu0 0.0
        %3279 = vmatmul.mubr.f32.gmra.mrb[0].mxu0 %v3097
        %v3280 = vpop.f32.mrb[0].mxu0
        %v3281 = vadd.f32 0.0, %v3280
        %v3282 = vpop.f32.mrb[0].mxu0
        %3283 = vmatprep.mubr.f32.mxu0 0.0
        %3284 = vmatmul.mubr.f32.gmra.mrb[0].mxu0 %v3098
        %v3285 = vpop.f32.mrb[0].mxu0
        %v3286 = vadd.f32 0.0, %v3285
        %v3287 = vpop.f32.mrb[0].mxu0
        %3288 = vmatprep.mubr.f32.mxu0 0.0
        %3289 = vmatmul.mubr.f32.gmra.mrb[0].mxu0 %v3099
        %v3290 = vpop.f32.mrb[0].mxu0
        %v3291 = vadd.f32 0.0, %v3290
        %v3292 = vpop.f32.mrb[0].mxu0
        %3293 = vmatprep.mubr.f32.mxu0 0.0
        %3294 = vmatmul.mubr.f32.gmra.mrb[0].mxu0 %v3100
        %v3295 = vpop.f32.mrb[0].mxu0
        %v3296 = vadd.f32 0.0, %v3295
        %v3297 = vpop.f32.mrb[0].mxu0
        %3298 = vmatprep.mubr.f32.mxu0 0.0
        %3299 = vmatmul.mubr.f32.gmra.mrb[0].mxu0 %v3101
        %v3300 = vpop.f32.mrb[0].mxu0
        %v3301 = vadd.f32 0.0, %v3300
        %v3302 = vpop.f32.mrb[0].mxu0
        %3303 = vmatprep.mubr.f32.mxu0 0.0
        %3304 = vmatmul.mubr.f32.gmra.mrb[0].mxu0 %v3102
        %v3305 = vpop.f32.mrb[0].mxu0
        %v3306 = vadd.f32 0.0, %v3305
        %v3307 = vpop.f32.mrb[0].mxu0
        %3308 = vmatprep.mubr.f32.mxu0 0.0
        %3309 = vmatmul.mubr.f32.gmra.mrb[0].mxu0 %v3103
        %v3310 = vpop.f32.mrb[0].mxu0
        %v3311 = vadd.f32 0.0, %v3310
        %v3312 = vpop.f32.mrb[0].mxu0
        %3313 = vmatprep.mubr.f32.mxu0 0.0
        %3314 = vmatmul.mubr.f32.gmra.mrb[0].mxu0 %v3104
        %v3315 = vpop.f32.mrb[0].mxu0
        %v3316 = vadd.f32 0.0, %v3315
        %v3317 = vpop.f32.mrb[0].mxu0
        %3318 = vmatprep.mubr.f32.mxu0 0.0
        %3319 = vmatmul.mubr.f32.gmra.mrb[0].mxu0 %v3105
        %v3320 = vpop.f32.mrb[0].mxu0
        %v3321 = vadd.f32 0.0, %v3320
        %v3322 = vpop.f32.mrb[0].mxu0
        %3323 = vmatprep.mubr.f32.mxu0 0.0
        %3324 = vmatmul.mubr.f32.gmra.mrb[0].mxu0 %v3106
        %v3325 = vpop.f32.mrb[0].mxu0
        %v3326 = vadd.f32 0.0, %v3325
        %v3327 = vpop.f32.mrb[0].mxu0
        %3328 = vmatprep.mubr.f32.mxu0 0.0
        %3329 = vmatmul.mubr.f32.gmra.mrb[0].mxu0 %v3107
        %v3330 = vpop.f32.mrb[0].mxu0
        %v3331 = vadd.f32 0.0, %v3330
        %v3332 = vpop.f32.mrb[0].mxu0
        %3333 = vmatprep.mubr.f32.mxu0 0.0
        %3334 = vmatmul.mubr.f32.gmra.mrb[0].mxu0 %v3108
        %v3335 = vpop.f32.mrb[0].mxu0
        %v3336 = vadd.f32 0.0, %v3335
        %v3337 = vpop.f32.mrb[0].mxu0
        %3338 = vmatprep.mubr.f32.mxu0 0.0
        %3339 = vmatmul.mubr.f32.gmra.mrb[0].mxu0 %v3109
        %v3340 = vpop.f32.mrb[0].mxu0
        %v3341 = vadd.f32 0.0, %v3340
        %v3342 = vpop.f32.mrb[0].mxu0
        %3343 = vmatprep.mubr.f32.mxu0 0.0
        %3344 = vmatmul.mubr.f32.gmra.mrb[0].mxu0 %v3110
        %v3345 = vpop.f32.mrb[0].mxu0
        %v3346 = vadd.f32 0.0, %v3345
        %v3347 = vpop.f32.mrb[0].mxu0
        %3348 = vmatprep.mubr.f32.mxu0 0.0
        %3349 = vmatmul.mubr.f32.gmra.mrb[0].mxu0 %v3111
        %v3350 = vpop.f32.mrb[0].mxu0
        %v3351 = vadd.f32 0.0, %v3350
        %v3352 = vpop.f32.mrb[0].mxu0
        %3353 = vdwg.mxu0
        %v3354 = vadd.f32 %v3048, %v3196
        %v3355 = vadd.f32 %v3049, %v3201
        %v3356 = vadd.f32 %v3050, %v3206
        %v3357 = vadd.f32 %v3051, %v3211
        %v3358 = vadd.f32 %v3052, %v3216
        %v3359 = vadd.f32 %v3053, %v3221
        %v3360 = vadd.f32 %v3054, %v3226
        %v3361 = vadd.f32 %v3055, %v3231
        %v3362 = vadd.f32 %v3056, %v3236
        %v3363 = vadd.f32 %v3057, %v3241
        %v3364 = vadd.f32 %v3058, %v3246
        %v3365 = vadd.f32 %v3059, %v3251
        %v3366 = vadd.f32 %v3060, %v3256
        %v3367 = vadd.f32 %v3061, %v3261
        %v3368 = vadd.f32 %v3062, %v3266
        %v3369 = vadd.f32 %v3063, %v3271
        %v3370 = vadd.f32 %v3064, %v3276
        %v3371 = vadd.f32 %v3065, %v3281
        %v3372 = vadd.f32 %v3066, %v3286
        %v3373 = vadd.f32 %v3067, %v3291
        %v3374 = vadd.f32 %v3068, %v3296
        %v3375 = vadd.f32 %v3069, %v3301
        %v3376 = vadd.f32 %v3070, %v3306
        %v3377 = vadd.f32 %v3071, %v3311
        %v3378 = vadd.f32 %v3072, %v3316
        %v3379 = vadd.f32 %v3073, %v3321
        %v3380 = vadd.f32 %v3074, %v3326
        %v3381 = vadd.f32 %v3075, %v3331
        %v3382 = vadd.f32 %v3076, %v3336
        %v3383 = vadd.f32 %v3077, %v3341
        %v3384 = vadd.f32 %v3078, %v3346
        %v3385 = vadd.f32 %v3079, %v3351
        %v3386 = vld [vmem:[%s2773 + $0x2] sm:$0xff]
        %v3387 = vld [vmem:[%s2773 + $0xa] sm:$0xff]
        %v3388 = vld [vmem:[%s2773 + $0x1a] sm:$0xff]
        %v3389 = vld [vmem:[%s2773 + $0x22] sm:$0xff]
        %v3390 = vld [vmem:[%s2773 + $0x32] sm:$0xff]
        %v3391 = vld [vmem:[%s2773 + $0x3a] sm:$0xff]
        %v3392 = vld [vmem:[%s2773 + $0x4a] sm:$0xff]
        %v3393 = vld [vmem:[%s2773 + $0x52] sm:$0xff]
        %v3394 = vld [vmem:[%s2773 + $0x62] sm:$0xff]
        %v3395 = vld [vmem:[%s2773 + $0x6a] sm:$0xff]
        %v3396 = vld [vmem:[%s2773 + $0x7a] sm:$0xff]
        %v3397 = vld [vmem:[%s2773 + $0x82] sm:$0xff]
        %v3398 = vld [vmem:[%s2773 + $0x92] sm:$0xff]
        %v3399 = vld [vmem:[%s2773 + $0x9a] sm:$0xff]
        %v3400 = vld [vmem:[%s2773 + $0xaa] sm:$0xff]
        %v3401 = vld [vmem:[%s2773 + $0xb2] sm:$0xff]
        %v3402 = vld [vmem:[%s2773 + $0xc2] sm:$0xff]
        %v3403 = vld [vmem:[%s2773 + $0xca] sm:$0xff]
        %v3404 = vld [vmem:[%s2773 + $0xda] sm:$0xff]
        %v3405 = vld [vmem:[%s2773 + $0xe2] sm:$0xff]
        %v3406 = vld [vmem:[%s2773 + $0xf2] sm:$0xff]
        %v3407 = vld [vmem:[%s2773 + $0xfa] sm:$0xff]
        %v3408 = vld [vmem:[%s2773 + $0x10a] sm:$0xff]
        %v3409 = vld [vmem:[%s2773 + $0x112] sm:$0xff]
        %v3410 = vld [vmem:[%s2773 + $0x122] sm:$0xff]
        %v3411 = vld [vmem:[%s2773 + $0x12a] sm:$0xff]
        %v3412 = vld [vmem:[%s2773 + $0x13a] sm:$0xff]
        %v3413 = vld [vmem:[%s2773 + $0x142] sm:$0xff]
        %v3414 = vld [vmem:[%s2773 + $0x152] sm:$0xff]
        %v3415 = vld [vmem:[%s2773 + $0x15a] sm:$0xff]
        %v3416 = vld [vmem:[%s2773 + $0x16a] sm:$0xff]
        %v3417 = vld [vmem:[%s2773 + $0x172] sm:$0xff]
        %s3418 = scalar_lea.vmem [#allocation8], 1024
        %v3419 = vld [vmem:[%s3418] sm:$0xff]
        %v3420 = vld [vmem:[%s3418 + $0x8] sm:$0xff]
        %v3421 = vld [vmem:[%s3418 + $0x10] sm:$0xff]
        %v3422 = vld [vmem:[%s3418 + $0x18] sm:$0xff]
        %v3423 = vld [vmem:[%s3418 + $0x20] sm:$0xff]
        %v3424 = vld [vmem:[%s3418 + $0x28] sm:$0xff]
        %v3425 = vld [vmem:[%s3418 + $0x30] sm:$0xff]
        %v3426 = vld [vmem:[%s3418 + $0x38] sm:$0xff]
        %v3427 = vld [vmem:[%s3418 + $0x40] sm:$0xff]
        %v3428 = vld [vmem:[%s3418 + $0x48] sm:$0xff]
        %v3429 = vld [vmem:[%s3418 + $0x50] sm:$0xff]
        %v3430 = vld [vmem:[%s3418 + $0x58] sm:$0xff]
        %v3431 = vld [vmem:[%s3418 + $0x60] sm:$0xff]
        %v3432 = vld [vmem:[%s3418 + $0x68] sm:$0xff]
        %v3433 = vld [vmem:[%s3418 + $0x70] sm:$0xff]
        %v3434 = vld [vmem:[%s3418 + $0x78] sm:$0xff]
        %3435 = vmatprep.subr.mxu0 0.0
        %3436 = vmatpush1.msra.mxu0 %v3419
        %3437 = vmatprep.subr.mxu0 0.0
        %3438 = vmatpush1.msra.mxu0 %v3420
        %3439 = vmatprep.subr.mxu0 0.0
        %3440 = vmatpush1.msra.mxu0 %v3421
        %3441 = vmatprep.subr.mxu0 0.0
        %3442 = vmatpush1.msra.mxu0 %v3422
        %3443 = vmatprep.subr.mxu0 0.0
        %3444 = vmatpush1.msra.mxu0 %v3423
        %3445 = vmatprep.subr.mxu0 0.0
        %3446 = vmatpush1.msra.mxu0 %v3424
        %3447 = vmatprep.subr.mxu0 0.0
        %3448 = vmatpush1.msra.mxu0 %v3425
        %3449 = vmatprep.subr.mxu0 0.0
        %3450 = vmatpush1.msra.mxu0 %v3426
        %3451 = vmatprep.subr.mxu0 0.0
        %3452 = vmatpush1.msra.mxu0 %v3427
        %3453 = vmatprep.subr.mxu0 0.0
        %3454 = vmatpush1.msra.mxu0 %v3428
        %3455 = vmatprep.subr.mxu0 0.0
        %3456 = vmatpush1.msra.mxu0 %v3429
        %3457 = vmatprep.subr.mxu0 0.0
        %3458 = vmatpush1.msra.mxu0 %v3430
        %3459 = vmatprep.subr.mxu0 0.0
        %3460 = vmatpush1.msra.mxu0 %v3431
        %3461 = vmatprep.subr.mxu0 0.0
        %3462 = vmatpush1.msra.mxu0 %v3432
        %3463 = vmatprep.subr.mxu0 0.0
        %3464 = vmatpush1.msra.mxu0 %v3433
        %3465 = vmatprep.subr.mxu0 0.0
        %3466 = vmatpush1.msra.mxu0 %v3434
        %3467 = vmatprep.subr.mxu0 0.0
        %3468 = vmatpush1.msra.mxu0 0.0
        %3469 = vmatprep.subr.mxu0 0.0
        %3470 = vmatpush1.msra.mxu0 0.0
        %3471 = vmatprep.subr.mxu0 0.0
        %3472 = vmatpush1.msra.mxu0 0.0
        %3473 = vmatprep.subr.mxu0 0.0
        %3474 = vmatpush1.msra.mxu0 0.0
        %3475 = vmatprep.subr.mxu0 0.0
        %3476 = vmatpush1.msra.mxu0 0.0
        %3477 = vmatprep.subr.mxu0 0.0
        %3478 = vmatpush1.msra.mxu0 0.0
        %3479 = vmatprep.subr.mxu0 0.0
        %3480 = vmatpush1.msra.mxu0 0.0
        %3481 = vmatprep.subr.mxu0 0.0
        %3482 = vmatpush1.msra.mxu0 0.0
        %3483 = vmatprep.subr.mxu0 0.0
        %3484 = vmatpush1.msra.mxu0 0.0
        %3485 = vmatprep.subr.mxu0 0.0
        %3486 = vmatpush1.msra.mxu0 0.0
        %3487 = vmatprep.subr.mxu0 0.0
        %3488 = vmatpush1.msra.mxu0 0.0
        %3489 = vmatprep.subr.mxu0 0.0
        %3490 = vmatpush1.msra.mxu0 0.0
        %3491 = vmatprep.subr.mxu0 0.0
        %3492 = vmatpush1.msra.mxu0 0.0
        %3493 = vmatprep.subr.mxu0 0.0
        %3494 = vmatpush1.msra.mxu0 0.0
        %3495 = vmatprep.subr.mxu0 0.0
        %3496 = vmatpush1.msra.mxu0 0.0
        %3497 = vmatprep.subr.mxu0 0.0
        %3498 = vmatpush1.msra.mxu0 0.0
        %3499 = vmatprep.mubr.f32.mxu0 0.0
        %3500 = vmatmul.mubr.f32.gmra.mrb[0].mxu0 %v3386
        %v3501 = vpop.f32.mrb[0].mxu0
        %v3502 = vadd.f32 0.0, %v3501
        %v3503 = vpop.f32.mrb[0].mxu0
        %3504 = vmatprep.mubr.f32.mxu0 0.0
        %3505 = vmatmul.mubr.f32.gmra.mrb[0].mxu0 %v3387
        %v3506 = vpop.f32.mrb[0].mxu0
        %v3507 = vadd.f32 0.0, %v3506
        %v3508 = vpop.f32.mrb[0].mxu0
        %3509 = vmatprep.mubr.f32.mxu0 0.0
        %3510 = vmatmul.mubr.f32.gmra.mrb[0].mxu0 %v3388
        %v3511 = vpop.f32.mrb[0].mxu0
        %v3512 = vadd.f32 0.0, %v3511
        %v3513 = vpop.f32.mrb[0].mxu0
        %3514 = vmatprep.mubr.f32.mxu0 0.0
        %3515 = vmatmul.mubr.f32.gmra.mrb[0].mxu0 %v3389
        %v3516 = vpop.f32.mrb[0].mxu0
        %v3517 = vadd.f32 0.0, %v3516
        %v3518 = vpop.f32.mrb[0].mxu0
        %3519 = vmatprep.mubr.f32.mxu0 0.0
        %3520 = vmatmul.mubr.f32.gmra.mrb[0].mxu0 %v3390
        %v3521 = vpop.f32.mrb[0].mxu0
        %v3522 = vadd.f32 0.0, %v3521
        %v3523 = vpop.f32.mrb[0].mxu0
        %3524 = vmatprep.mubr.f32.mxu0 0.0
        %3525 = vmatmul.mubr.f32.gmra.mrb[0].mxu0 %v3391
        %v3526 = vpop.f32.mrb[0].mxu0
        %v3527 = vadd.f32 0.0, %v3526
        %v3528 = vpop.f32.mrb[0].mxu0
        %3529 = vmatprep.mubr.f32.mxu0 0.0
        %3530 = vmatmul.mubr.f32.gmra.mrb[0].mxu0 %v3392
        %v3531 = vpop.f32.mrb[0].mxu0
        %v3532 = vadd.f32 0.0, %v3531
        %v3533 = vpop.f32.mrb[0].mxu0
        %3534 = vmatprep.mubr.f32.mxu0 0.0
        %3535 = vmatmul.mubr.f32.gmra.mrb[0].mxu0 %v3393
        %v3536 = vpop.f32.mrb[0].mxu0
        %v3537 = vadd.f32 0.0, %v3536
        %v3538 = vpop.f32.mrb[0].mxu0
        %3539 = vmatprep.mubr.f32.mxu0 0.0
        %3540 = vmatmul.mubr.f32.gmra.mrb[0].mxu0 %v3394
        %v3541 = vpop.f32.mrb[0].mxu0
        %v3542 = vadd.f32 0.0, %v3541
        %v3543 = vpop.f32.mrb[0].mxu0
        %3544 = vmatprep.mubr.f32.mxu0 0.0
        %3545 = vmatmul.mubr.f32.gmra.mrb[0].mxu0 %v3395
        %v3546 = vpop.f32.mrb[0].mxu0
        %v3547 = vadd.f32 0.0, %v3546
        %v3548 = vpop.f32.mrb[0].mxu0
        %3549 = vmatprep.mubr.f32.mxu0 0.0
        %3550 = vmatmul.mubr.f32.gmra.mrb[0].mxu0 %v3396
        %v3551 = vpop.f32.mrb[0].mxu0
        %v3552 = vadd.f32 0.0, %v3551
        %v3553 = vpop.f32.mrb[0].mxu0
        %3554 = vmatprep.mubr.f32.mxu0 0.0
        %3555 = vmatmul.mubr.f32.gmra.mrb[0].mxu0 %v3397
        %v3556 = vpop.f32.mrb[0].mxu0
        %v3557 = vadd.f32 0.0, %v3556
        %v3558 = vpop.f32.mrb[0].mxu0
        %3559 = vmatprep.mubr.f32.mxu0 0.0
        %3560 = vmatmul.mubr.f32.gmra.mrb[0].mxu0 %v3398
        %v3561 = vpop.f32.mrb[0].mxu0
        %v3562 = vadd.f32 0.0, %v3561
        %v3563 = vpop.f32.mrb[0].mxu0
        %3564 = vmatprep.mubr.f32.mxu0 0.0
        %3565 = vmatmul.mubr.f32.gmra.mrb[0].mxu0 %v3399
        %v3566 = vpop.f32.mrb[0].mxu0
        %v3567 = vadd.f32 0.0, %v3566
        %v3568 = vpop.f32.mrb[0].mxu0
        %3569 = vmatprep.mubr.f32.mxu0 0.0
        %3570 = vmatmul.mubr.f32.gmra.mrb[0].mxu0 %v3400
        %v3571 = vpop.f32.mrb[0].mxu0
        %v3572 = vadd.f32 0.0, %v3571
        %v3573 = vpop.f32.mrb[0].mxu0
        %3574 = vmatprep.mubr.f32.mxu0 0.0
        %3575 = vmatmul.mubr.f32.gmra.mrb[0].mxu0 %v3401
        %v3576 = vpop.f32.mrb[0].mxu0
        %v3577 = vadd.f32 0.0, %v3576
        %v3578 = vpop.f32.mrb[0].mxu0
        %3579 = vmatprep.mubr.f32.mxu0 0.0
        %3580 = vmatmul.mubr.f32.gmra.mrb[0].mxu0 %v3402
        %v3581 = vpop.f32.mrb[0].mxu0
        %v3582 = vadd.f32 0.0, %v3581
        %v3583 = vpop.f32.mrb[0].mxu0
        %3584 = vmatprep.mubr.f32.mxu0 0.0
        %3585 = vmatmul.mubr.f32.gmra.mrb[0].mxu0 %v3403
        %v3586 = vpop.f32.mrb[0].mxu0
        %v3587 = vadd.f32 0.0, %v3586
        %v3588 = vpop.f32.mrb[0].mxu0
        %3589 = vmatprep.mubr.f32.mxu0 0.0
        %3590 = vmatmul.mubr.f32.gmra.mrb[0].mxu0 %v3404
        %v3591 = vpop.f32.mrb[0].mxu0
        %v3592 = vadd.f32 0.0, %v3591
        %v3593 = vpop.f32.mrb[0].mxu0
        %3594 = vmatprep.mubr.f32.mxu0 0.0
        %3595 = vmatmul.mubr.f32.gmra.mrb[0].mxu0 %v3405
        %v3596 = vpop.f32.mrb[0].mxu0
        %v3597 = vadd.f32 0.0, %v3596
        %v3598 = vpop.f32.mrb[0].mxu0
        %3599 = vmatprep.mubr.f32.mxu0 0.0
        %3600 = vmatmul.mubr.f32.gmra.mrb[0].mxu0 %v3406
        %v3601 = vpop.f32.mrb[0].mxu0
        %v3602 = vadd.f32 0.0, %v3601
        %v3603 = vpop.f32.mrb[0].mxu0
        %3604 = vmatprep.mubr.f32.mxu0 0.0
        %3605 = vmatmul.mubr.f32.gmra.mrb[0].mxu0 %v3407
        %v3606 = vpop.f32.mrb[0].mxu0
        %v3607 = vadd.f32 0.0, %v3606
        %v3608 = vpop.f32.mrb[0].mxu0
        %3609 = vmatprep.mubr.f32.mxu0 0.0
        %3610 = vmatmul.mubr.f32.gmra.mrb[0].mxu0 %v3408
        %v3611 = vpop.f32.mrb[0].mxu0
        %v3612 = vadd.f32 0.0, %v3611
        %v3613 = vpop.f32.mrb[0].mxu0
        %3614 = vmatprep.mubr.f32.mxu0 0.0
        %3615 = vmatmul.mubr.f32.gmra.mrb[0].mxu0 %v3409
        %v3616 = vpop.f32.mrb[0].mxu0
        %v3617 = vadd.f32 0.0, %v3616
        %v3618 = vpop.f32.mrb[0].mxu0
        %3619 = vmatprep.mubr.f32.mxu0 0.0
        %3620 = vmatmul.mubr.f32.gmra.mrb[0].mxu0 %v3410
        %v3621 = vpop.f32.mrb[0].mxu0
        %v3622 = vadd.f32 0.0, %v3621
        %v3623 = vpop.f32.mrb[0].mxu0
        %3624 = vmatprep.mubr.f32.mxu0 0.0
        %3625 = vmatmul.mubr.f32.gmra.mrb[0].mxu0 %v3411
        %v3626 = vpop.f32.mrb[0].mxu0
        %v3627 = vadd.f32 0.0, %v3626
        %v3628 = vpop.f32.mrb[0].mxu0
        %3629 = vmatprep.mubr.f32.mxu0 0.0
        %3630 = vmatmul.mubr.f32.gmra.mrb[0].mxu0 %v3412
        %v3631 = vpop.f32.mrb[0].mxu0
        %v3632 = vadd.f32 0.0, %v3631
        %v3633 = vpop.f32.mrb[0].mxu0
        %3634 = vmatprep.mubr.f32.mxu0 0.0
        %3635 = vmatmul.mubr.f32.gmra.mrb[0].mxu0 %v3413
        %v3636 = vpop.f32.mrb[0].mxu0
        %v3637 = vadd.f32 0.0, %v3636
        %v3638 = vpop.f32.mrb[0].mxu0
        %3639 = vmatprep.mubr.f32.mxu0 0.0
        %3640 = vmatmul.mubr.f32.gmra.mrb[0].mxu0 %v3414
        %v3641 = vpop.f32.mrb[0].mxu0
        %v3642 = vadd.f32 0.0, %v3641
        %v3643 = vpop.f32.mrb[0].mxu0
        %3644 = vmatprep.mubr.f32.mxu0 0.0
        %3645 = vmatmul.mubr.f32.gmra.mrb[0].mxu0 %v3415
        %v3646 = vpop.f32.mrb[0].mxu0
        %v3647 = vadd.f32 0.0, %v3646
        %v3648 = vpop.f32.mrb[0].mxu0
        %3649 = vmatprep.mubr.f32.mxu0 0.0
        %3650 = vmatmul.mubr.f32.gmra.mrb[0].mxu0 %v3416
        %v3651 = vpop.f32.mrb[0].mxu0
        %v3652 = vadd.f32 0.0, %v3651
        %v3653 = vpop.f32.mrb[0].mxu0
        %3654 = vmatprep.mubr.f32.mxu0 0.0
        %3655 = vmatmul.mubr.f32.gmra.mrb[0].mxu0 %v3417
        %v3656 = vpop.f32.mrb[0].mxu0
        %v3657 = vadd.f32 0.0, %v3656
        %v3658 = vpop.f32.mrb[0].mxu0
        %3659 = vdwg.mxu0
        %v3660 = vadd.f32 %v3354, %v3502
        %v3661 = vadd.f32 %v3355, %v3507
        %v3662 = vadd.f32 %v3356, %v3512
        %v3663 = vadd.f32 %v3357, %v3517
        %v3664 = vadd.f32 %v3358, %v3522
        %v3665 = vadd.f32 %v3359, %v3527
        %v3666 = vadd.f32 %v3360, %v3532
        %v3667 = vadd.f32 %v3361, %v3537
        %v3668 = vadd.f32 %v3362, %v3542
        %v3669 = vadd.f32 %v3363, %v3547
        %v3670 = vadd.f32 %v3364, %v3552
        %v3671 = vadd.f32 %v3365, %v3557
        %v3672 = vadd.f32 %v3366, %v3562
        %v3673 = vadd.f32 %v3367, %v3567
        %v3674 = vadd.f32 %v3368, %v3572
        %v3675 = vadd.f32 %v3369, %v3577
        %v3676 = vadd.f32 %v3370, %v3582
        %v3677 = vadd.f32 %v3371, %v3587
        %v3678 = vadd.f32 %v3372, %v3592
        %v3679 = vadd.f32 %v3373, %v3597
        %v3680 = vadd.f32 %v3374, %v3602
        %v3681 = vadd.f32 %v3375, %v3607
        %v3682 = vadd.f32 %v3376, %v3612
        %v3683 = vadd.f32 %v3377, %v3617
        %v3684 = vadd.f32 %v3378, %v3622
        %v3685 = vadd.f32 %v3379, %v3627
        %v3686 = vadd.f32 %v3380, %v3632
        %v3687 = vadd.f32 %v3381, %v3637
        %v3688 = vadd.f32 %v3382, %v3642
        %v3689 = vadd.f32 %v3383, %v3647
        %v3690 = vadd.f32 %v3384, %v3652
        %v3691 = vadd.f32 %v3385, %v3657
        %v3692 = vxor.u32 %v3660, 2147483648
        %v3693 = vxor.u32 %v3661, 2147483648
        %v3694 = vxor.u32 %v3662, 2147483648
        %v3695 = vxor.u32 %v3663, 2147483648
        %v3696 = vxor.u32 %v3664, 2147483648
        %v3697 = vxor.u32 %v3665, 2147483648
        %v3698 = vxor.u32 %v3666, 2147483648
        %v3699 = vxor.u32 %v3667, 2147483648
        %v3700 = vxor.u32 %v3668, 2147483648
        %v3701 = vxor.u32 %v3669, 2147483648
        %v3702 = vxor.u32 %v3670, 2147483648
        %v3703 = vxor.u32 %v3671, 2147483648
        %v3704 = vxor.u32 %v3672, 2147483648
        %v3705 = vxor.u32 %v3673, 2147483648
        %v3706 = vxor.u32 %v3674, 2147483648
        %v3707 = vxor.u32 %v3675, 2147483648
        %v3708 = vxor.u32 %v3676, 2147483648
        %v3709 = vxor.u32 %v3677, 2147483648
        %v3710 = vxor.u32 %v3678, 2147483648
        %v3711 = vxor.u32 %v3679, 2147483648
        %v3712 = vxor.u32 %v3680, 2147483648
        %v3713 = vxor.u32 %v3681, 2147483648
        %v3714 = vxor.u32 %v3682, 2147483648
        %v3715 = vxor.u32 %v3683, 2147483648
        %v3716 = vxor.u32 %v3684, 2147483648
        %v3717 = vxor.u32 %v3685, 2147483648
        %v3718 = vxor.u32 %v3686, 2147483648
        %v3719 = vxor.u32 %v3687, 2147483648
        %v3720 = vxor.u32 %v3688, 2147483648
        %v3721 = vxor.u32 %v3689, 2147483648
        %v3722 = vxor.u32 %v3690, 2147483648
        %v3723 = vxor.u32 %v3691, 2147483648
        %v3724 = vmul.f32 %v3692, 1.442695
        %v3725 = vpow.pop %v3724
        %v3726 = vmul.f32 %v3693, 1.442695
        %v3727 = vpow.pop %v3726
        %v3728 = vmul.f32 %v3694, 1.442695
        %v3729 = vpow.pop %v3728
        %v3730 = vmul.f32 %v3695, 1.442695
        %v3731 = vpow.pop %v3730
        %v3732 = vmul.f32 %v3696, 1.442695
        %v3733 = vpow.pop %v3732
        %v3734 = vmul.f32 %v3697, 1.442695
        %v3735 = vpow.pop %v3734
        %v3736 = vmul.f32 %v3698, 1.442695
        %v3737 = vpow.pop %v3736
        %v3738 = vmul.f32 %v3699, 1.442695
        %v3739 = vpow.pop %v3738
        %v3740 = vmul.f32 %v3700, 1.442695
        %v3741 = vpow.pop %v3740
        %v3742 = vmul.f32 %v3701, 1.442695
        %v3743 = vpow.pop %v3742
        %v3744 = vmul.f32 %v3702, 1.442695
        %v3745 = vpow.pop %v3744
        %v3746 = vmul.f32 %v3703, 1.442695
        %v3747 = vpow.pop %v3746
        %v3748 = vmul.f32 %v3704, 1.442695
        %v3749 = vpow.pop %v3748
        %v3750 = vmul.f32 %v3705, 1.442695
        %v3751 = vpow.pop %v3750
        %v3752 = vmul.f32 %v3706, 1.442695
        %v3753 = vpow.pop %v3752
        %v3754 = vmul.f32 %v3707, 1.442695
        %v3755 = vpow.pop %v3754
        %v3756 = vmul.f32 %v3708, 1.442695
        %v3757 = vpow.pop %v3756
        %v3758 = vmul.f32 %v3709, 1.442695
        %v3759 = vpow.pop %v3758
        %v3760 = vmul.f32 %v3710, 1.442695
        %v3761 = vpow.pop %v3760
        %v3762 = vmul.f32 %v3711, 1.442695
        %v3763 = vpow.pop %v3762
        %v3764 = vmul.f32 %v3712, 1.442695
        %v3765 = vpow.pop %v3764
        %v3766 = vmul.f32 %v3713, 1.442695
        %v3767 = vpow.pop %v3766
        %v3768 = vmul.f32 %v3714, 1.442695
        %v3769 = vpow.pop %v3768
        %v3770 = vmul.f32 %v3715, 1.442695
        %v3771 = vpow.pop %v3770
        %v3772 = vmul.f32 %v3716, 1.442695
        %v3773 = vpow.pop %v3772
        %v3774 = vmul.f32 %v3717, 1.442695
        %v3775 = vpow.pop %v3774
        %v3776 = vmul.f32 %v3718, 1.442695
        %v3777 = vpow.pop %v3776
        %v3778 = vmul.f32 %v3719, 1.442695
        %v3779 = vpow.pop %v3778
        %v3780 = vmul.f32 %v3720, 1.442695
        %v3781 = vpow.pop %v3780
        %v3782 = vmul.f32 %v3721, 1.442695
        %v3783 = vpow.pop %v3782
        %v3784 = vmul.f32 %v3722, 1.442695
        %v3785 = vpow.pop %v3784
        %v3786 = vmul.f32 %v3723, 1.442695
        %v3787 = vpow.pop %v3786
        %v3788 = vadd.f32 %v3725, 1.0
        %v3789 = vadd.f32 %v3727, 1.0
        %v3790 = vadd.f32 %v3729, 1.0
        %v3791 = vadd.f32 %v3731, 1.0
        %v3792 = vadd.f32 %v3733, 1.0
        %v3793 = vadd.f32 %v3735, 1.0
        %v3794 = vadd.f32 %v3737, 1.0
        %v3795 = vadd.f32 %v3739, 1.0
        %v3796 = vadd.f32 %v3741, 1.0
        %v3797 = vadd.f32 %v3743, 1.0
        %v3798 = vadd.f32 %v3745, 1.0
        %v3799 = vadd.f32 %v3747, 1.0
        %v3800 = vadd.f32 %v3749, 1.0
        %v3801 = vadd.f32 %v3751, 1.0
        %v3802 = vadd.f32 %v3753, 1.0
        %v3803 = vadd.f32 %v3755, 1.0
        %v3804 = vadd.f32 %v3757, 1.0
        %v3805 = vadd.f32 %v3759, 1.0
        %v3806 = vadd.f32 %v3761, 1.0
        %v3807 = vadd.f32 %v3763, 1.0
        %v3808 = vadd.f32 %v3765, 1.0
        %v3809 = vadd.f32 %v3767, 1.0
        %v3810 = vadd.f32 %v3769, 1.0
        %v3811 = vadd.f32 %v3771, 1.0
        %v3812 = vadd.f32 %v3773, 1.0
        %v3813 = vadd.f32 %v3775, 1.0
        %v3814 = vadd.f32 %v3777, 1.0
        %v3815 = vadd.f32 %v3779, 1.0
        %v3816 = vadd.f32 %v3781, 1.0
        %v3817 = vadd.f32 %v3783, 1.0
        %v3818 = vadd.f32 %v3785, 1.0
        %v3819 = vadd.f32 %v3787, 1.0
        %v3820 = vrcp.pop %v3788
        %v3821 = vmul.f32 1.0, %v3820
        %v3822 = vrcp.pop %v3789
        %v3823 = vmul.f32 1.0, %v3822
        %v3824 = vrcp.pop %v3790
        %v3825 = vmul.f32 1.0, %v3824
        %v3826 = vrcp.pop %v3791
        %v3827 = vmul.f32 1.0, %v3826
        %v3828 = vrcp.pop %v3792
        %v3829 = vmul.f32 1.0, %v3828
        %v3830 = vrcp.pop %v3793
        %v3831 = vmul.f32 1.0, %v3830
        %v3832 = vrcp.pop %v3794
        %v3833 = vmul.f32 1.0, %v3832
        %v3834 = vrcp.pop %v3795
        %v3835 = vmul.f32 1.0, %v3834
        %v3836 = vrcp.pop %v3796
        %v3837 = vmul.f32 1.0, %v3836
        %v3838 = vrcp.pop %v3797
        %v3839 = vmul.f32 1.0, %v3838
        %v3840 = vrcp.pop %v3798
        %v3841 = vmul.f32 1.0, %v3840
        %v3842 = vrcp.pop %v3799
        %v3843 = vmul.f32 1.0, %v3842
        %v3844 = vrcp.pop %v3800
        %v3845 = vmul.f32 1.0, %v3844
        %v3846 = vrcp.pop %v3801
        %v3847 = vmul.f32 1.0, %v3846
        %v3848 = vrcp.pop %v3802
        %v3849 = vmul.f32 1.0, %v3848
        %v3850 = vrcp.pop %v3803
        %v3851 = vmul.f32 1.0, %v3850
        %v3852 = vrcp.pop %v3804
        %v3853 = vmul.f32 1.0, %v3852
        %v3854 = vrcp.pop %v3805
        %v3855 = vmul.f32 1.0, %v3854
        %v3856 = vrcp.pop %v3806
        %v3857 = vmul.f32 1.0, %v3856
        %v3858 = vrcp.pop %v3807
        %v3859 = vmul.f32 1.0, %v3858
        %v3860 = vrcp.pop %v3808
        %v3861 = vmul.f32 1.0, %v3860
        %v3862 = vrcp.pop %v3809
        %v3863 = vmul.f32 1.0, %v3862
        %v3864 = vrcp.pop %v3810
        %v3865 = vmul.f32 1.0, %v3864
        %v3866 = vrcp.pop %v3811
        %v3867 = vmul.f32 1.0, %v3866
        %v3868 = vrcp.pop %v3812
        %v3869 = vmul.f32 1.0, %v3868
        %v3870 = vrcp.pop %v3813
        %v3871 = vmul.f32 1.0, %v3870
        %v3872 = vrcp.pop %v3814
        %v3873 = vmul.f32 1.0, %v3872
        %v3874 = vrcp.pop %v3815
        %v3875 = vmul.f32 1.0, %v3874
        %v3876 = vrcp.pop %v3816
        %v3877 = vmul.f32 1.0, %v3876
        %v3878 = vrcp.pop %v3817
        %v3879 = vmul.f32 1.0, %v3878
        %v3880 = vrcp.pop %v3818
        %v3881 = vmul.f32 1.0, %v3880
        %v3882 = vrcp.pop %v3819
        %v3883 = vmul.f32 1.0, %v3882
        %v3884 = vmul.f32 %v3660, %v3821
        %v3885 = vmul.f32 %v3661, %v3823
        %v3886 = vmul.f32 %v3662, %v3825
        %v3887 = vmul.f32 %v3663, %v3827
        %v3888 = vmul.f32 %v3664, %v3829
        %v3889 = vmul.f32 %v3665, %v3831
        %v3890 = vmul.f32 %v3666, %v3833
        %v3891 = vmul.f32 %v3667, %v3835
        %v3892 = vmul.f32 %v3668, %v3837
        %v3893 = vmul.f32 %v3669, %v3839
        %v3894 = vmul.f32 %v3670, %v3841
        %v3895 = vmul.f32 %v3671, %v3843
        %v3896 = vmul.f32 %v3672, %v3845
        %v3897 = vmul.f32 %v3673, %v3847
        %v3898 = vmul.f32 %v3674, %v3849
        %v3899 = vmul.f32 %v3675, %v3851
        %v3900 = vmul.f32 %v3676, %v3853
        %v3901 = vmul.f32 %v3677, %v3855
        %v3902 = vmul.f32 %v3678, %v3857
        %v3903 = vmul.f32 %v3679, %v3859
        %v3904 = vmul.f32 %v3680, %v3861
        %v3905 = vmul.f32 %v3681, %v3863
        %v3906 = vmul.f32 %v3682, %v3865
        %v3907 = vmul.f32 %v3683, %v3867
        %v3908 = vmul.f32 %v3684, %v3869
        %v3909 = vmul.f32 %v3685, %v3871
        %v3910 = vmul.f32 %v3686, %v3873
        %v3911 = vmul.f32 %v3687, %v3875
        %v3912 = vmul.f32 %v3688, %v3877
        %v3913 = vmul.f32 %v3689, %v3879
        %v3914 = vmul.f32 %v3690, %v3881
        %v3915 = vmul.f32 %v3691, %v3883
        %s3916 = scalar_lea.vmem %s255, 16 [#allocation3]
        %v3917 = vld [vmem:[%s3916] sm:$0xff]
        %v3918 = vld [vmem:[%s3916 + $0x8] sm:$0xff]
        %v3919 = vld [vmem:[%s3916 + $0x10] sm:$0xff]
        %v3920 = vld [vmem:[%s3916 + $0x18] sm:$0xff]
        %v3921 = vld [vmem:[%s3916 + $0x20] sm:$0xff]
        %v3922 = vld [vmem:[%s3916 + $0x28] sm:$0xff]
        %v3923 = vld [vmem:[%s3916 + $0x30] sm:$0xff]
        %v3924 = vld [vmem:[%s3916 + $0x38] sm:$0xff]
        %v3925 = vld [vmem:[%s3916 + $0x40] sm:$0xff]
        %v3926 = vld [vmem:[%s3916 + $0x48] sm:$0xff]
        %v3927 = vld [vmem:[%s3916 + $0x50] sm:$0xff]
        %v3928 = vld [vmem:[%s3916 + $0x58] sm:$0xff]
        %v3929 = vld [vmem:[%s3916 + $0x60] sm:$0xff]
        %v3930 = vld [vmem:[%s3916 + $0x68] sm:$0xff]
        %v3931 = vld [vmem:[%s3916 + $0x70] sm:$0xff]
        %v3932 = vld [vmem:[%s3916 + $0x78] sm:$0xff]
        %v3933 = vld [vmem:[%s3916 + $0x80] sm:$0xff]
        %v3934 = vld [vmem:[%s3916 + $0x88] sm:$0xff]
        %v3935 = vld [vmem:[%s3916 + $0x90] sm:$0xff]
        %v3936 = vld [vmem:[%s3916 + $0x98] sm:$0xff]
        %v3937 = vld [vmem:[%s3916 + $0xa0] sm:$0xff]
        %v3938 = vld [vmem:[%s3916 + $0xa8] sm:$0xff]
        %v3939 = vld [vmem:[%s3916 + $0xb0] sm:$0xff]
        %v3940 = vld [vmem:[%s3916 + $0xb8] sm:$0xff]
        %v3941 = vld [vmem:[%s3916 + $0xc0] sm:$0xff]
        %v3942 = vld [vmem:[%s3916 + $0xc8] sm:$0xff]
        %v3943 = vld [vmem:[%s3916 + $0xd0] sm:$0xff]
        %v3944 = vld [vmem:[%s3916 + $0xd8] sm:$0xff]
        %v3945 = vld [vmem:[%s3916 + $0xe0] sm:$0xff]
        %v3946 = vld [vmem:[%s3916 + $0xe8] sm:$0xff]
        %v3947 = vld [vmem:[%s3916 + $0xf0] sm:$0xff]
        %v3948 = vld [vmem:[%s3916 + $0xf8] sm:$0xff]
        %v3949 = vadd.f32 %v3884, %v3917
        %v3950 = vadd.f32 %v3885, %v3918
        %v3951 = vadd.f32 %v3886, %v3919
        %v3952 = vadd.f32 %v3887, %v3920
        %v3953 = vadd.f32 %v3888, %v3921
        %v3954 = vadd.f32 %v3889, %v3922
        %v3955 = vadd.f32 %v3890, %v3923
        %v3956 = vadd.f32 %v3891, %v3924
        %v3957 = vadd.f32 %v3892, %v3925
        %v3958 = vadd.f32 %v3893, %v3926
        %v3959 = vadd.f32 %v3894, %v3927
        %v3960 = vadd.f32 %v3895, %v3928
        %v3961 = vadd.f32 %v3896, %v3929
        %v3962 = vadd.f32 %v3897, %v3930
        %v3963 = vadd.f32 %v3898, %v3931
        %v3964 = vadd.f32 %v3899, %v3932
        %v3965 = vadd.f32 %v3900, %v3933
        %v3966 = vadd.f32 %v3901, %v3934
        %v3967 = vadd.f32 %v3902, %v3935
        %v3968 = vadd.f32 %v3903, %v3936
        %v3969 = vadd.f32 %v3904, %v3937
        %v3970 = vadd.f32 %v3905, %v3938
        %v3971 = vadd.f32 %v3906, %v3939
        %v3972 = vadd.f32 %v3907, %v3940
        %v3973 = vadd.f32 %v3908, %v3941
        %v3974 = vadd.f32 %v3909, %v3942
        %v3975 = vadd.f32 %v3910, %v3943
        %v3976 = vadd.f32 %v3911, %v3944
        %v3977 = vadd.f32 %v3912, %v3945
        %v3978 = vadd.f32 %v3913, %v3946
        %v3979 = vadd.f32 %v3914, %v3947
        %v3980 = vadd.f32 %v3915, %v3948
        %3981 = vst [vmem:[%s289] sm:$0xff] %v3949
        %3982 = vst [vmem:[%s289 + $0x8] sm:$0xff] %v3950
        %3983 = vst [vmem:[%s289 + $0x10] sm:$0xff] %v3951
        %3984 = vst [vmem:[%s289 + $0x18] sm:$0xff] %v3952
        %3985 = vst [vmem:[%s289 + $0x20] sm:$0xff] %v3953
        %3986 = vst [vmem:[%s289 + $0x28] sm:$0xff] %v3954
        %3987 = vst [vmem:[%s289 + $0x30] sm:$0xff] %v3955
        %3988 = vst [vmem:[%s289 + $0x38] sm:$0xff] %v3956
        %3989 = vst [vmem:[%s289 + $0x40] sm:$0xff] %v3957
        %3990 = vst [vmem:[%s289 + $0x48] sm:$0xff] %v3958
        %3991 = vst [vmem:[%s289 + $0x50] sm:$0xff] %v3959
        %3992 = vst [vmem:[%s289 + $0x58] sm:$0xff] %v3960
        %3993 = vst [vmem:[%s289 + $0x60] sm:$0xff] %v3961
        %3994 = vst [vmem:[%s289 + $0x68] sm:$0xff] %v3962
        %3995 = vst [vmem:[%s289 + $0x70] sm:$0xff] %v3963
        %3996 = vst [vmem:[%s289 + $0x78] sm:$0xff] %v3964
        %3997 = vst [vmem:[%s289 + $0x80] sm:$0xff] %v3965
        %3998 = vst [vmem:[%s289 + $0x88] sm:$0xff] %v3966
        %3999 = vst [vmem:[%s289 + $0x90] sm:$0xff] %v3967
        %4000 = vst [vmem:[%s289 + $0x98] sm:$0xff] %v3968
        %4001 = vst [vmem:[%s289 + $0xa0] sm:$0xff] %v3969
        %4002 = vst [vmem:[%s289 + $0xa8] sm:$0xff] %v3970
        %4003 = vst [vmem:[%s289 + $0xb0] sm:$0xff] %v3971
        %4004 = vst [vmem:[%s289 + $0xb8] sm:$0xff] %v3972
        %4005 = vst [vmem:[%s289 + $0xc0] sm:$0xff] %v3973
        %4006 = vst [vmem:[%s289 + $0xc8] sm:$0xff] %v3974
        %4007 = vst [vmem:[%s289 + $0xd0] sm:$0xff] %v3975
        %4008 = vst [vmem:[%s289 + $0xd8] sm:$0xff] %v3976
        %4009 = vst [vmem:[%s289 + $0xe0] sm:$0xff] %v3977
        %4010 = vst [vmem:[%s289 + $0xe8] sm:$0xff] %v3978
        %4011 = vst [vmem:[%s289 + $0xf0] sm:$0xff] %v3979
        %4012 = vst [vmem:[%s289 + $0xf8] sm:$0xff] %v3980
        %s4013 = sand.u32 %s157, 1
        %s4014 = scalar_lea.sflag [#allocation5], %s4013
        %s4015 = sand.u32 %s157, 1
        %s4016 = smul.addr %s4015, 256
        %s4017 = scalar_lea.vmem [#allocation9], %s4016
        // Predicated region
        $region57: #{tpu_custom_call.1} parent=39 // pred_check
          %p4018 = pneg %p167
        $region58: #{tpu_custom_call.1} parent=39 // pred_check_branch
          %4020 = sbr.rel (%p4018) target = $region60
        $region59: #{tpu_custom_call.1} parent=39 // pred_region
          %s4021 = smul.u32 16, %s28
          %s4023 = ssub.s32 4096, 4096
          %4024 = vsyncadd %s4014, %s4023
          %s4025 = smul.addr %s4021, 2
          %s4026 = smul.addr %s27, 32
          %s4027 = sadd.s32 %s4025, %s4026
          %s4028 = smul.addr %s4027, 128
          %s4029 = scalar_lea.hbm %s5, %s4028
          %s4030 = sshll.u32 %s4017, 4
          %s4031 = int_to_ptr.vmem [resolvable:$true] %s4030
          %4036 = dma.vmem_to_hbm [thread:$0]  %s4031, 4096, %s4029, %s4014, 128, 128, 8
        $region60: #{tpu_custom_call.1} parent=39 // pred_fallthru
          _
      $region40: #{tpu_custom_call.1} parent=5 // pred_fallthru
        _
      %p4037 = scmp.le.s32.totalorder 2, %s18
      // Predicated region
      $region61: #{tpu_custom_call.1} parent=5 // pred_check
        %p4038 = pneg %p4037
      $region62: #{tpu_custom_call.1} parent=5 // pred_check_branch
        %4040 = sbr.rel (%p4038) target = $region64
      $region63: #{tpu_custom_call.1} parent=5 // pred_region
        %s4041 = ssub.s32 %s18, 2
        // Predicated region
        $region65: #{tpu_custom_call.1} parent=63 // pred_check
          %p4042 = pneg %p173
        $region66: #{tpu_custom_call.1} parent=63 // pred_check_branch
          %4044 = sbr.rel (%p4042) target = $region68
        $region67: #{tpu_custom_call.1} parent=63 // pred_region
          %s4045 = sand.u32 %s158, 1
          %s4046 = scalar_lea.sflag [#allocation5], %s4045
          %s4047 = sand.u32 %s158, 1
          %s4048 = smul.addr %s4047, 256
          %s4049 = scalar_lea.vmem [#allocation9], %s4048
          %4050 = dma.done %s4046, 4096
        $region68: #{tpu_custom_call.1} parent=63 // pred_fallthru
          _
      $region64: #{tpu_custom_call.1} parent=5 // pred_fallthru
        _
    $region6: #{tpu_custom_call.1} parent=1 // loop_footer
      %s22 = sadd.s32 1, %s18
    $region7: #{tpu_custom_call.1} parent=1 // loop_footer_branch
      %17 = sbr.rel target = $region3
    $region8: #{tpu_custom_call.1} parent=1 // loop_exit
      _
    %4051 = vsyncpa [#allocation4], 1
    %s4052 = scalar_lea.sflag [#allocation4], 1
    %4053 = vsyncpa %s4052, 1
    %4054 = vsyncpa [#allocation7], 1
    %4055 = vsyncpa [#allocation5], 1
    %s4056 = scalar_lea.sflag [#allocation5], 1
    %4057 = vsyncpa %s4056, 1

</llo_original>
